<compile_context>
chip_gen: v6e
topology: v6e:2x2x1
jax: 0.10.0
libtpu: 0.0.40
codegen_flags: <defaults>
</compile_context>

<pallas_src>
import functools
import math

import jax
import jax.numpy as jnp
from jax.experimental import pallas as pl
from jax.experimental.pallas import tpu as pltpu


# ------------------------------------------------------------------
# helpers
# ------------------------------------------------------------------
def _pick_row_tile(m):
    for t in (512, 256, 128, 64, 32, 16, 8):
        if m % t == 0:
            return t
    return m


def _cparams(n_axes):
    return pltpu.CompilerParams(
        dimension_semantics=("parallel",) * n_axes,
        vmem_limit_bytes=64 * 1024 * 1024,
    )


def _layernorm(z, gamma_row, beta_row, eps):
    mu = jnp.mean(z, axis=-1, keepdims=True)
    var = jnp.mean((z - mu) * (z - mu), axis=-1, keepdims=True)
    zhat = (z - mu) * jax.lax.rsqrt(var + eps)
    return zhat * gamma_row + beta_row


# ------------------------------------------------------------------
# Pallas kernels
# ------------------------------------------------------------------
def _attn_block_kernel(x_ref, m_ref, wqkv_ref, bqkv_ref, wo_ref, bo_ref,
                       g_ref, b_ref, o_ref, *, num_heads, eps):
    # x: [1, S, D]   mask: [S, S] (1=keep)   wqkv: [D, 3D]   bqkv: [1, 3D]
    # wo: [D, D]     bo/g/b: [1, D]          out: [1, S, D]
    x = x_ref[0]                                   # [S, D] f32
    S, D = x.shape
    Dh = D // num_heads
    scale = 1.0 / math.sqrt(Dh)

    # fused QKV projection (bf16 operands, f32 accumulate on the MXU)
    qkv = jnp.dot(x.astype(jnp.bfloat16),
                  wqkv_ref[...].astype(jnp.bfloat16),
                  preferred_element_type=jnp.float32) + bqkv_ref[...]
    q = qkv[:, 0:D]
    k = qkv[:, D:2 * D]
    v = qkv[:, 2 * D:3 * D]
    m = m_ref[...]

    heads = []
    for h in range(num_heads):                     # static unrolled loop
        sl = slice(h * Dh, (h + 1) * Dh)
        qh = q[:, sl].astype(jnp.bfloat16)
        kh = k[:, sl].astype(jnp.bfloat16)
        vh = v[:, sl].astype(jnp.bfloat16)
        # scores via dot_general contracting the last dims (no explicit .T)
        s = jax.lax.dot_general(qh, kh, (((1,), (1,)), ((), ())),
                                preferred_element_type=jnp.float32) * scale
        s = jnp.where(m > 0, s, -1e30)
        s = s - jnp.max(s, axis=-1, keepdims=True)
        p = jnp.exp(s)
        p = p * pl.reciprocal(jnp.sum(p, axis=-1, keepdims=True), approx=True)
        heads.append(jnp.dot(p.astype(jnp.bfloat16), vh,
                             preferred_element_type=jnp.float32))
    attn = jnp.concatenate(heads, axis=-1)         # [S, D] (heads merged in-kernel)

    # output projection + residual + LayerNorm epilogue
    y = jnp.dot(attn.astype(jnp.bfloat16),
                wo_ref[...].astype(jnp.bfloat16),
                preferred_element_type=jnp.float32) + bo_ref[...]
    o_ref[0] = _layernorm(x + y, g_ref[...], b_ref[...], eps).astype(o_ref.dtype)


def _ffn_block_kernel(x_ref, w1_ref, b1_ref, w2_ref, b2_ref, g_ref, b_ref,
                      o_ref, *, eps):
    # x: [tm, D]  w1: [D, FF]  b1: [1, FF]  w2: [FF, D]  b2/g/b: [1, D]
    x = x_ref[...]
    h = jnp.dot(x.astype(jnp.bfloat16), w1_ref[...].astype(jnp.bfloat16),
                preferred_element_type=jnp.float32) + b1_ref[...]
    h = jax.nn.gelu(h, approximate=True)           # GPT-1 tanh-approx GELU (f32)
    y = jnp.dot(h.astype(jnp.bfloat16), w2_ref[...].astype(jnp.bfloat16),
                preferred_element_type=jnp.float32) + b2_ref[...]
    o_ref[...] = _layernorm(x + y, g_ref[...], b_ref[...], eps).astype(o_ref.dtype)


def _layernorm_kernel(x_ref, g_ref, b_ref, o_ref, *, eps):
    # final AddNorm(inp) == LayerNorm(inp); no zeros tensor is materialized.
    o_ref[...] = _layernorm(x_ref[...], g_ref[...], b_ref[...],
                            eps).astype(o_ref.dtype)


# ------------------------------------------------------------------
# Pallas wrappers
# ------------------------------------------------------------------
def attention_block(x3, mask, wqkv, bqkv, wo, bo, gamma, beta, *,
                    num_heads, eps=1e-5):
    B, S, D = x3.shape
    kernel = functools.partial(_attn_block_kernel, num_heads=num_heads, eps=eps)
    return pl.pallas_call(
        kernel,
        out_shape=jax.ShapeDtypeStruct((B, S, D), jnp.float32),
        grid=(B,),
        in_specs=[
            pl.BlockSpec((1, S, D), lambda i: (i, 0, 0)),
            pl.BlockSpec((S, S), lambda i: (0, 0)),
            pl.BlockSpec((D, 3 * D), lambda i: (0, 0)),
            pl.BlockSpec((1, 3 * D), lambda i: (0, 0)),
            pl.BlockSpec((D, D), lambda i: (0, 0)),
            pl.BlockSpec((1, D), lambda i: (0, 0)),
            pl.BlockSpec((1, D), lambda i: (0, 0)),
            pl.BlockSpec((1, D), lambda i: (0, 0)),
        ],
        out_specs=pl.BlockSpec((1, S, D), lambda i: (i, 0, 0)),
        compiler_params=_cparams(1),
    )(x3, mask, wqkv, bqkv.reshape(1, -1), wo, bo.reshape(1, -1),
      gamma.reshape(1, -1), beta.reshape(1, -1))


def ffn_block(x2d, w1, b1, w2, b2, gamma, beta, eps=1e-5):
    M, D = x2d.shape
    FF = w1.shape[1]
    tm = _pick_row_tile(M)
    kernel = functools.partial(_ffn_block_kernel, eps=eps)
    return pl.pallas_call(
        kernel,
        out_shape=jax.ShapeDtypeStruct((M, D), jnp.float32),
        grid=(M // tm,),
        in_specs=[
            pl.BlockSpec((tm, D), lambda i: (i, 0)),
            pl.BlockSpec((D, FF), lambda i: (0, 0)),
            pl.BlockSpec((1, FF), lambda i: (0, 0)),
            pl.BlockSpec((FF, D), lambda i: (0, 0)),
            pl.BlockSpec((1, D), lambda i: (0, 0)),
            pl.BlockSpec((1, D), lambda i: (0, 0)),
            pl.BlockSpec((1, D), lambda i: (0, 0)),
        ],
        out_specs=pl.BlockSpec((tm, D), lambda i: (i, 0)),
        compiler_params=_cparams(1),
    )(x2d, w1, b1.reshape(1, -1), w2, b2.reshape(1, -1),
      gamma.reshape(1, -1), beta.reshape(1, -1))


def layer_norm(x2d, gamma, beta, eps=1e-5):
    M, D = x2d.shape
    tm = _pick_row_tile(M)
    kernel = functools.partial(_layernorm_kernel, eps=eps)
    return pl.pallas_call(
        kernel,
        out_shape=jax.ShapeDtypeStruct((M, D), jnp.float32),
        grid=(M // tm,),
        in_specs=[
            pl.BlockSpec((tm, D), lambda i: (i, 0)),
            pl.BlockSpec((1, D), lambda i: (0, 0)),
            pl.BlockSpec((1, D), lambda i: (0, 0)),
        ],
        out_specs=pl.BlockSpec((tm, D), lambda i: (i, 0)),
        compiler_params=_cparams(1),
    )(x2d, gamma.reshape(1, -1), beta.reshape(1, -1))


# ------------------------------------------------------------------
# Decoder stack forward (glue in plain JAX, compute in Pallas)
# ------------------------------------------------------------------
def decoder_forward(params, inp, mask, *, num_heads):
    """inp: [B, S, D] float32, mask: [S, S] float32 (1=keep, 0=masked).

    `num_heads` must be a static Python int (bind with functools.partial
    before jit)."""
    B, S, D = inp.shape
    mask2 = mask.astype(jnp.float32)

    x = inp
    for layer in params["layers"]:
        # fused: QKV proj + masked MHA + output proj + AddNorm1
        x = attention_block(x, mask2, layer["w_qkv"], layer["b_qkv"],
                            layer["wo"], layer["bo"],
                            layer["ln1_g"], layer["ln1_b"],
                            num_heads=num_heads)
        # fused: FFN (matmul1 + GELU + matmul2) + AddNorm2
        x2d = ffn_block(x.reshape(B * S, D),
                        layer["w1"], layer["b1"], layer["w2"], layer["b2"],
                        layer["ln2_g"], layer["ln2_b"])
        x = x2d.reshape(B, S, D)

    # final AddNorm(inp) == LayerNorm(inp)
    out = layer_norm(x.reshape(B * S, D), params["lnf_g"], params["lnf_b"])
    return out.reshape(B, S, D)


# ------------------------------------------------------------------
# Deterministic parameter init
# ------------------------------------------------------------------
def init_params(key, num_layers, d_model, d_ff):
    def dense(k, din, dout):
        return (0.02 * jax.random.normal(k, (din, dout), jnp.float32),
                jnp.zeros((dout,), jnp.float32))

    layers = []
    for _ in range(num_layers):
        key, *ks = jax.random.split(key, 5)
        w_qkv, b_qkv = dense(ks[0], d_model, 3 * d_model)   # fused Q|K|V
        wo, bo = dense(ks[1], d_model, d_model)
        w1, b1 = dense(ks[2], d_model, d_ff)
        w2, b2 = dense(ks[3], d_ff, d_model)
        layers.append(dict(
            w_qkv=w_qkv, b_qkv=b_qkv, wo=wo, bo=bo,
            w1=w1, b1=b1, w2=w2, b2=b2,
            ln1_g=jnp.ones((d_model,), jnp.float32),
            ln1_b=jnp.zeros((d_model,), jnp.float32),
            ln2_g=jnp.ones((d_model,), jnp.float32),
            ln2_b=jnp.zeros((d_model,), jnp.float32),
        ))
    return dict(
        layers=layers,
        lnf_g=jnp.ones((d_model,), jnp.float32),
        lnf_b=jnp.zeros((d_model,), jnp.float32),
    )


# ------------------------------------------------------------------
if __name__ == "__main__":
    B, S, D, H, FF, L = 2, 8, 32, 4, 64, 2

    key = jax.random.PRNGKey(0)
    k_inp, k_par = jax.random.split(key)

    inp = jax.random.normal(k_inp, (B, S, D), jnp.float32)
    # causal mask: 1 where attention is allowed
    mask = jnp.tril(jnp.ones((S, S), jnp.float32))

    params = init_params(k_par, L, D, FF)

    fwd = jax.jit(functools.partial(decoder_forward, num_heads=H))
    out = jax.block_until_ready(fwd(params, inp, mask))

    assert out.shape == (B, S, D) and out.dtype == jnp.float32
    assert bool(jnp.all(jnp.isfinite(out)))
    print("KERNEL_OK")
</pallas_src>

<mosaic_0001>
module attributes {stable_mosaic.version = 11 : i64} {
  func.func @_attn_block_kernel(%arg0: i32, %arg1: memref<1x8x32xf32, #tpu.memory_space<vmem>>, %arg2: memref<8x8xf32, #tpu.memory_space<vmem>>, %arg3: memref<32x96xf32, #tpu.memory_space<vmem>>, %arg4: memref<1x96xf32, #tpu.memory_space<vmem>>, %arg5: memref<32x32xf32, #tpu.memory_space<vmem>>, %arg6: memref<1x32xf32, #tpu.memory_space<vmem>>, %arg7: memref<1x32xf32, #tpu.memory_space<vmem>>, %arg8: memref<1x32xf32, #tpu.memory_space<vmem>>, %arg9: memref<1x8x32xf32, #tpu.memory_space<vmem>>) attributes {dimension_semantics = [#tpu.dimension_semantics<parallel>], iteration_bounds = array<i64: 2>, scalar_prefetch = 0 : i64, scratch_operands = 0 : i64, tpu.core_type = #tpu.core_type<tc>, window_params = [{transform_indices = @transform_0, window_bounds = array<i64: 1, 8, 32>}, {pipeline_mode = #tpu.pipeline_mode<synchronous>, transform_indices = @transform_1, window_bounds = array<i64: 8, 8>}, {pipeline_mode = #tpu.pipeline_mode<synchronous>, transform_indices = @transform_2, window_bounds = array<i64: 32, 96>}, {pipeline_mode = #tpu.pipeline_mode<synchronous>, transform_indices = @transform_3, window_bounds = array<i64: 1, 96>}, {pipeline_mode = #tpu.pipeline_mode<synchronous>, transform_indices = @transform_4, window_bounds = array<i64: 32, 32>}, {pipeline_mode = #tpu.pipeline_mode<synchronous>, transform_indices = @transform_5, window_bounds = array<i64: 1, 32>}, {pipeline_mode = #tpu.pipeline_mode<synchronous>, transform_indices = @transform_6, window_bounds = array<i64: 1, 32>}, {pipeline_mode = #tpu.pipeline_mode<synchronous>, transform_indices = @transform_7, window_bounds = array<i64: 1, 32>}, {transform_indices = @transform_8, window_bounds = array<i64: 1, 8, 32>}]} {
    %c0 = arith.constant 0 : index
    %c0_0 = arith.constant 0 : index
    %c0_1 = arith.constant 0 : index
    %0 = vector.load %arg1[%c0, %c0_0, %c0_1] : memref<1x8x32xf32, #tpu.memory_space<vmem>>, vector<1x8x32xf32>
    %1 = vector.shape_cast %0 : vector<1x8x32xf32> to vector<8x32xf32>
    %2 = arith.truncf %1 : vector<8x32xf32> to vector<8x32xbf16>
    %c0_2 = arith.constant 0 : index
    %c0_3 = arith.constant 0 : index
    %3 = vector.load %arg3[%c0_2, %c0_3] : memref<32x96xf32, #tpu.memory_space<vmem>>, vector<32x96xf32>
    %4 = arith.truncf %3 : vector<32x96xf32> to vector<32x96xbf16>
    %cst = arith.constant dense<0.000000e+00> : vector<8x96xf32>
    %5 = tpu.matmul %2, %4, %cst {dimension_numbers = #tpu.dot_dimension_numbers<[1], [0], [0], [1], [0, 0, 1, 1], [], []>} : vector<8x32xbf16>, vector<32x96xbf16>, vector<8x96xf32> -> vector<8x96xf32>
    %c0_4 = arith.constant 0 : index
    %c0_5 = arith.constant 0 : index
    %6 = vector.load %arg4[%c0_4, %c0_5] : memref<1x96xf32, #tpu.memory_space<vmem>>, vector<1x96xf32>
    %7 = vector.broadcast %6 : vector<1x96xf32> to vector<8x96xf32>
    %8 = arith.addf %5, %7 : vector<8x96xf32>
    %9 = vector.extract_strided_slice %8 {offsets = [0, 0], sizes = [8, 32], strides = [1, 1]} : vector<8x96xf32> to vector<8x32xf32>
    %10 = vector.extract_strided_slice %8 {offsets = [0, 32], sizes = [8, 32], strides = [1, 1]} : vector<8x96xf32> to vector<8x32xf32>
    %11 = vector.extract_strided_slice %8 {offsets = [0, 64], sizes = [8, 32], strides = [1, 1]} : vector<8x96xf32> to vector<8x32xf32>
    %c0_6 = arith.constant 0 : index
    %c0_7 = arith.constant 0 : index
    %12 = vector.load %arg2[%c0_6, %c0_7] : memref<8x8xf32, #tpu.memory_space<vmem>>, vector<8x8xf32>
    %13 = vector.extract_strided_slice %9 {offsets = [0, 0], sizes = [8, 8], strides = [1, 1]} : vector<8x32xf32> to vector<8x8xf32>
    %14 = arith.truncf %13 : vector<8x8xf32> to vector<8x8xbf16>
    %15 = vector.extract_strided_slice %10 {offsets = [0, 0], sizes = [8, 8], strides = [1, 1]} : vector<8x32xf32> to vector<8x8xf32>
    %16 = arith.truncf %15 : vector<8x8xf32> to vector<8x8xbf16>
    %17 = vector.extract_strided_slice %11 {offsets = [0, 0], sizes = [8, 8], strides = [1, 1]} : vector<8x32xf32> to vector<8x8xf32>
    %18 = arith.truncf %17 : vector<8x8xf32> to vector<8x8xbf16>
    %cst_8 = arith.constant dense<0.000000e+00> : vector<8x8xf32>
    %19 = tpu.matmul %14, %16, %cst_8 {dimension_numbers = #tpu.dot_dimension_numbers<[1], [1], [0], [0], [0, 0, 1, 0], [], []>} : vector<8x8xbf16>, vector<8x8xbf16>, vector<8x8xf32> -> vector<8x8xf32>
    %cst_9 = arith.constant 0.353553385 : f32
    %20 = vector.broadcast %cst_9 : f32 to vector<8x8xf32>
    %21 = arith.mulf %19, %20 : vector<8x8xf32>
    %cst_10 = arith.constant 0.000000e+00 : f32
    %22 = vector.broadcast %cst_10 : f32 to vector<8x8xf32>
    %23 = arith.cmpf ogt, %12, %22 : vector<8x8xf32>
    %cst_11 = arith.constant -1.000000e+30 : f32
    %24 = vector.broadcast %cst_11 : f32 to vector<8x8xf32>
    %25 = arith.select %23, %21, %24 : vector<8x8xi1>, vector<8x8xf32>
    %cst_12 = arith.constant dense<0xFF800000> : vector<8xf32>
    %26 = vector.multi_reduction <maximumf>, %25, %cst_12 [1] : vector<8x8xf32> to vector<8xf32>
    %27 = vector.shape_cast %26 : vector<8xf32> to vector<8x1xf32>
    %28 = vector.broadcast %27 : vector<8x1xf32> to vector<8x8xf32>
    %29 = arith.subf %25, %28 : vector<8x8xf32>
    %30 = math.exp %29 : vector<8x8xf32>
    %cst_13 = arith.constant dense<0.000000e+00> : vector<8xf32>
    %31 = vector.multi_reduction <add>, %30, %cst_13 [1] : vector<8x8xf32> to vector<8xf32>
    %32 = vector.shape_cast %31 : vector<8xf32> to vector<8x1xf32>
    %33 = tpu.reciprocal %32 {approx = true} : vector<8x1xf32> -> vector<8x1xf32>
    %34 = vector.broadcast %33 : vector<8x1xf32> to vector<8x8xf32>
    %35 = arith.mulf %30, %34 : vector<8x8xf32>
    %36 = arith.truncf %35 : vector<8x8xf32> to vector<8x8xbf16>
    %cst_14 = arith.constant dense<0.000000e+00> : vector<8x8xf32>
    %37 = tpu.matmul %36, %18, %cst_14 {dimension_numbers = #tpu.dot_dimension_numbers<[1], [0], [0], [1], [0, 0, 1, 1], [], []>} : vector<8x8xbf16>, vector<8x8xbf16>, vector<8x8xf32> -> vector<8x8xf32>
    %38 = vector.extract_strided_slice %9 {offsets = [0, 8], sizes = [8, 8], strides = [1, 1]} : vector<8x32xf32> to vector<8x8xf32>
    %39 = arith.truncf %38 : vector<8x8xf32> to vector<8x8xbf16>
    %40 = vector.extract_strided_slice %10 {offsets = [0, 8], sizes = [8, 8], strides = [1, 1]} : vector<8x32xf32> to vector<8x8xf32>
    %41 = arith.truncf %40 : vector<8x8xf32> to vector<8x8xbf16>
    %42 = vector.extract_strided_slice %11 {offsets = [0, 8], sizes = [8, 8], strides = [1, 1]} : vector<8x32xf32> to vector<8x8xf32>
    %43 = arith.truncf %42 : vector<8x8xf32> to vector<8x8xbf16>
    %cst_15 = arith.constant dense<0.000000e+00> : vector<8x8xf32>
    %44 = tpu.matmul %39, %41, %cst_15 {dimension_numbers = #tpu.dot_dimension_numbers<[1], [1], [0], [0], [0, 0, 1, 0], [], []>} : vector<8x8xbf16>, vector<8x8xbf16>, vector<8x8xf32> -> vector<8x8xf32>
    %cst_16 = arith.constant 0.353553385 : f32
    %45 = vector.broadcast %cst_16 : f32 to vector<8x8xf32>
    %46 = arith.mulf %44, %45 : vector<8x8xf32>
    %cst_17 = arith.constant 0.000000e+00 : f32
    %47 = vector.broadcast %cst_17 : f32 to vector<8x8xf32>
    %48 = arith.cmpf ogt, %12, %47 : vector<8x8xf32>
    %cst_18 = arith.constant -1.000000e+30 : f32
    %49 = vector.broadcast %cst_18 : f32 to vector<8x8xf32>
    %50 = arith.select %48, %46, %49 : vector<8x8xi1>, vector<8x8xf32>
    %cst_19 = arith.constant dense<0xFF800000> : vector<8xf32>
    %51 = vector.multi_reduction <maximumf>, %50, %cst_19 [1] : vector<8x8xf32> to vector<8xf32>
    %52 = vector.shape_cast %51 : vector<8xf32> to vector<8x1xf32>
    %53 = vector.broadcast %52 : vector<8x1xf32> to vector<8x8xf32>
    %54 = arith.subf %50, %53 : vector<8x8xf32>
    %55 = math.exp %54 : vector<8x8xf32>
    %cst_20 = arith.constant dense<0.000000e+00> : vector<8xf32>
    %56 = vector.multi_reduction <add>, %55, %cst_20 [1] : vector<8x8xf32> to vector<8xf32>
    %57 = vector.shape_cast %56 : vector<8xf32> to vector<8x1xf32>
    %58 = tpu.reciprocal %57 {approx = true} : vector<8x1xf32> -> vector<8x1xf32>
    %59 = vector.broadcast %58 : vector<8x1xf32> to vector<8x8xf32>
    %60 = arith.mulf %55, %59 : vector<8x8xf32>
    %61 = arith.truncf %60 : vector<8x8xf32> to vector<8x8xbf16>
    %cst_21 = arith.constant dense<0.000000e+00> : vector<8x8xf32>
    %62 = tpu.matmul %61, %43, %cst_21 {dimension_numbers = #tpu.dot_dimension_numbers<[1], [0], [0], [1], [0, 0, 1, 1], [], []>} : vector<8x8xbf16>, vector<8x8xbf16>, vector<8x8xf32> -> vector<8x8xf32>
    %63 = vector.extract_strided_slice %9 {offsets = [0, 16], sizes = [8, 8], strides = [1, 1]} : vector<8x32xf32> to vector<8x8xf32>
    %64 = arith.truncf %63 : vector<8x8xf32> to vector<8x8xbf16>
    %65 = vector.extract_strided_slice %10 {offsets = [0, 16], sizes = [8, 8], strides = [1, 1]} : vector<8x32xf32> to vector<8x8xf32>
    %66 = arith.truncf %65 : vector<8x8xf32> to vector<8x8xbf16>
    %67 = vector.extract_strided_slice %11 {offsets = [0, 16], sizes = [8, 8], strides = [1, 1]} : vector<8x32xf32> to vector<8x8xf32>
    %68 = arith.truncf %67 : vector<8x8xf32> to vector<8x8xbf16>
    %cst_22 = arith.constant dense<0.000000e+00> : vector<8x8xf32>
    %69 = tpu.matmul %64, %66, %cst_22 {dimension_numbers = #tpu.dot_dimension_numbers<[1], [1], [0], [0], [0, 0, 1, 0], [], []>} : vector<8x8xbf16>, vector<8x8xbf16>, vector<8x8xf32> -> vector<8x8xf32>
    %cst_23 = arith.constant 0.353553385 : f32
    %70 = vector.broadcast %cst_23 : f32 to vector<8x8xf32>
    %71 = arith.mulf %69, %70 : vector<8x8xf32>
    %cst_24 = arith.constant 0.000000e+00 : f32
    %72 = vector.broadcast %cst_24 : f32 to vector<8x8xf32>
    %73 = arith.cmpf ogt, %12, %72 : vector<8x8xf32>
    %cst_25 = arith.constant -1.000000e+30 : f32
    %74 = vector.broadcast %cst_25 : f32 to vector<8x8xf32>
    %75 = arith.select %73, %71, %74 : vector<8x8xi1>, vector<8x8xf32>
    %cst_26 = arith.constant dense<0xFF800000> : vector<8xf32>
    %76 = vector.multi_reduction <maximumf>, %75, %cst_26 [1] : vector<8x8xf32> to vector<8xf32>
    %77 = vector.shape_cast %76 : vector<8xf32> to vector<8x1xf32>
    %78 = vector.broadcast %77 : vector<8x1xf32> to vector<8x8xf32>
    %79 = arith.subf %75, %78 : vector<8x8xf32>
    %80 = math.exp %79 : vector<8x8xf32>
    %cst_27 = arith.constant dense<0.000000e+00> : vector<8xf32>
    %81 = vector.multi_reduction <add>, %80, %cst_27 [1] : vector<8x8xf32> to vector<8xf32>
    %82 = vector.shape_cast %81 : vector<8xf32> to vector<8x1xf32>
    %83 = tpu.reciprocal %82 {approx = true} : vector<8x1xf32> -> vector<8x1xf32>
    %84 = vector.broadcast %83 : vector<8x1xf32> to vector<8x8xf32>
    %85 = arith.mulf %80, %84 : vector<8x8xf32>
    %86 = arith.truncf %85 : vector<8x8xf32> to vector<8x8xbf16>
    %cst_28 = arith.constant dense<0.000000e+00> : vector<8x8xf32>
    %87 = tpu.matmul %86, %68, %cst_28 {dimension_numbers = #tpu.dot_dimension_numbers<[1], [0], [0], [1], [0, 0, 1, 1], [], []>} : vector<8x8xbf16>, vector<8x8xbf16>, vector<8x8xf32> -> vector<8x8xf32>
    %88 = vector.extract_strided_slice %9 {offsets = [0, 24], sizes = [8, 8], strides = [1, 1]} : vector<8x32xf32> to vector<8x8xf32>
    %89 = arith.truncf %88 : vector<8x8xf32> to vector<8x8xbf16>
    %90 = vector.extract_strided_slice %10 {offsets = [0, 24], sizes = [8, 8], strides = [1, 1]} : vector<8x32xf32> to vector<8x8xf32>
    %91 = arith.truncf %90 : vector<8x8xf32> to vector<8x8xbf16>
    %92 = vector.extract_strided_slice %11 {offsets = [0, 24], sizes = [8, 8], strides = [1, 1]} : vector<8x32xf32> to vector<8x8xf32>
    %93 = arith.truncf %92 : vector<8x8xf32> to vector<8x8xbf16>
    %cst_29 = arith.constant dense<0.000000e+00> : vector<8x8xf32>
    %94 = tpu.matmul %89, %91, %cst_29 {dimension_numbers = #tpu.dot_dimension_numbers<[1], [1], [0], [0], [0, 0, 1, 0], [], []>} : vector<8x8xbf16>, vector<8x8xbf16>, vector<8x8xf32> -> vector<8x8xf32>
    %cst_30 = arith.constant 0.353553385 : f32
    %95 = vector.broadcast %cst_30 : f32 to vector<8x8xf32>
    %96 = arith.mulf %94, %95 : vector<8x8xf32>
    %cst_31 = arith.constant 0.000000e+00 : f32
    %97 = vector.broadcast %cst_31 : f32 to vector<8x8xf32>
    %98 = arith.cmpf ogt, %12, %97 : vector<8x8xf32>
    %cst_32 = arith.constant -1.000000e+30 : f32
    %99 = vector.broadcast %cst_32 : f32 to vector<8x8xf32>
    %100 = arith.select %98, %96, %99 : vector<8x8xi1>, vector<8x8xf32>
    %cst_33 = arith.constant dense<0xFF800000> : vector<8xf32>
    %101 = vector.multi_reduction <maximumf>, %100, %cst_33 [1] : vector<8x8xf32> to vector<8xf32>
    %102 = vector.shape_cast %101 : vector<8xf32> to vector<8x1xf32>
    %103 = vector.broadcast %102 : vector<8x1xf32> to vector<8x8xf32>
    %104 = arith.subf %100, %103 : vector<8x8xf32>
    %105 = math.exp %104 : vector<8x8xf32>
    %cst_34 = arith.constant dense<0.000000e+00> : vector<8xf32>
    %106 = vector.multi_reduction <add>, %105, %cst_34 [1] : vector<8x8xf32> to vector<8xf32>
    %107 = vector.shape_cast %106 : vector<8xf32> to vector<8x1xf32>
    %108 = tpu.reciprocal %107 {approx = true} : vector<8x1xf32> -> vector<8x1xf32>
    %109 = vector.broadcast %108 : vector<8x1xf32> to vector<8x8xf32>
    %110 = arith.mulf %105, %109 : vector<8x8xf32>
    %111 = arith.truncf %110 : vector<8x8xf32> to vector<8x8xbf16>
    %cst_35 = arith.constant dense<0.000000e+00> : vector<8x8xf32>
    %112 = tpu.matmul %111, %93, %cst_35 {dimension_numbers = #tpu.dot_dimension_numbers<[1], [0], [0], [1], [0, 0, 1, 1], [], []>} : vector<8x8xbf16>, vector<8x8xbf16>, vector<8x8xf32> -> vector<8x8xf32>
    %113 = tpu.concatenate %37, %62, %87, %112 in 1 : vector<8x8xf32>, vector<8x8xf32>, vector<8x8xf32>, vector<8x8xf32> -> vector<8x32xf32>
    %114 = arith.truncf %113 : vector<8x32xf32> to vector<8x32xbf16>
    %c0_36 = arith.constant 0 : index
    %c0_37 = arith.constant 0 : index
    %115 = vector.load %arg5[%c0_36, %c0_37] : memref<32x32xf32, #tpu.memory_space<vmem>>, vector<32x32xf32>
    %116 = arith.truncf %115 : vector<32x32xf32> to vector<32x32xbf16>
    %cst_38 = arith.constant dense<0.000000e+00> : vector<8x32xf32>
    %117 = tpu.matmul %114, %116, %cst_38 {dimension_numbers = #tpu.dot_dimension_numbers<[1], [0], [0], [1], [0, 0, 1, 1], [], []>} : vector<8x32xbf16>, vector<32x32xbf16>, vector<8x32xf32> -> vector<8x32xf32>
    %c0_39 = arith.constant 0 : index
    %c0_40 = arith.constant 0 : index
    %118 = vector.load %arg6[%c0_39, %c0_40] : memref<1x32xf32, #tpu.memory_space<vmem>>, vector<1x32xf32>
    %119 = vector.broadcast %118 : vector<1x32xf32> to vector<8x32xf32>
    %120 = arith.addf %117, %119 : vector<8x32xf32>
    %121 = arith.addf %1, %120 : vector<8x32xf32>
    %c0_41 = arith.constant 0 : index
    %c0_42 = arith.constant 0 : index
    %122 = vector.load %arg7[%c0_41, %c0_42] : memref<1x32xf32, #tpu.memory_space<vmem>>, vector<1x32xf32>
    %c0_43 = arith.constant 0 : index
    %c0_44 = arith.constant 0 : index
    %123 = vector.load %arg8[%c0_43, %c0_44] : memref<1x32xf32, #tpu.memory_space<vmem>>, vector<1x32xf32>
    %cst_45 = arith.constant dense<0.000000e+00> : vector<8xf32>
    %124 = vector.multi_reduction <add>, %121, %cst_45 [1] : vector<8x32xf32> to vector<8xf32>
    %125 = vector.shape_cast %124 : vector<8xf32> to vector<8x1xf32>
    %cst_46 = arith.constant 3.200000e+01 : f32
    %126 = vector.broadcast %cst_46 : f32 to vector<8x1xf32>
    %127 = arith.divf %125, %126 : vector<8x1xf32>
    %128 = vector.broadcast %127 : vector<8x1xf32> to vector<8x32xf32>
    %129 = arith.subf %121, %128 : vector<8x32xf32>
    %130 = vector.broadcast %127 : vector<8x1xf32> to vector<8x32xf32>
    %131 = arith.subf %121, %130 : vector<8x32xf32>
    %132 = arith.mulf %129, %131 : vector<8x32xf32>
    %cst_47 = arith.constant dense<0.000000e+00> : vector<8xf32>
    %133 = vector.multi_reduction <add>, %132, %cst_47 [1] : vector<8x32xf32> to vector<8xf32>
    %134 = vector.shape_cast %133 : vector<8xf32> to vector<8x1xf32>
    %cst_48 = arith.constant 3.200000e+01 : f32
    %135 = vector.broadcast %cst_48 : f32 to vector<8x1xf32>
    %136 = arith.divf %134, %135 : vector<8x1xf32>
    %137 = vector.broadcast %127 : vector<8x1xf32> to vector<8x32xf32>
    %138 = arith.subf %121, %137 : vector<8x32xf32>
    %cst_49 = arith.constant 9.99999974E-6 : f32
    %139 = vector.broadcast %cst_49 : f32 to vector<8x1xf32>
    %140 = arith.addf %136, %139 : vector<8x1xf32>
    %141 = math.rsqrt %140 : vector<8x1xf32>
    %142 = vector.broadcast %141 : vector<8x1xf32> to vector<8x32xf32>
    %143 = arith.mulf %138, %142 : vector<8x32xf32>
    %144 = vector.broadcast %122 : vector<1x32xf32> to vector<8x32xf32>
    %145 = arith.mulf %143, %144 : vector<8x32xf32>
    %146 = vector.broadcast %123 : vector<1x32xf32> to vector<8x32xf32>
    %147 = arith.addf %145, %146 : vector<8x32xf32>
    %c0_50 = arith.constant 0 : index
    %c0_51 = arith.constant 0 : index
    %c0_52 = arith.constant 0 : index
    %148 = vector.load %arg9[%c0_50, %c0_51, %c0_52] : memref<1x8x32xf32, #tpu.memory_space<vmem>>, vector<1x8x32xf32>
    %149 = vector.shape_cast %148 : vector<1x8x32xf32> to vector<8x32xf32>
    %150 = vector.shape_cast %147 : vector<8x32xf32> to vector<1x8x32xf32>
    tpu.vector_store %arg9[%c0_50, %c0_51, %c0_52], %150 {strides = array<i32>} : memref<1x8x32xf32, #tpu.memory_space<vmem>>, vector<1x8x32xf32>,
    return
  }
  func.func @transform_0(%arg0: i32) -> (i32, i32, i32) {
    %c0_i32 = arith.constant 0 : i32
    %c0_i32_0 = arith.constant 0 : i32
    %c0_i32_1 = arith.constant 0 : i32
    return %arg0, %c0_i32, %c0_i32_0 : i32, i32, i32
  }
  func.func @transform_1(%arg0: i32) -> (i32, i32) {
    %c0_i32 = arith.constant 0 : i32
    %c0_i32_0 = arith.constant 0 : i32
    %c0_i32_1 = arith.constant 0 : i32
    return %c0_i32, %c0_i32_0 : i32, i32
  }
  func.func @transform_2(%arg0: i32) -> (i32, i32) {
    %c0_i32 = arith.constant 0 : i32
    %c0_i32_0 = arith.constant 0 : i32
    %c0_i32_1 = arith.constant 0 : i32
    return %c0_i32, %c0_i32_0 : i32, i32
  }
  func.func @transform_3(%arg0: i32) -> (i32, i32) {
    %c0_i32 = arith.constant 0 : i32
    %c0_i32_0 = arith.constant 0 : i32
    %c0_i32_1 = arith.constant 0 : i32
    return %c0_i32, %c0_i32_0 : i32, i32
  }
  func.func @transform_4(%arg0: i32) -> (i32, i32) {
    %c0_i32 = arith.constant 0 : i32
    %c0_i32_0 = arith.constant 0 : i32
    %c0_i32_1 = arith.constant 0 : i32
    return %c0_i32, %c0_i32_0 : i32, i32
  }
  func.func @transform_5(%arg0: i32) -> (i32, i32) {
    %c0_i32 = arith.constant 0 : i32
    %c0_i32_0 = arith.constant 0 : i32
    %c0_i32_1 = arith.constant 0 : i32
    return %c0_i32, %c0_i32_0 : i32, i32
  }
  func.func @transform_6(%arg0: i32) -> (i32, i32) {
    %c0_i32 = arith.constant 0 : i32
    %c0_i32_0 = arith.constant 0 : i32
    %c0_i32_1 = arith.constant 0 : i32
    return %c0_i32, %c0_i32_0 : i32, i32
  }
  func.func @transform_7(%arg0: i32) -> (i32, i32) {
    %c0_i32 = arith.constant 0 : i32
    %c0_i32_0 = arith.constant 0 : i32
    %c0_i32_1 = arith.constant 0 : i32
    return %c0_i32, %c0_i32_0 : i32, i32
  }
  func.func @transform_8(%arg0: i32) -> (i32, i32, i32) {
    %c0_i32 = arith.constant 0 : i32
    %c0_i32_0 = arith.constant 0 : i32
    %c0_i32_1 = arith.constant 0 : i32
    return %arg0, %c0_i32, %c0_i32_0 : i32, i32, i32
  }
}

module attributes {stable_mosaic.version = 11 : i64} {
  func.func @_attn_block_kernel(%arg0: i32, %arg1: memref<1x8x32xf32, #tpu.memory_space<vmem>>, %arg2: memref<8x8xf32, #tpu.memory_space<vmem>>, %arg3: memref<32x96xf32, #tpu.memory_space<vmem>>, %arg4: memref<1x96xf32, #tpu.memory_space<vmem>>, %arg5: memref<32x32xf32, #tpu.memory_space<vmem>>, %arg6: memref<1x32xf32, #tpu.memory_space<vmem>>, %arg7: memref<1x32xf32, #tpu.memory_space<vmem>>, %arg8: memref<1x32xf32, #tpu.memory_space<vmem>>, %arg9: memref<1x8x32xf32, #tpu.memory_space<vmem>>) attributes {dimension_semantics = [#tpu.dimension_semantics<parallel>], iteration_bounds = array<i64: 2>, scalar_prefetch = 0 : i64, scratch_operands = 0 : i64, tpu.core_type = #tpu.core_type<tc>, window_params = [{transform_indices = @transform_0, window_bounds = array<i64: 1, 8, 32>}, {pipeline_mode = #tpu.pipeline_mode<synchronous>, transform_indices = @transform_1, window_bounds = array<i64: 8, 8>}, {pipeline_mode = #tpu.pipeline_mode<synchronous>, transform_indices = @transform_2, window_bounds = array<i64: 32, 96>}, {pipeline_mode = #tpu.pipeline_mode<synchronous>, transform_indices = @transform_3, window_bounds = array<i64: 1, 96>}, {pipeline_mode = #tpu.pipeline_mode<synchronous>, transform_indices = @transform_4, window_bounds = array<i64: 32, 32>}, {pipeline_mode = #tpu.pipeline_mode<synchronous>, transform_indices = @transform_5, window_bounds = array<i64: 1, 32>}, {pipeline_mode = #tpu.pipeline_mode<synchronous>, transform_indices = @transform_6, window_bounds = array<i64: 1, 32>}, {pipeline_mode = #tpu.pipeline_mode<synchronous>, transform_indices = @transform_7, window_bounds = array<i64: 1, 32>}, {transform_indices = @transform_8, window_bounds = array<i64: 1, 8, 32>}]} {
    %c0 = arith.constant 0 : index
    %c0_0 = arith.constant 0 : index
    %c0_1 = arith.constant 0 : index
    %0 = vector.load %arg1[%c0, %c0_0, %c0_1] : memref<1x8x32xf32, #tpu.memory_space<vmem>>, vector<1x8x32xf32>
    %1 = vector.shape_cast %0 : vector<1x8x32xf32> to vector<8x32xf32>
    %2 = arith.truncf %1 : vector<8x32xf32> to vector<8x32xbf16>
    %c0_2 = arith.constant 0 : index
    %c0_3 = arith.constant 0 : index
    %3 = vector.load %arg3[%c0_2, %c0_3] : memref<32x96xf32, #tpu.memory_space<vmem>>, vector<32x96xf32>
    %4 = arith.truncf %3 : vector<32x96xf32> to vector<32x96xbf16>
    %cst = arith.constant dense<0.000000e+00> : vector<8x96xf32>
    %5 = tpu.matmul %2, %4, %cst {dimension_numbers = #tpu.dot_dimension_numbers<[1], [0], [0], [1], [0, 0, 1, 1], [], []>} : vector<8x32xbf16>, vector<32x96xbf16>, vector<8x96xf32> -> vector<8x96xf32>
    %c0_4 = arith.constant 0 : index
    %c0_5 = arith.constant 0 : index
    %6 = vector.load %arg4[%c0_4, %c0_5] : memref<1x96xf32, #tpu.memory_space<vmem>>, vector<1x96xf32>
    %7 = vector.broadcast %6 : vector<1x96xf32> to vector<8x96xf32>
    %8 = arith.addf %5, %7 : vector<8x96xf32>
    %9 = vector.extract_strided_slice %8 {offsets = [0, 0], sizes = [8, 32], strides = [1, 1]} : vector<8x96xf32> to vector<8x32xf32>
    %10 = vector.extract_strided_slice %8 {offsets = [0, 32], sizes = [8, 32], strides = [1, 1]} : vector<8x96xf32> to vector<8x32xf32>
    %11 = vector.extract_strided_slice %8 {offsets = [0, 64], sizes = [8, 32], strides = [1, 1]} : vector<8x96xf32> to vector<8x32xf32>
    %c0_6 = arith.constant 0 : index
    %c0_7 = arith.constant 0 : index
    %12 = vector.load %arg2[%c0_6, %c0_7] : memref<8x8xf32, #tpu.memory_space<vmem>>, vector<8x8xf32>
    %13 = vector.extract_strided_slice %9 {offsets = [0, 0], sizes = [8, 8], strides = [1, 1]} : vector<8x32xf32> to vector<8x8xf32>
    %14 = arith.truncf %13 : vector<8x8xf32> to vector<8x8xbf16>
    %15 = vector.extract_strided_slice %10 {offsets = [0, 0], sizes = [8, 8], strides = [1, 1]} : vector<8x32xf32> to vector<8x8xf32>
    %16 = arith.truncf %15 : vector<8x8xf32> to vector<8x8xbf16>
    %17 = vector.extract_strided_slice %11 {offsets = [0, 0], sizes = [8, 8], strides = [1, 1]} : vector<8x32xf32> to vector<8x8xf32>
    %18 = arith.truncf %17 : vector<8x8xf32> to vector<8x8xbf16>
    %cst_8 = arith.constant dense<0.000000e+00> : vector<8x8xf32>
    %19 = tpu.matmul %14, %16, %cst_8 {dimension_numbers = #tpu.dot_dimension_numbers<[1], [1], [0], [0], [0, 0, 1, 0], [], []>} : vector<8x8xbf16>, vector<8x8xbf16>, vector<8x8xf32> -> vector<8x8xf32>
    %cst_9 = arith.constant 0.353553385 : f32
    %20 = vector.broadcast %cst_9 : f32 to vector<8x8xf32>
    %21 = arith.mulf %19, %20 : vector<8x8xf32>
    %cst_10 = arith.constant 0.000000e+00 : f32
    %22 = vector.broadcast %cst_10 : f32 to vector<8x8xf32>
    %23 = arith.cmpf ogt, %12, %22 : vector<8x8xf32>
    %cst_11 = arith.constant -1.000000e+30 : f32
    %24 = vector.broadcast %cst_11 : f32 to vector<8x8xf32>
    %25 = arith.select %23, %21, %24 : vector<8x8xi1>, vector<8x8xf32>
    %cst_12 = arith.constant dense<0xFF800000> : vector<8xf32>
    %26 = vector.multi_reduction <maximumf>, %25, %cst_12 [1] : vector<8x8xf32> to vector<8xf32>
    %27 = vector.shape_cast %26 : vector<8xf32> to vector<8x1xf32>
    %28 = vector.broadcast %27 : vector<8x1xf32> to vector<8x8xf32>
    %29 = arith.subf %25, %28 : vector<8x8xf32>
    %30 = math.exp %29 : vector<8x8xf32>
    %cst_13 = arith.constant dense<0.000000e+00> : vector<8xf32>
    %31 = vector.multi_reduction <add>, %30, %cst_13 [1] : vector<8x8xf32> to vector<8xf32>
    %32 = vector.shape_cast %31 : vector<8xf32> to vector<8x1xf32>
    %33 = tpu.reciprocal %32 {approx = true} : vector<8x1xf32> -> vector<8x1xf32>
    %34 = vector.broadcast %33 : vector<8x1xf32> to vector<8x8xf32>
    %35 = arith.mulf %30, %34 : vector<8x8xf32>
    %36 = arith.truncf %35 : vector<8x8xf32> to vector<8x8xbf16>
    %cst_14 = arith.constant dense<0.000000e+00> : vector<8x8xf32>
    %37 = tpu.matmul %36, %18, %cst_14 {dimension_numbers = #tpu.dot_dimension_numbers<[1], [0], [0], [1], [0, 0, 1, 1], [], []>} : vector<8x8xbf16>, vector<8x8xbf16>, vector<8x8xf32> -> vector<8x8xf32>
    %38 = vector.extract_strided_slice %9 {offsets = [0, 8], sizes = [8, 8], strides = [1, 1]} : vector<8x32xf32> to vector<8x8xf32>
    %39 = arith.truncf %38 : vector<8x8xf32> to vector<8x8xbf16>
    %40 = vector.extract_strided_slice %10 {offsets = [0, 8], sizes = [8, 8], strides = [1, 1]} : vector<8x32xf32> to vector<8x8xf32>
    %41 = arith.truncf %40 : vector<8x8xf32> to vector<8x8xbf16>
    %42 = vector.extract_strided_slice %11 {offsets = [0, 8], sizes = [8, 8], strides = [1, 1]} : vector<8x32xf32> to vector<8x8xf32>
    %43 = arith.truncf %42 : vector<8x8xf32> to vector<8x8xbf16>
    %cst_15 = arith.constant dense<0.000000e+00> : vector<8x8xf32>
    %44 = tpu.matmul %39, %41, %cst_15 {dimension_numbers = #tpu.dot_dimension_numbers<[1], [1], [0], [0], [0, 0, 1, 0], [], []>} : vector<8x8xbf16>, vector<8x8xbf16>, vector<8x8xf32> -> vector<8x8xf32>
    %cst_16 = arith.constant 0.353553385 : f32
    %45 = vector.broadcast %cst_16 : f32 to vector<8x8xf32>
    %46 = arith.mulf %44, %45 : vector<8x8xf32>
    %cst_17 = arith.constant 0.000000e+00 : f32
    %47 = vector.broadcast %cst_17 : f32 to vector<8x8xf32>
    %48 = arith.cmpf ogt, %12, %47 : vector<8x8xf32>
    %cst_18 = arith.constant -1.000000e+30 : f32
    %49 = vector.broadcast %cst_18 : f32 to vector<8x8xf32>
    %50 = arith.select %48, %46, %49 : vector<8x8xi1>, vector<8x8xf32>
    %cst_19 = arith.constant dense<0xFF800000> : vector<8xf32>
    %51 = vector.multi_reduction <maximumf>, %50, %cst_19 [1] : vector<8x8xf32> to vector<8xf32>
    %52 = vector.shape_cast %51 : vector<8xf32> to vector<8x1xf32>
    %53 = vector.broadcast %52 : vector<8x1xf32> to vector<8x8xf32>
    %54 = arith.subf %50, %53 : vector<8x8xf32>
    %55 = math.exp %54 : vector<8x8xf32>
    %cst_20 = arith.constant dense<0.000000e+00> : vector<8xf32>
    %56 = vector.multi_reduction <add>, %55, %cst_20 [1] : vector<8x8xf32> to vector<8xf32>
    %57 = vector.shape_cast %56 : vector<8xf32> to vector<8x1xf32>
    %58 = tpu.reciprocal %57 {approx = true} : vector<8x1xf32> -> vector<8x1xf32>
    %59 = vector.broadcast %58 : vector<8x1xf32> to vector<8x8xf32>
    %60 = arith.mulf %55, %59 : vector<8x8xf32>
    %61 = arith.truncf %60 : vector<8x8xf32> to vector<8x8xbf16>
    %cst_21 = arith.constant dense<0.000000e+00> : vector<8x8xf32>
    %62 = tpu.matmul %61, %43, %cst_21 {dimension_numbers = #tpu.dot_dimension_numbers<[1], [0], [0], [1], [0, 0, 1, 1], [], []>} : vector<8x8xbf16>, vector<8x8xbf16>, vector<8x8xf32> -> vector<8x8xf32>
    %63 = vector.extract_strided_slice %9 {offsets = [0, 16], sizes = [8, 8], strides = [1, 1]} : vector<8x32xf32> to vector<8x8xf32>
    %64 = arith.truncf %63 : vector<8x8xf32> to vector<8x8xbf16>
    %65 = vector.extract_strided_slice %10 {offsets = [0, 16], sizes = [8, 8], strides = [1, 1]} : vector<8x32xf32> to vector<8x8xf32>
    %66 = arith.truncf %65 : vector<8x8xf32> to vector<8x8xbf16>
    %67 = vector.extract_strided_slice %11 {offsets = [0, 16], sizes = [8, 8], strides = [1, 1]} : vector<8x32xf32> to vector<8x8xf32>
    %68 = arith.truncf %67 : vector<8x8xf32> to vector<8x8xbf16>
    %cst_22 = arith.constant dense<0.000000e+00> : vector<8x8xf32>
    %69 = tpu.matmul %64, %66, %cst_22 {dimension_numbers = #tpu.dot_dimension_numbers<[1], [1], [0], [0], [0, 0, 1, 0], [], []>} : vector<8x8xbf16>, vector<8x8xbf16>, vector<8x8xf32> -> vector<8x8xf32>
    %cst_23 = arith.constant 0.353553385 : f32
    %70 = vector.broadcast %cst_23 : f32 to vector<8x8xf32>
    %71 = arith.mulf %69, %70 : vector<8x8xf32>
    %cst_24 = arith.constant 0.000000e+00 : f32
    %72 = vector.broadcast %cst_24 : f32 to vector<8x8xf32>
    %73 = arith.cmpf ogt, %12, %72 : vector<8x8xf32>
    %cst_25 = arith.constant -1.000000e+30 : f32
    %74 = vector.broadcast %cst_25 : f32 to vector<8x8xf32>
    %75 = arith.select %73, %71, %74 : vector<8x8xi1>, vector<8x8xf32>
    %cst_26 = arith.constant dense<0xFF800000> : vector<8xf32>
    %76 = vector.multi_reduction <maximumf>, %75, %cst_26 [1] : vector<8x8xf32> to vector<8xf32>
    %77 = vector.shape_cast %76 : vector<8xf32> to vector<8x1xf32>
    %78 = vector.broadcast %77 : vector<8x1xf32> to vector<8x8xf32>
    %79 = arith.subf %75, %78 : vector<8x8xf32>
    %80 = math.exp %79 : vector<8x8xf32>
    %cst_27 = arith.constant dense<0.000000e+00> : vector<8xf32>
    %81 = vector.multi_reduction <add>, %80, %cst_27 [1] : vector<8x8xf32> to vector<8xf32>
    %82 = vector.shape_cast %81 : vector<8xf32> to vector<8x1xf32>
    %83 = tpu.reciprocal %82 {approx = true} : vector<8x1xf32> -> vector<8x1xf32>
    %84 = vector.broadcast %83 : vector<8x1xf32> to vector<8x8xf32>
    %85 = arith.mulf %80, %84 : vector<8x8xf32>
    %86 = arith.truncf %85 : vector<8x8xf32> to vector<8x8xbf16>
    %cst_28 = arith.constant dense<0.000000e+00> : vector<8x8xf32>
    %87 = tpu.matmul %86, %68, %cst_28 {dimension_numbers = #tpu.dot_dimension_numbers<[1], [0], [0], [1], [0, 0, 1, 1], [], []>} : vector<8x8xbf16>, vector<8x8xbf16>, vector<8x8xf32> -> vector<8x8xf32>
    %88 = vector.extract_strided_slice %9 {offsets = [0, 24], sizes = [8, 8], strides = [1, 1]} : vector<8x32xf32> to vector<8x8xf32>
    %89 = arith.truncf %88 : vector<8x8xf32> to vector<8x8xbf16>
    %90 = vector.extract_strided_slice %10 {offsets = [0, 24], sizes = [8, 8], strides = [1, 1]} : vector<8x32xf32> to vector<8x8xf32>
    %91 = arith.truncf %90 : vector<8x8xf32> to vector<8x8xbf16>
    %92 = vector.extract_strided_slice %11 {offsets = [0, 24], sizes = [8, 8], strides = [1, 1]} : vector<8x32xf32> to vector<8x8xf32>
    %93 = arith.truncf %92 : vector<8x8xf32> to vector<8x8xbf16>
    %cst_29 = arith.constant dense<0.000000e+00> : vector<8x8xf32>
    %94 = tpu.matmul %89, %91, %cst_29 {dimension_numbers = #tpu.dot_dimension_numbers<[1], [1], [0], [0], [0, 0, 1, 0], [], []>} : vector<8x8xbf16>, vector<8x8xbf16>, vector<8x8xf32> -> vector<8x8xf32>
    %cst_30 = arith.constant 0.353553385 : f32
    %95 = vector.broadcast %cst_30 : f32 to vector<8x8xf32>
    %96 = arith.mulf %94, %95 : vector<8x8xf32>
    %cst_31 = arith.constant 0.000000e+00 : f32
    %97 = vector.broadcast %cst_31 : f32 to vector<8x8xf32>
    %98 = arith.cmpf ogt, %12, %97 : vector<8x8xf32>
    %cst_32 = arith.constant -1.000000e+30 : f32
    %99 = vector.broadcast %cst_32 : f32 to vector<8x8xf32>
    %100 = arith.select %98, %96, %99 : vector<8x8xi1>, vector<8x8xf32>
    %cst_33 = arith.constant dense<0xFF800000> : vector<8xf32>
    %101 = vector.multi_reduction <maximumf>, %100, %cst_33 [1] : vector<8x8xf32> to vector<8xf32>
    %102 = vector.shape_cast %101 : vector<8xf32> to vector<8x1xf32>
    %103 = vector.broadcast %102 : vector<8x1xf32> to vector<8x8xf32>
    %104 = arith.subf %100, %103 : vector<8x8xf32>
    %105 = math.exp %104 : vector<8x8xf32>
    %cst_34 = arith.constant dense<0.000000e+00> : vector<8xf32>
    %106 = vector.multi_reduction <add>, %105, %cst_34 [1] : vector<8x8xf32> to vector<8xf32>
    %107 = vector.shape_cast %106 : vector<8xf32> to vector<8x1xf32>
    %108 = tpu.reciprocal %107 {approx = true} : vector<8x1xf32> -> vector<8x1xf32>
    %109 = vector.broadcast %108 : vector<8x1xf32> to vector<8x8xf32>
    %110 = arith.mulf %105, %109 : vector<8x8xf32>
    %111 = arith.truncf %110 : vector<8x8xf32> to vector<8x8xbf16>
    %cst_35 = arith.constant dense<0.000000e+00> : vector<8x8xf32>
    %112 = tpu.matmul %111, %93, %cst_35 {dimension_numbers = #tpu.dot_dimension_numbers<[1], [0], [0], [1], [0, 0, 1, 1], [], []>} : vector<8x8xbf16>, vector<8x8xbf16>, vector<8x8xf32> -> vector<8x8xf32>
    %113 = tpu.concatenate %37, %62, %87, %112 in 1 : vector<8x8xf32>, vector<8x8xf32>, vector<8x8xf32>, vector<8x8xf32> -> vector<8x32xf32>
    %114 = arith.truncf %113 : vector<8x32xf32> to vector<8x32xbf16>
    %c0_36 = arith.constant 0 : index
    %c0_37 = arith.constant 0 : index
    %115 = vector.load %arg5[%c0_36, %c0_37] : memref<32x32xf32, #tpu.memory_space<vmem>>, vector<32x32xf32>
    %116 = arith.truncf %115 : vector<32x32xf32> to vector<32x32xbf16>
    %cst_38 = arith.constant dense<0.000000e+00> : vector<8x32xf32>
    %117 = tpu.matmul %114, %116, %cst_38 {dimension_numbers = #tpu.dot_dimension_numbers<[1], [0], [0], [1], [0, 0, 1, 1], [], []>} : vector<8x32xbf16>, vector<32x32xbf16>, vector<8x32xf32> -> vector<8x32xf32>
    %c0_39 = arith.constant 0 : index
    %c0_40 = arith.constant 0 : index
    %118 = vector.load %arg6[%c0_39, %c0_40] : memref<1x32xf32, #tpu.memory_space<vmem>>, vector<1x32xf32>
    %119 = vector.broadcast %118 : vector<1x32xf32> to vector<8x32xf32>
    %120 = arith.addf %117, %119 : vector<8x32xf32>
    %121 = arith.addf %1, %120 : vector<8x32xf32>
    %c0_41 = arith.constant 0 : index
    %c0_42 = arith.constant 0 : index
    %122 = vector.load %arg7[%c0_41, %c0_42] : memref<1x32xf32, #tpu.memory_space<vmem>>, vector<1x32xf32>
    %c0_43 = arith.constant 0 : index
    %c0_44 = arith.constant 0 : index
    %123 = vector.load %arg8[%c0_43, %c0_44] : memref<1x32xf32, #tpu.memory_space<vmem>>, vector<1x32xf32>
    %cst_45 = arith.constant dense<0.000000e+00> : vector<8xf32>
    %124 = vector.multi_reduction <add>, %121, %cst_45 [1] : vector<8x32xf32> to vector<8xf32>
    %125 = vector.shape_cast %124 : vector<8xf32> to vector<8x1xf32>
    %cst_46 = arith.constant 3.200000e+01 : f32
    %126 = vector.broadcast %cst_46 : f32 to vector<8x1xf32>
    %127 = arith.divf %125, %126 : vector<8x1xf32>
    %128 = vector.broadcast %127 : vector<8x1xf32> to vector<8x32xf32>
    %129 = arith.subf %121, %128 : vector<8x32xf32>
    %130 = vector.broadcast %127 : vector<8x1xf32> to vector<8x32xf32>
    %131 = arith.subf %121, %130 : vector<8x32xf32>
    %132 = arith.mulf %129, %131 : vector<8x32xf32>
    %cst_47 = arith.constant dense<0.000000e+00> : vector<8xf32>
    %133 = vector.multi_reduction <add>, %132, %cst_47 [1] : vector<8x32xf32> to vector<8xf32>
    %134 = vector.shape_cast %133 : vector<8xf32> to vector<8x1xf32>
    %cst_48 = arith.constant 3.200000e+01 : f32
    %135 = vector.broadcast %cst_48 : f32 to vector<8x1xf32>
    %136 = arith.divf %134, %135 : vector<8x1xf32>
    %137 = vector.broadcast %127 : vector<8x1xf32> to vector<8x32xf32>
    %138 = arith.subf %121, %137 : vector<8x32xf32>
    %cst_49 = arith.constant 9.99999974E-6 : f32
    %139 = vector.broadcast %cst_49 : f32 to vector<8x1xf32>
    %140 = arith.addf %136, %139 : vector<8x1xf32>
    %141 = math.rsqrt %140 : vector<8x1xf32>
    %142 = vector.broadcast %141 : vector<8x1xf32> to vector<8x32xf32>
    %143 = arith.mulf %138, %142 : vector<8x32xf32>
    %144 = vector.broadcast %122 : vector<1x32xf32> to vector<8x32xf32>
    %145 = arith.mulf %143, %144 : vector<8x32xf32>
    %146 = vector.broadcast %123 : vector<1x32xf32> to vector<8x32xf32>
    %147 = arith.addf %145, %146 : vector<8x32xf32>
    %c0_50 = arith.constant 0 : index
    %c0_51 = arith.constant 0 : index
    %c0_52 = arith.constant 0 : index
    %148 = vector.load %arg9[%c0_50, %c0_51, %c0_52] : memref<1x8x32xf32, #tpu.memory_space<vmem>>, vector<1x8x32xf32>
    %149 = vector.shape_cast %148 : vector<1x8x32xf32> to vector<8x32xf32>
    %150 = vector.shape_cast %147 : vector<8x32xf32> to vector<1x8x32xf32>
    tpu.vector_store %arg9[%c0_50, %c0_51, %c0_52], %150 {strides = array<i32>} : memref<1x8x32xf32, #tpu.memory_space<vmem>>, vector<1x8x32xf32>,
    return
  }
  func.func @transform_0(%arg0: i32) -> (i32, i32, i32) {
    %c0_i32 = arith.constant 0 : i32
    %c0_i32_0 = arith.constant 0 : i32
    %c0_i32_1 = arith.constant 0 : i32
    return %arg0, %c0_i32, %c0_i32_0 : i32, i32, i32
  }
  func.func @transform_1(%arg0: i32) -> (i32, i32) {
    %c0_i32 = arith.constant 0 : i32
    %c0_i32_0 = arith.constant 0 : i32
    %c0_i32_1 = arith.constant 0 : i32
    return %c0_i32, %c0_i32_0 : i32, i32
  }
  func.func @transform_2(%arg0: i32) -> (i32, i32) {
    %c0_i32 = arith.constant 0 : i32
    %c0_i32_0 = arith.constant 0 : i32
    %c0_i32_1 = arith.constant 0 : i32
    return %c0_i32, %c0_i32_0 : i32, i32
  }
  func.func @transform_3(%arg0: i32) -> (i32, i32) {
    %c0_i32 = arith.constant 0 : i32
    %c0_i32_0 = arith.constant 0 : i32
    %c0_i32_1 = arith.constant 0 : i32
    return %c0_i32, %c0_i32_0 : i32, i32
  }
  func.func @transform_4(%arg0: i32) -> (i32, i32) {
    %c0_i32 = arith.constant 0 : i32
    %c0_i32_0 = arith.constant 0 : i32
    %c0_i32_1 = arith.constant 0 : i32
    return %c0_i32, %c0_i32_0 : i32, i32
  }
  func.func @transform_5(%arg0: i32) -> (i32, i32) {
    %c0_i32 = arith.constant 0 : i32
    %c0_i32_0 = arith.constant 0 : i32
    %c0_i32_1 = arith.constant 0 : i32
    return %c0_i32, %c0_i32_0 : i32, i32
  }
  func.func @transform_6(%arg0: i32) -> (i32, i32) {
    %c0_i32 = arith.constant 0 : i32
    %c0_i32_0 = arith.constant 0 : i32
    %c0_i32_1 = arith.constant 0 : i32
    return %c0_i32, %c0_i32_0 : i32, i32
  }
  func.func @transform_7(%arg0: i32) -> (i32, i32) {
    %c0_i32 = arith.constant 0 : i32
    %c0_i32_0 = arith.constant 0 : i32
    %c0_i32_1 = arith.constant 0 : i32
    return %c0_i32, %c0_i32_0 : i32, i32
  }
  func.func @transform_8(%arg0: i32) -> (i32, i32, i32) {
    %c0_i32 = arith.constant 0 : i32
    %c0_i32_0 = arith.constant 0 : i32
    %c0_i32_1 = arith.constant 0 : i32
    return %arg0, %c0_i32, %c0_i32_0 : i32, i32, i32
  }
}

module attributes {stable_mosaic.version = 11 : i64} {
  func.func @_ffn_block_kernel(%arg0: i32, %arg1: memref<16x32xf32, #tpu.memory_space<vmem>>, %arg2: memref<32x64xf32, #tpu.memory_space<vmem>>, %arg3: memref<1x64xf32, #tpu.memory_space<vmem>>, %arg4: memref<64x32xf32, #tpu.memory_space<vmem>>, %arg5: memref<1x32xf32, #tpu.memory_space<vmem>>, %arg6: memref<1x32xf32, #tpu.memory_space<vmem>>, %arg7: memref<1x32xf32, #tpu.memory_space<vmem>>, %arg8: memref<16x32xf32, #tpu.memory_space<vmem>>) attributes {dimension_semantics = [#tpu.dimension_semantics<parallel>], iteration_bounds = array<i64: 1>, scalar_prefetch = 0 : i64, scratch_operands = 0 : i64, tpu.core_type = #tpu.core_type<tc>, window_params = [{transform_indices = @transform_0, window_bounds = array<i64: 16, 32>}, {pipeline_mode = #tpu.pipeline_mode<synchronous>, transform_indices = @transform_1, window_bounds = array<i64: 32, 64>}, {pipeline_mode = #tpu.pipeline_mode<synchronous>, transform_indices = @transform_2, window_bounds = array<i64: 1, 64>}, {pipeline_mode = #tpu.pipeline_mode<synchronous>, transform_indices = @transform_3, window_bounds = array<i64: 64, 32>}, {pipeline_mode = #tpu.pipeline_mode<synchronous>, transform_indices = @transform_4, window_bounds = array<i64: 1, 32>}, {pipeline_mode = #tpu.pipeline_mode<synchronous>, transform_indices = @transform_5, window_bounds = array<i64: 1, 32>}, {pipeline_mode = #tpu.pipeline_mode<synchronous>, transform_indices = @transform_6, window_bounds = array<i64: 1, 32>}, {transform_indices = @transform_7, window_bounds = array<i64: 16, 32>}]} {
    %c0 = arith.constant 0 : index
    %c0_0 = arith.constant 0 : index
    %0 = vector.load %arg1[%c0, %c0_0] : memref<16x32xf32, #tpu.memory_space<vmem>>, vector<16x32xf32>
    %1 = arith.truncf %0 : vector<16x32xf32> to vector<16x32xbf16>
    %c0_1 = arith.constant 0 : index
    %c0_2 = arith.constant 0 : index
    %2 = vector.load %arg2[%c0_1, %c0_2] : memref<32x64xf32, #tpu.memory_space<vmem>>, vector<32x64xf32>
    %3 = arith.truncf %2 : vector<32x64xf32> to vector<32x64xbf16>
    %cst = arith.constant dense<0.000000e+00> : vector<16x64xf32>
    %4 = tpu.matmul %1, %3, %cst {dimension_numbers = #tpu.dot_dimension_numbers<[1], [0], [0], [1], [0, 0, 1, 1], [], []>} : vector<16x32xbf16>, vector<32x64xbf16>, vector<16x64xf32> -> vector<16x64xf32>
    %c0_3 = arith.constant 0 : index
    %c0_4 = arith.constant 0 : index
    %5 = vector.load %arg3[%c0_3, %c0_4] : memref<1x64xf32, #tpu.memory_space<vmem>>, vector<1x64xf32>
    %6 = vector.broadcast %5 : vector<1x64xf32> to vector<16x64xf32>
    %7 = arith.addf %4, %6 : vector<16x64xf32>
    %8 = arith.mulf %7, %7 : vector<16x64xf32>
    %9 = arith.mulf %7, %8 : vector<16x64xf32>
    %cst_5 = arith.constant 4.471500e-02 : f32
    %10 = vector.broadcast %cst_5 : f32 to vector<16x64xf32>
    %11 = arith.mulf %10, %9 : vector<16x64xf32>
    %12 = arith.addf %7, %11 : vector<16x64xf32>
    %cst_6 = arith.constant 0.797884583 : f32
    %13 = vector.broadcast %cst_6 : f32 to vector<16x64xf32>
    %14 = arith.mulf %13, %12 : vector<16x64xf32>
    %15 = math.tanh %14 : vector<16x64xf32>
    %cst_7 = arith.constant 1.000000e+00 : f32
    %16 = vector.broadcast %cst_7 : f32 to vector<16x64xf32>
    %17 = arith.addf %16, %15 : vector<16x64xf32>
    %cst_8 = arith.constant 5.000000e-01 : f32
    %18 = vector.broadcast %cst_8 : f32 to vector<16x64xf32>
    %19 = arith.mulf %18, %17 : vector<16x64xf32>
    %20 = arith.mulf %7, %19 : vector<16x64xf32>
    %21 = arith.truncf %20 : vector<16x64xf32> to vector<16x64xbf16>
    %c0_9 = arith.constant 0 : index
    %c0_10 = arith.constant 0 : index
    %22 = vector.load %arg4[%c0_9, %c0_10] : memref<64x32xf32, #tpu.memory_space<vmem>>, vector<64x32xf32>
    %23 = arith.truncf %22 : vector<64x32xf32> to vector<64x32xbf16>
    %cst_11 = arith.constant dense<0.000000e+00> : vector<16x32xf32>
    %24 = tpu.matmul %21, %23, %cst_11 {dimension_numbers = #tpu.dot_dimension_numbers<[1], [0], [0], [1], [0, 0, 1, 1], [], []>} : vector<16x64xbf16>, vector<64x32xbf16>, vector<16x32xf32> -> vector<16x32xf32>
    %c0_12 = arith.constant 0 : index
    %c0_13 = arith.constant 0 : index
    %25 = vector.load %arg5[%c0_12, %c0_13] : memref<1x32xf32, #tpu.memory_space<vmem>>, vector<1x32xf32>
    %26 = vector.broadcast %25 : vector<1x32xf32> to vector<16x32xf32>
    %27 = arith.addf %24, %26 : vector<16x32xf32>
    %28 = arith.addf %0, %27 : vector<16x32xf32>
    %c0_14 = arith.constant 0 : index
    %c0_15 = arith.constant 0 : index
    %29 = vector.load %arg6[%c0_14, %c0_15] : memref<1x32xf32, #tpu.memory_space<vmem>>, vector<1x32xf32>
    %c0_16 = arith.constant 0 : index
    %c0_17 = arith.constant 0 : index
    %30 = vector.load %arg7[%c0_16, %c0_17] : memref<1x32xf32, #tpu.memory_space<vmem>>, vector<1x32xf32>
    %cst_18 = arith.constant dense<0.000000e+00> : vector<16xf32>
    %31 = vector.multi_reduction <add>, %28, %cst_18 [1] : vector<16x32xf32> to vector<16xf32>
    %32 = vector.shape_cast %31 : vector<16xf32> to vector<16x1xf32>
    %cst_19 = arith.constant 3.200000e+01 : f32
    %33 = vector.broadcast %cst_19 : f32 to vector<16x1xf32>
    %34 = arith.divf %32, %33 : vector<16x1xf32>
    %35 = vector.broadcast %34 : vector<16x1xf32> to vector<16x32xf32>
    %36 = arith.subf %28, %35 : vector<16x32xf32>
    %37 = vector.broadcast %34 : vector<16x1xf32> to vector<16x32xf32>
    %38 = arith.subf %28, %37 : vector<16x32xf32>
    %39 = arith.mulf %36, %38 : vector<16x32xf32>
    %cst_20 = arith.constant dense<0.000000e+00> : vector<16xf32>
    %40 = vector.multi_reduction <add>, %39, %cst_20 [1] : vector<16x32xf32> to vector<16xf32>
    %41 = vector.shape_cast %40 : vector<16xf32> to vector<16x1xf32>
    %cst_21 = arith.constant 3.200000e+01 : f32
    %42 = vector.broadcast %cst_21 : f32 to vector<16x1xf32>
    %43 = arith.divf %41, %42 : vector<16x1xf32>
    %44 = vector.broadcast %34 : vector<16x1xf32> to vector<16x32xf32>
    %45 = arith.subf %28, %44 : vector<16x32xf32>
    %cst_22 = arith.constant 9.99999974E-6 : f32
    %46 = vector.broadcast %cst_22 : f32 to vector<16x1xf32>
    %47 = arith.addf %43, %46 : vector<16x1xf32>
    %48 = math.rsqrt %47 : vector<16x1xf32>
    %49 = vector.broadcast %48 : vector<16x1xf32> to vector<16x32xf32>
    %50 = arith.mulf %45, %49 : vector<16x32xf32>
    %51 = vector.broadcast %29 : vector<1x32xf32> to vector<16x32xf32>
    %52 = arith.mulf %50, %51 : vector<16x32xf32>
    %53 = vector.broadcast %30 : vector<1x32xf32> to vector<16x32xf32>
    %54 = arith.addf %52, %53 : vector<16x32xf32>
    %c0_23 = arith.constant 0 : index
    %c0_24 = arith.constant 0 : index
    %55 = vector.load %arg8[%c0_23, %c0_24] : memref<16x32xf32, #tpu.memory_space<vmem>>, vector<16x32xf32>
    tpu.vector_store %arg8[%c0_23, %c0_24], %54 {strides = array<i32>} : memref<16x32xf32, #tpu.memory_space<vmem>>, vector<16x32xf32>,
    return
  }
  func.func @transform_0(%arg0: i32) -> (i32, i32) {
    %c0_i32 = arith.constant 0 : i32
    %c0_i32_0 = arith.constant 0 : i32
    return %arg0, %c0_i32 : i32, i32
  }
  func.func @transform_1(%arg0: i32) -> (i32, i32) {
    %c0_i32 = arith.constant 0 : i32
    %c0_i32_0 = arith.constant 0 : i32
    %c0_i32_1 = arith.constant 0 : i32
    return %c0_i32, %c0_i32_0 : i32, i32
  }
  func.func @transform_2(%arg0: i32) -> (i32, i32) {
    %c0_i32 = arith.constant 0 : i32
    %c0_i32_0 = arith.constant 0 : i32
    %c0_i32_1 = arith.constant 0 : i32
    return %c0_i32, %c0_i32_0 : i32, i32
  }
  func.func @transform_3(%arg0: i32) -> (i32, i32) {
    %c0_i32 = arith.constant 0 : i32
    %c0_i32_0 = arith.constant 0 : i32
    %c0_i32_1 = arith.constant 0 : i32
    return %c0_i32, %c0_i32_0 : i32, i32
  }
  func.func @transform_4(%arg0: i32) -> (i32, i32) {
    %c0_i32 = arith.constant 0 : i32
    %c0_i32_0 = arith.constant 0 : i32
    %c0_i32_1 = arith.constant 0 : i32
    return %c0_i32, %c0_i32_0 : i32, i32
  }
  func.func @transform_5(%arg0: i32) -> (i32, i32) {
    %c0_i32 = arith.constant 0 : i32
    %c0_i32_0 = arith.constant 0 : i32
    %c0_i32_1 = arith.constant 0 : i32
    return %c0_i32, %c0_i32_0 : i32, i32
  }
  func.func @transform_6(%arg0: i32) -> (i32, i32) {
    %c0_i32 = arith.constant 0 : i32
    %c0_i32_0 = arith.constant 0 : i32
    %c0_i32_1 = arith.constant 0 : i32
    return %c0_i32, %c0_i32_0 : i32, i32
  }
  func.func @transform_7(%arg0: i32) -> (i32, i32) {
    %c0_i32 = arith.constant 0 : i32
    %c0_i32_0 = arith.constant 0 : i32
    return %arg0, %c0_i32 : i32, i32
  }
}

module attributes {stable_mosaic.version = 11 : i64} {
  func.func @_layernorm_kernel(%arg0: i32, %arg1: memref<16x32xf32, #tpu.memory_space<vmem>>, %arg2: memref<1x32xf32, #tpu.memory_space<vmem>>, %arg3: memref<1x32xf32, #tpu.memory_space<vmem>>, %arg4: memref<16x32xf32, #tpu.memory_space<vmem>>) attributes {dimension_semantics = [#tpu.dimension_semantics<parallel>], iteration_bounds = array<i64: 1>, scalar_prefetch = 0 : i64, scratch_operands = 0 : i64, tpu.core_type = #tpu.core_type<tc>, window_params = [{transform_indices = @transform_0, window_bounds = array<i64: 16, 32>}, {pipeline_mode = #tpu.pipeline_mode<synchronous>, transform_indices = @transform_1, window_bounds = array<i64: 1, 32>}, {pipeline_mode = #tpu.pipeline_mode<synchronous>, transform_indices = @transform_2, window_bounds = array<i64: 1, 32>}, {transform_indices = @transform_3, window_bounds = array<i64: 16, 32>}]} {
    %c0 = arith.constant 0 : index
    %c0_0 = arith.constant 0 : index
    %0 = vector.load %arg1[%c0, %c0_0] : memref<16x32xf32, #tpu.memory_space<vmem>>, vector<16x32xf32>
    %c0_1 = arith.constant 0 : index
    %c0_2 = arith.constant 0 : index
    %1 = vector.load %arg2[%c0_1, %c0_2] : memref<1x32xf32, #tpu.memory_space<vmem>>, vector<1x32xf32>
    %c0_3 = arith.constant 0 : index
    %c0_4 = arith.constant 0 : index
    %2 = vector.load %arg3[%c0_3, %c0_4] : memref<1x32xf32, #tpu.memory_space<vmem>>, vector<1x32xf32>
    %cst = arith.constant dense<0.000000e+00> : vector<16xf32>
    %3 = vector.multi_reduction <add>, %0, %cst [1] : vector<16x32xf32> to vector<16xf32>
    %4 = vector.shape_cast %3 : vector<16xf32> to vector<16x1xf32>
    %cst_5 = arith.constant 3.200000e+01 : f32
    %5 = vector.broadcast %cst_5 : f32 to vector<16x1xf32>
    %6 = arith.divf %4, %5 : vector<16x1xf32>
    %7 = vector.broadcast %6 : vector<16x1xf32> to vector<16x32xf32>
    %8 = arith.subf %0, %7 : vector<16x32xf32>
    %9 = vector.broadcast %6 : vector<16x1xf32> to vector<16x32xf32>
    %10 = arith.subf %0, %9 : vector<16x32xf32>
    %11 = arith.mulf %8, %10 : vector<16x32xf32>
    %cst_6 = arith.constant dense<0.000000e+00> : vector<16xf32>
    %12 = vector.multi_reduction <add>, %11, %cst_6 [1] : vector<16x32xf32> to vector<16xf32>
    %13 = vector.shape_cast %12 : vector<16xf32> to vector<16x1xf32>
    %cst_7 = arith.constant 3.200000e+01 : f32
    %14 = vector.broadcast %cst_7 : f32 to vector<16x1xf32>
    %15 = arith.divf %13, %14 : vector<16x1xf32>
    %16 = vector.broadcast %6 : vector<16x1xf32> to vector<16x32xf32>
    %17 = arith.subf %0, %16 : vector<16x32xf32>
    %cst_8 = arith.constant 9.99999974E-6 : f32
    %18 = vector.broadcast %cst_8 : f32 to vector<16x1xf32>
    %19 = arith.addf %15, %18 : vector<16x1xf32>
    %20 = math.rsqrt %19 : vector<16x1xf32>
    %21 = vector.broadcast %20 : vector<16x1xf32> to vector<16x32xf32>
    %22 = arith.mulf %17, %21 : vector<16x32xf32>
    %23 = vector.broadcast %1 : vector<1x32xf32> to vector<16x32xf32>
    %24 = arith.mulf %22, %23 : vector<16x32xf32>
    %25 = vector.broadcast %2 : vector<1x32xf32> to vector<16x32xf32>
    %26 = arith.addf %24, %25 : vector<16x32xf32>
    %c0_9 = arith.constant 0 : index
    %c0_10 = arith.constant 0 : index
    %27 = vector.load %arg4[%c0_9, %c0_10] : memref<16x32xf32, #tpu.memory_space<vmem>>, vector<16x32xf32>
    tpu.vector_store %arg4[%c0_9, %c0_10], %26 {strides = array<i32>} : memref<16x32xf32, #tpu.memory_space<vmem>>, vector<16x32xf32>,
    return
  }
  func.func @transform_0(%arg0: i32) -> (i32, i32) {
    %c0_i32 = arith.constant 0 : i32
    %c0_i32_0 = arith.constant 0 : i32
    return %arg0, %c0_i32 : i32, i32
  }
  func.func @transform_1(%arg0: i32) -> (i32, i32) {
    %c0_i32 = arith.constant 0 : i32
    %c0_i32_0 = arith.constant 0 : i32
    %c0_i32_1 = arith.constant 0 : i32
    return %c0_i32, %c0_i32_0 : i32, i32
  }
  func.func @transform_2(%arg0: i32) -> (i32, i32) {
    %c0_i32 = arith.constant 0 : i32
    %c0_i32_0 = arith.constant 0 : i32
    %c0_i32_1 = arith.constant 0 : i32
    return %c0_i32, %c0_i32_0 : i32, i32
  }
  func.func @transform_3(%arg0: i32) -> (i32, i32) {
    %c0_i32 = arith.constant 0 : i32
    %c0_i32_0 = arith.constant 0 : i32
    return %arg0, %c0_i32 : i32, i32
  }
}

</mosaic_0001>

<llo_original>
// kernel: decoder_forward.6
$region0: #{decoder_forward.6}
  #allocation0 [shape = 'u32[]', space=smem, size = 0x4, offset = 0x4, fixed_abs, tag = 'smem constant byte address 0x4 - core index']
  #allocation1 [shape = 'u32[144,128]{1,0:T(1,128)}', space=vmem, size = 0x12000, scoped, tag = 'internal scratch']
  %s0 = inlined_call_operand.vmem [shape: f32[16,32], index: 0, kind: input, shape index: {}]
  %s1 = inlined_call_operand.vmem [shape: f32[32,64], index: 1, kind: input, shape index: {}]
  %s2 = inlined_call_operand.vmem [shape: f32[1,64], index: 2, kind: input, shape index: {}]
  %s3 = inlined_call_operand.vmem [shape: f32[64,32], index: 3, kind: input, shape index: {}]
  %s4 = inlined_call_operand.vmem [shape: f32[1,32], index: 4, kind: input, shape index: {}]
  %s5 = inlined_call_operand.vmem [shape: f32[1,32], index: 5, kind: input, shape index: {}]
  %s6 = inlined_call_operand.vmem [shape: f32[1,32], index: 6, kind: input, shape index: {}]
  %s7 = inlined_call_operand.vmem [shape: f32[16,32], index: 7, kind: output, shape index: {}]
  %s8 = sld [smem:[#allocation0]]
  $region38: #{decoder_forward.6} parent=0
    _
  %s10 = ssub.s32 1, %s8
  %s11 = scalar_select 0, %s10, %s8
  // Predicated region
  $region2: #{decoder_forward.6} parent=0 // pred_check
    _
  $region3: #{decoder_forward.6} parent=0 // pred_check_branch
    %13 = sbr.rel (0) target = $region5
  $region4: #{decoder_forward.6} parent=0 // pred_region
    _
  $region5: #{decoder_forward.6} parent=0 // pred_fallthru
    _
  // Predicated region
  $region6: #{decoder_forward.6} parent=0 // pred_check
    _
  $region7: #{decoder_forward.6} parent=0 // pred_check_branch
    %15 = sbr.rel (0) target = $region9
  $region8: #{decoder_forward.6} parent=0 // pred_region
    _
  $region9: #{decoder_forward.6} parent=0 // pred_fallthru
    _
  // Predicated region
  $region10: #{decoder_forward.6} parent=0 // pred_check
    _
  $region11: #{decoder_forward.6} parent=0 // pred_check_branch
    %17 = sbr.rel (0) target = $region13
  $region12: #{decoder_forward.6} parent=0 // pred_region
    _
  $region13: #{decoder_forward.6} parent=0 // pred_fallthru
    _
  // Predicated region
  $region14: #{decoder_forward.6} parent=0 // pred_check
    _
  $region15: #{decoder_forward.6} parent=0 // pred_check_branch
    %19 = sbr.rel (0) target = $region17
  $region16: #{decoder_forward.6} parent=0 // pred_region
    _
  $region17: #{decoder_forward.6} parent=0 // pred_fallthru
    _
  // Predicated region
  $region18: #{decoder_forward.6} parent=0 // pred_check
    _
  $region19: #{decoder_forward.6} parent=0 // pred_check_branch
    %21 = sbr.rel (0) target = $region21
  $region20: #{decoder_forward.6} parent=0 // pred_region
    _
  $region21: #{decoder_forward.6} parent=0 // pred_fallthru
    _
  // Predicated region
  $region22: #{decoder_forward.6} parent=0 // pred_check
    _
  $region23: #{decoder_forward.6} parent=0 // pred_check_branch
    %23 = sbr.rel (0) target = $region25
  $region24: #{decoder_forward.6} parent=0 // pred_region
    _
  $region25: #{decoder_forward.6} parent=0 // pred_fallthru
    _
  // Predicated region
  $region26: #{decoder_forward.6} parent=0 // pred_check
    _
  $region27: #{decoder_forward.6} parent=0 // pred_check_branch
    %25 = sbr.rel (0) target = $region29
  $region28: #{decoder_forward.6} parent=0 // pred_region
    _
  $region29: #{decoder_forward.6} parent=0 // pred_fallthru
    _
  %v27 = vld [vmem:[%s0] sm:$0xff]
  %v28 = vld [vmem:[%s0 + $0x8] sm:$0xff]
  %v29 = vpack.c.bf16 %v28, %v27
  %v30 = vld [vmem:[%s1] sm:$0xff]
  %v31 = vld [vmem:[%s1 + $0x8] sm:$0xff]
  %v32 = vld [vmem:[%s1 + $0x10] sm:$0xff]
  %v33 = vld [vmem:[%s1 + $0x18] sm:$0xff]
  %v34 = vpack.c.bf16 %v31, %v30
  %v35 = vpack.c.bf16 %v33, %v32
  %v36 = vld [vmem:[%s2] sm:$0x1]
  %v38 = vlaneseq
  %v39 = vshrl.u32 %v38, 7
  %v40 = vsub.s32 0, %v39
  %v41 = vrot.slane %v36, %v40
  %vm43 = vcmask 261120
  %v45 = vsel %vm43, %v29, 0
  %47 = vmatprep.subr.bf16.mxu0 0
  %48 = vmatpush1.bf16.msra.mxu0 0
  %49 = vmatprep.subr.bf16.mxu0 0
  %50 = vmatpush1.bf16.msra.mxu0 0
  %51 = vmatprep.subr.bf16.mxu0 0
  %52 = vmatpush1.bf16.msra.mxu0 0
  %53 = vmatprep.subr.bf16.mxu0 0
  %54 = vmatpush1.bf16.msra.mxu0 0
  %55 = vmatprep.subr.bf16.mxu0 0
  %56 = vmatpush1.bf16.msra.mxu0 0
  %57 = vmatprep.subr.bf16.mxu0 0
  %58 = vmatpush1.bf16.msra.mxu0 0
  %59 = vmatprep.subr.bf16.mxu0 0
  %60 = vmatpush1.bf16.msra.mxu0 %v35
  %61 = vmatprep.subr.bf16.mxu0 0
  %62 = vmatpush1.bf16.msra.mxu0 %v34
  %63 = vmatprep.subr.bf16.mxu0 0
  %64 = vmatpush2.bf16.msra.mxu0 0
  %65 = vmatprep.subr.bf16.mxu0 0
  %66 = vmatpush2.bf16.msra.mxu0 0
  %67 = vmatprep.subr.bf16.mxu0 0
  %68 = vmatpush2.bf16.msra.mxu0 0
  %69 = vmatprep.subr.bf16.mxu0 0
  %70 = vmatpush2.bf16.msra.mxu0 0
  %71 = vmatprep.subr.bf16.mxu0 0
  %72 = vmatpush2.bf16.msra.mxu0 0
  %73 = vmatprep.subr.bf16.mxu0 0
  %74 = vmatpush2.bf16.msra.mxu0 0
  %75 = vmatprep.subr.bf16.mxu0 0
  %76 = vmatpush2.bf16.msra.mxu0 0
  %77 = vmatprep.subr.bf16.mxu0 0
  %78 = vmatpush2.bf16.msra.mxu0 0
  %79 = vmatprep.mubr.bf16.mxu0 0
  %80 = vmatmul.mubr.bf16.gmra.mxu0 %v45
  %v81 = vpop.f32.mrf.mxu0
  %v82 = vadd.f32 %v41, %v81
  %v83 = vpop.f32.mrf.mxu0
  %v84 = vpop.f32.mrf.mxu0
  %v85 = vadd.f32 %v41, %v84
  %v86 = vpop.f32.mrf.mxu0
  %87 = vdwg.mxu0
  %v88 = vmul.f32 %v82, %v82
  %v89 = vmul.f32 %v85, %v85
  %v90 = vmul.f32 %v82, %v88
  %v91 = vmul.f32 %v85, %v89
  %v92 = vmul.f32 %v90, 0.044715
  %v93 = vmul.f32 %v91, 0.044715
  %v94 = vadd.f32 %v82, %v92
  %v95 = vadd.f32 %v85, %v93
  %v96 = vmul.f32 %v94, 0.7978846
  %v97 = vmul.f32 %v95, 0.7978846
  %v98 = vtanh.pop %v96
  %v99 = vtanh.pop %v97
  %v100 = vadd.f32 %v98, 1.0
  %v101 = vadd.f32 %v99, 1.0
  %v102 = vmul.f32 %v100, 0.5
  %v103 = vmul.f32 %v101, 0.5
  %v104 = vmul.f32 %v82, %v102
  %v105 = vmul.f32 %v85, %v103
  %v106 = vpack.c.bf16 %v105, %v104
  %v107 = vld [vmem:[%s3] sm:$0xff]
  %v108 = vld [vmem:[%s3 + $0x8] sm:$0xff]
  %v109 = vld [vmem:[%s3 + $0x10] sm:$0xff]
  %v110 = vld [vmem:[%s3 + $0x18] sm:$0xff]
  %v111 = vld [vmem:[%s3 + $0x20] sm:$0xff]
  %v112 = vld [vmem:[%s3 + $0x28] sm:$0xff]
  %v113 = vld [vmem:[%s3 + $0x30] sm:$0xff]
  %v114 = vld [vmem:[%s3 + $0x38] sm:$0xff]
  %v115 = vpack.c.bf16 %v108, %v107
  %v116 = vpack.c.bf16 %v110, %v109
  %v117 = vpack.c.bf16 %v112, %v111
  %v118 = vpack.c.bf16 %v114, %v113
  %v119 = vld [vmem:[%s4] sm:$0x1]
  %v121 = vlaneseq
  %v122 = vshrl.u32 %v121, 7
  %v123 = vsub.s32 0, %v122
  %v124 = vrot.slane %v119, %v123
  %vm126 = vcmask 523264
  %v128 = vsel %vm126, %v106, 0
  %130 = vmatprep.subr.bf16.mxu0 0
  %131 = vmatpush1.bf16.msra.mxu0 0
  %132 = vmatprep.subr.bf16.mxu0 0
  %133 = vmatpush1.bf16.msra.mxu0 0
  %134 = vmatprep.subr.bf16.mxu0 0
  %135 = vmatpush1.bf16.msra.mxu0 0
  %136 = vmatprep.subr.bf16.mxu0 0
  %137 = vmatpush1.bf16.msra.mxu0 0
  %138 = vmatprep.subr.bf16.mxu0 0
  %139 = vmatpush1.bf16.msra.mxu0 %v118
  %140 = vmatprep.subr.bf16.mxu0 0
  %141 = vmatpush1.bf16.msra.mxu0 %v117
  %142 = vmatprep.subr.bf16.mxu0 0
  %143 = vmatpush1.bf16.msra.mxu0 %v116
  %144 = vmatprep.subr.bf16.mxu0 0
  %145 = vmatpush1.bf16.msra.mxu0 %v115
  %146 = vmatprep.subr.bf16.mxu0 0
  %147 = vmatpush2.bf16.msra.mxu0 0
  %148 = vmatprep.subr.bf16.mxu0 0
  %149 = vmatpush2.bf16.msra.mxu0 0
  %150 = vmatprep.subr.bf16.mxu0 0
  %151 = vmatpush2.bf16.msra.mxu0 0
  %152 = vmatprep.subr.bf16.mxu0 0
  %153 = vmatpush2.bf16.msra.mxu0 0
  %154 = vmatprep.subr.bf16.mxu0 0
  %155 = vmatpush2.bf16.msra.mxu0 0
  %156 = vmatprep.subr.bf16.mxu0 0
  %157 = vmatpush2.bf16.msra.mxu0 0
  %158 = vmatprep.subr.bf16.mxu0 0
  %159 = vmatpush2.bf16.msra.mxu0 0
  %160 = vmatprep.subr.bf16.mxu0 0
  %161 = vmatpush2.bf16.msra.mxu0 0
  %162 = vmatprep.mubr.bf16.mxu0 0
  %163 = vmatmul.mubr.bf16.gmra.mxu0 %v128
  %v164 = vpop.f32.mrf.mxu0
  %v165 = vadd.f32 %v124, %v164
  %v166 = vpop.f32.mrf.mxu0
  %v167 = vpop.f32.mrf.mxu0
  %v168 = vadd.f32 %v124, %v167
  %v169 = vpop.f32.mrf.mxu0
  %170 = vdwg.mxu0
  %v171 = vadd.f32 %v27, %v165
  %v172 = vadd.f32 %v28, %v168
  %v173 = vld [vmem:[%s5] sm:$0x1]
  %v174 = vld [vmem:[%s6] sm:$0x1]
  %v175 = vsel %vm43, %v171, 0.0
  %176 = vadd.xlane.f32.xlu0 %v175
  %v177 = vpop.xlane.xlu0 %176
  %v178 = vsel %vm43, %v172, 0.0
  %179 = vadd.xlane.f32.xlu0 %v178
  %v180 = vpop.xlane.xlu0 %179
  %v181 = vrcp.pop 32.0
  %v182 = vmul.f32 %v177, %v181
  %v183 = vmul.f32 %v180, %v181
  %v184 = vsub.f32 %v171, %v182
  %v185 = vsub.f32 %v172, %v183
  %v186 = vmul.f32 %v184, %v184
  %v187 = vmul.f32 %v185, %v185
  %v188 = vsel %vm43, %v186, 0.0
  %189 = vadd.xlane.f32.xlu0 %v188
  %v190 = vpop.xlane.xlu0 %189
  %v191 = vsel %vm43, %v187, 0.0
  %192 = vadd.xlane.f32.xlu0 %v191
  %v193 = vpop.xlane.xlu0 %192
  %v194 = vmul.f32 %v190, %v181
  %v195 = vmul.f32 %v193, %v181
  %v196 = vadd.f32 %v194, 1e-05
  %v197 = vadd.f32 %v195, 1e-05
  %v198 = vrsqrt.pop %v196
  %v199 = vrsqrt.pop %v197
  %v200 = vmul.f32 %v184, %v198
  %v201 = vmul.f32 %v185, %v199
  %v203 = vlaneseq
  %v204 = vshrl.u32 %v203, 7
  %v205 = vsub.s32 0, %v204
  %v206 = vrot.slane %v173, %v205
  %v208 = vmul.f32 %v200, %v206
  %v209 = vmul.f32 %v201, %v206
  %v211 = vlaneseq
  %v212 = vshrl.u32 %v211, 7
  %v213 = vsub.s32 0, %v212
  %v214 = vrot.slane %v174, %v213
  %v216 = vadd.f32 %v208, %v214
  %v217 = vadd.f32 %v209, %v214
  %218 = vst.msk [vmem:[%s7] sm:$0xff] %vm43, %v216
  %219 = vst.msk [vmem:[%s7 + $0x8] sm:$0xff] %vm43, %v217
  // Predicated region
  $region30: #{decoder_forward.6} parent=0 // pred_check
    _
  $region31: #{decoder_forward.6} parent=0 // pred_check_branch
    %221 = sbr.rel (0) target = $region33
  $region32: #{decoder_forward.6} parent=0 // pred_region
    _
  $region33: #{decoder_forward.6} parent=0 // pred_fallthru
    _
  // Predicated region
  $region34: #{decoder_forward.6} parent=0 // pred_check
    _
  $region35: #{decoder_forward.6} parent=0 // pred_check_branch
    %223 = sbr.rel (0) target = $region37
  $region36: #{decoder_forward.6} parent=0 // pred_region
    _
  $region37: #{decoder_forward.6} parent=0 // pred_fallthru
    _

// kernel: decoder_forward.7
$region0: #{decoder_forward.7}
  #allocation0 [shape = 'u32[]', space=smem, size = 0x4, offset = 0x4, fixed_abs, tag = 'smem constant byte address 0x4 - core index']
  #allocation1 [shape = 'u32[144,128]{1,0:T(1,128)}', space=vmem, size = 0x12000, scoped, tag = 'internal scratch']
  %s0 = inlined_call_operand.vmem [shape: f32[2,8,32], index: 0, kind: input, shape index: {}]
  %s1 = inlined_call_operand.vmem [shape: f32[8,8], index: 1, kind: input, shape index: {}]
  %s2 = inlined_call_operand.vmem [shape: f32[32,96], index: 2, kind: input, shape index: {}]
  %s3 = inlined_call_operand.vmem [shape: f32[1,96], index: 3, kind: input, shape index: {}]
  %s4 = inlined_call_operand.vmem [shape: f32[32,32], index: 4, kind: input, shape index: {}]
  %s5 = inlined_call_operand.vmem [shape: f32[1,32], index: 5, kind: input, shape index: {}]
  %s6 = inlined_call_operand.vmem [shape: f32[1,32], index: 6, kind: input, shape index: {}]
  %s7 = inlined_call_operand.vmem [shape: f32[1,32], index: 7, kind: input, shape index: {}]
  %s8 = inlined_call_operand.vmem [shape: f32[2,8,32], index: 8, kind: output, shape index: {}]
  %s9 = sld [smem:[#allocation0]]
  $region65: #{decoder_forward.7} parent=0
    _
  %s11 = ssub.s32 1, %s9
  %s12 = scalar_select 0, %s11, %s9
  loop: start=0, step=1, limit=4
  $region2: #{decoder_forward.7} parent=0 // loop_pre_header
    _
  $region3: #{decoder_forward.7} parent=0 // loop_header
    %s14 = sphi 0, %s18
    %p15 = scmp.ge.s32.totalorder %s14, 4
    %s24 = sphi 0, %s26
    %s27 = sphi 0, %s24
    %s28 = sphi 0, %s27
    %s44 = sphi 0, %s28
    %s48 = sphi 0, %s48
    %s50 = sphi 0, %s48
    %s51 = sphi 0, %s50
    %s65 = sphi 0, %s51
    %s69 = sphi 0, %s69
    %s71 = sphi 0, %s69
    %s72 = sphi 0, %s71
    %s86 = sphi 0, %s72
    %s90 = sphi 0, %s90
    %s92 = sphi 0, %s90
    %s93 = sphi 0, %s92
    %s107 = sphi 0, %s93
    %s111 = sphi 0, %s111
    %s113 = sphi 0, %s111
    %s114 = sphi 0, %s113
    %s128 = sphi 0, %s114
    %s132 = sphi 0, %s132
    %s134 = sphi 0, %s132
    %s135 = sphi 0, %s134
    %s149 = sphi 0, %s135
    %s153 = sphi 0, %s153
    %s155 = sphi 0, %s153
    %s156 = sphi 0, %s155
    %s170 = sphi 0, %s156
    %s174 = sphi 0, %s174
    %s176 = sphi 0, %s174
    %s177 = sphi 0, %s176
    %s191 = sphi 0, %s177
    %s197 = sphi 0, %s199
    %s200 = sphi 0, %s197
    %s201 = sphi 0, %s200
    %s217 = sphi 0, %s201
  $region4: #{decoder_forward.7} parent=0 // loop_header_branch
    %17 = sbr.rel (%p15) target = $region8
  $region5: #{decoder_forward.7} parent=0 // loop_body
    %s19 = ssub.s32 %s14, 1
    %s20 = ssub.s32 %s14, 2
    %s21 = sadd.s32 %s14, 1
    %s22 = ssub.s32 %s14, %s21
    %p23 = scmp.eq.s32.totalorder %s22, 0
    %s25 = sadd.s32 %s24, 1
    %s26 = scalar_select %p23, %s24, %s25
    %p29 = pneg %p23
    %p30 = scmp.eq.s32.totalorder %s14, 1
    %p31 = por %p29, %p30
    %p32 = scmp.ne.s32.totalorder %s24, %s27
    %p33 = scmp.eq.s32.totalorder %s14, 0
    %p34 = por %p32, %p33
    %p35 = scmp.ne.s32.totalorder %s24, %s27
    %p36 = scmp.eq.s32.totalorder %s19, 1
    %p37 = por %p35, %p36
    %p38 = scmp.ne.s32.totalorder %s27, %s28
    %p39 = scmp.eq.s32.totalorder %s19, 0
    %p40 = por %p38, %p39
    %p41 = scmp.ne.s32.totalorder %s27, %s28
    %p42 = scmp.eq.s32.totalorder %s20, 1
    %p43 = por %p41, %p42
    %p45 = scmp.ne.s32.totalorder %s28, %s44
    %p46 = scmp.eq.s32.totalorder %s20, 0
    %p47 = por %p45, %p46
    %s49 = sadd.s32 %s48, 1
    %p52 = scmp.eq.s32.totalorder %s14, 1
    %p53 = scmp.ne.s32.totalorder %s48, %s50
    %p54 = scmp.eq.s32.totalorder %s14, 0
    %p55 = por %p53, %p54
    %p56 = scmp.ne.s32.totalorder %s48, %s50
    %p57 = scmp.eq.s32.totalorder %s19, 1
    %p58 = por %p56, %p57
    %p59 = scmp.ne.s32.totalorder %s50, %s51
    %p60 = scmp.eq.s32.totalorder %s19, 0
    %p61 = por %p59, %p60
    %p62 = scmp.ne.s32.totalorder %s50, %s51
    %p63 = scmp.eq.s32.totalorder %s20, 1
    %p64 = por %p62, %p63
    %p66 = scmp.ne.s32.totalorder %s51, %s65
    %p67 = scmp.eq.s32.totalorder %s20, 0
    %p68 = por %p66, %p67
    %s70 = sadd.s32 %s69, 1
    %p73 = scmp.eq.s32.totalorder %s14, 1
    %p74 = scmp.ne.s32.totalorder %s69, %s71
    %p75 = scmp.eq.s32.totalorder %s14, 0
    %p76 = por %p74, %p75
    %p77 = scmp.ne.s32.totalorder %s69, %s71
    %p78 = scmp.eq.s32.totalorder %s19, 1
    %p79 = por %p77, %p78
    %p80 = scmp.ne.s32.totalorder %s71, %s72
    %p81 = scmp.eq.s32.totalorder %s19, 0
    %p82 = por %p80, %p81
    %p83 = scmp.ne.s32.totalorder %s71, %s72
    %p84 = scmp.eq.s32.totalorder %s20, 1
    %p85 = por %p83, %p84
    %p87 = scmp.ne.s32.totalorder %s72, %s86
    %p88 = scmp.eq.s32.totalorder %s20, 0
    %p89 = por %p87, %p88
    %s91 = sadd.s32 %s90, 1
    %p94 = scmp.eq.s32.totalorder %s14, 1
    %p95 = scmp.ne.s32.totalorder %s90, %s92
    %p96 = scmp.eq.s32.totalorder %s14, 0
    %p97 = por %p95, %p96
    %p98 = scmp.ne.s32.totalorder %s90, %s92
    %p99 = scmp.eq.s32.totalorder %s19, 1
    %p100 = por %p98, %p99
    %p101 = scmp.ne.s32.totalorder %s92, %s93
    %p102 = scmp.eq.s32.totalorder %s19, 0
    %p103 = por %p101, %p102
    %p104 = scmp.ne.s32.totalorder %s92, %s93
    %p105 = scmp.eq.s32.totalorder %s20, 1
    %p106 = por %p104, %p105
    %p108 = scmp.ne.s32.totalorder %s93, %s107
    %p109 = scmp.eq.s32.totalorder %s20, 0
    %p110 = por %p108, %p109
    %s112 = sadd.s32 %s111, 1
    %p115 = scmp.eq.s32.totalorder %s14, 1
    %p116 = scmp.ne.s32.totalorder %s111, %s113
    %p117 = scmp.eq.s32.totalorder %s14, 0
    %p118 = por %p116, %p117
    %p119 = scmp.ne.s32.totalorder %s111, %s113
    %p120 = scmp.eq.s32.totalorder %s19, 1
    %p121 = por %p119, %p120
    %p122 = scmp.ne.s32.totalorder %s113, %s114
    %p123 = scmp.eq.s32.totalorder %s19, 0
    %p124 = por %p122, %p123
    %p125 = scmp.ne.s32.totalorder %s113, %s114
    %p126 = scmp.eq.s32.totalorder %s20, 1
    %p127 = por %p125, %p126
    %p129 = scmp.ne.s32.totalorder %s114, %s128
    %p130 = scmp.eq.s32.totalorder %s20, 0
    %p131 = por %p129, %p130
    %s133 = sadd.s32 %s132, 1
    %p136 = scmp.eq.s32.totalorder %s14, 1
    %p137 = scmp.ne.s32.totalorder %s132, %s134
    %p138 = scmp.eq.s32.totalorder %s14, 0
    %p139 = por %p137, %p138
    %p140 = scmp.ne.s32.totalorder %s132, %s134
    %p141 = scmp.eq.s32.totalorder %s19, 1
    %p142 = por %p140, %p141
    %p143 = scmp.ne.s32.totalorder %s134, %s135
    %p144 = scmp.eq.s32.totalorder %s19, 0
    %p145 = por %p143, %p144
    %p146 = scmp.ne.s32.totalorder %s134, %s135
    %p147 = scmp.eq.s32.totalorder %s20, 1
    %p148 = por %p146, %p147
    %p150 = scmp.ne.s32.totalorder %s135, %s149
    %p151 = scmp.eq.s32.totalorder %s20, 0
    %p152 = por %p150, %p151
    %s154 = sadd.s32 %s153, 1
    %p157 = scmp.eq.s32.totalorder %s14, 1
    %p158 = scmp.ne.s32.totalorder %s153, %s155
    %p159 = scmp.eq.s32.totalorder %s14, 0
    %p160 = por %p158, %p159
    %p161 = scmp.ne.s32.totalorder %s153, %s155
    %p162 = scmp.eq.s32.totalorder %s19, 1
    %p163 = por %p161, %p162
    %p164 = scmp.ne.s32.totalorder %s155, %s156
    %p165 = scmp.eq.s32.totalorder %s19, 0
    %p166 = por %p164, %p165
    %p167 = scmp.ne.s32.totalorder %s155, %s156
    %p168 = scmp.eq.s32.totalorder %s20, 1
    %p169 = por %p167, %p168
    %p171 = scmp.ne.s32.totalorder %s156, %s170
    %p172 = scmp.eq.s32.totalorder %s20, 0
    %p173 = por %p171, %p172
    %s175 = sadd.s32 %s174, 1
    %p178 = scmp.eq.s32.totalorder %s14, 1
    %p179 = scmp.ne.s32.totalorder %s174, %s176
    %p180 = scmp.eq.s32.totalorder %s14, 0
    %p181 = por %p179, %p180
    %p182 = scmp.ne.s32.totalorder %s174, %s176
    %p183 = scmp.eq.s32.totalorder %s19, 1
    %p184 = por %p182, %p183
    %p185 = scmp.ne.s32.totalorder %s176, %s177
    %p186 = scmp.eq.s32.totalorder %s19, 0
    %p187 = por %p185, %p186
    %p188 = scmp.ne.s32.totalorder %s176, %s177
    %p189 = scmp.eq.s32.totalorder %s20, 1
    %p190 = por %p188, %p189
    %p192 = scmp.ne.s32.totalorder %s177, %s191
    %p193 = scmp.eq.s32.totalorder %s20, 0
    %p194 = por %p192, %p193
    %s195 = ssub.s32 %s14, %s21
    %p196 = scmp.eq.s32.totalorder %s195, 0
    %s198 = sadd.s32 %s197, 1
    %s199 = scalar_select %p196, %s197, %s198
    %p202 = pneg %p196
    %p203 = scmp.eq.s32.totalorder %s14, 1
    %p204 = por %p202, %p203
    %p205 = scmp.ne.s32.totalorder %s197, %s200
    %p206 = scmp.eq.s32.totalorder %s14, 0
    %p207 = por %p205, %p206
    %p208 = scmp.ne.s32.totalorder %s197, %s200
    %p209 = scmp.eq.s32.totalorder %s19, 1
    %p210 = por %p208, %p209
    %p211 = scmp.ne.s32.totalorder %s200, %s201
    %p212 = scmp.eq.s32.totalorder %s19, 0
    %p213 = por %p211, %p212
    %p214 = scmp.ne.s32.totalorder %s200, %s201
    %p215 = scmp.eq.s32.totalorder %s20, 1
    %p216 = por %p214, %p215
    %p218 = scmp.ne.s32.totalorder %s201, %s217
    %p219 = scmp.eq.s32.totalorder %s20, 0
    %p220 = por %p218, %p219
    %p221 = scmp.le.s32.totalorder 1, %s14
    %p222 = scmp.lt.s32.totalorder %s14, 3
    %p223 = pnand %p221, %p222
    %p224 = pneg %p223
    // Predicated region
    $region9: #{decoder_forward.7} parent=5 // pred_check
      _
    $region10: #{decoder_forward.7} parent=5 // pred_check_branch
      %226 = sbr.rel (%p223) target = $region12
    $region11: #{decoder_forward.7} parent=5 // pred_region
      %s227 = ssub.s32 %s14, 1
      // Predicated region
      $region13: #{decoder_forward.7} parent=11 // pred_check
        %p228 = pneg %p61
      $region14: #{decoder_forward.7} parent=11 // pred_check_branch
        %230 = sbr.rel (%p228) target = $region16
      $region15: #{decoder_forward.7} parent=11 // pred_region
        _
      $region16: #{decoder_forward.7} parent=11 // pred_fallthru
        _
      // Predicated region
      $region17: #{decoder_forward.7} parent=11 // pred_check
        %p231 = pneg %p82
      $region18: #{decoder_forward.7} parent=11 // pred_check_branch
        %233 = sbr.rel (%p231) target = $region20
      $region19: #{decoder_forward.7} parent=11 // pred_region
        _
      $region20: #{decoder_forward.7} parent=11 // pred_fallthru
        _
      // Predicated region
      $region21: #{decoder_forward.7} parent=11 // pred_check
        %p234 = pneg %p103
      $region22: #{decoder_forward.7} parent=11 // pred_check_branch
        %236 = sbr.rel (%p234) target = $region24
      $region23: #{decoder_forward.7} parent=11 // pred_region
        _
      $region24: #{decoder_forward.7} parent=11 // pred_fallthru
        _
      // Predicated region
      $region25: #{decoder_forward.7} parent=11 // pred_check
        %p237 = pneg %p124
      $region26: #{decoder_forward.7} parent=11 // pred_check_branch
        %239 = sbr.rel (%p237) target = $region28
      $region27: #{decoder_forward.7} parent=11 // pred_region
        _
      $region28: #{decoder_forward.7} parent=11 // pred_fallthru
        _
      // Predicated region
      $region29: #{decoder_forward.7} parent=11 // pred_check
        %p240 = pneg %p145
      $region30: #{decoder_forward.7} parent=11 // pred_check_branch
        %242 = sbr.rel (%p240) target = $region32
      $region31: #{decoder_forward.7} parent=11 // pred_region
        _
      $region32: #{decoder_forward.7} parent=11 // pred_fallthru
        _
      // Predicated region
      $region33: #{decoder_forward.7} parent=11 // pred_check
        %p243 = pneg %p166
      $region34: #{decoder_forward.7} parent=11 // pred_check_branch
        %245 = sbr.rel (%p243) target = $region36
      $region35: #{decoder_forward.7} parent=11 // pred_region
        _
      $region36: #{decoder_forward.7} parent=11 // pred_fallthru
        _
      // Predicated region
      $region37: #{decoder_forward.7} parent=11 // pred_check
        %p246 = pneg %p187
      $region38: #{decoder_forward.7} parent=11 // pred_check_branch
        %248 = sbr.rel (%p246) target = $region40
      $region39: #{decoder_forward.7} parent=11 // pred_region
        _
      $region40: #{decoder_forward.7} parent=11 // pred_fallthru
        _
    $region12: #{decoder_forward.7} parent=5 // pred_fallthru
      _
    %p249 = scmp.lt.s32.totalorder %s14, 2
    // Predicated region
    $region41: #{decoder_forward.7} parent=5 // pred_check
      %p250 = pneg %p249
    $region42: #{decoder_forward.7} parent=5 // pred_check_branch
      %252 = sbr.rel (%p250) target = $region44
    $region43: #{decoder_forward.7} parent=5 // pred_region
      // Predicated region
      $region45: #{decoder_forward.7} parent=43 // pred_check
        %p253 = pneg %p34
      $region46: #{decoder_forward.7} parent=43 // pred_check_branch
        %255 = sbr.rel (%p253) target = $region48
      $region47: #{decoder_forward.7} parent=43 // pred_region
        %p256 = scmp.lt.s32.totalorder %s14, 1
        %s257 = scalar_select %p256, %s14, 1
        %s258 = smul.addr %s257, 8
        %s259 = scalar_lea.vmem %s0, %s258
      $region48: #{decoder_forward.7} parent=43 // pred_fallthru
        _
    $region44: #{decoder_forward.7} parent=5 // pred_fallthru
      _
    %p260 = scmp.le.s32.totalorder 1, %s14
    %p261 = scmp.lt.s32.totalorder %s14, 3
    %p262 = pnand %p260, %p261
    %p263 = pneg %p262
    // Predicated region
    $region49: #{decoder_forward.7} parent=5 // pred_check
      _
    $region50: #{decoder_forward.7} parent=5 // pred_check_branch
      %265 = sbr.rel (%p262) target = $region52
    $region51: #{decoder_forward.7} parent=5 // pred_region
      %s266 = ssub.s32 %s14, 1
      %p267 = scmp.lt.s32.totalorder %s19, 1
      %s268 = scalar_select %p267, %s19, 1
      %s269 = smul.addr %s268, 8
      %s270 = scalar_lea.vmem %s0, %s269
      %p271 = pneg %p40
      %p272 = pneg %p37
      %p273 = pneg %p61
      %p274 = pneg %p58
      %p275 = pneg %p82
      %p276 = pneg %p79
      %p277 = pneg %p103
      %p278 = pneg %p100
      %p279 = pneg %p124
      %p280 = pneg %p121
      %p281 = pneg %p145
      %p282 = pneg %p142
      %p283 = pneg %p166
      %p284 = pneg %p163
      %p285 = pneg %p187
      %p286 = pneg %p184
      %p287 = pneg %p213
      %p288 = pneg %p210
      %p289 = scmp.lt.s32.totalorder %s19, 1
      %s290 = scalar_select %p289, %s19, 1
      %s291 = smul.addr %s290, 8
      %s292 = scalar_lea.vmem %s8, %s291
      %p293 = scmp.lt.s32.totalorder %s19, 1
      %s294 = scalar_select %p293, %s19, 1
      %s295 = smul.addr %s294, 8
      %s296 = scalar_lea.vmem %s0, %s295
      %p297 = scmp.lt.s32.totalorder %s19, 1
      %s298 = scalar_select %p297, %s19, 1
      %s299 = smul.addr %s298, 8
      %s300 = scalar_lea.vmem %s8, %s299
      %v302 = vld [vmem:[%s296] sm:$0xff]
      %v303 = vpack.c.bf16 %v302, %v302
      %v304 = vld [vmem:[%s2] sm:$0xff]
      %v305 = vld [vmem:[%s2 + $0x8] sm:$0xff]
      %v306 = vld [vmem:[%s2 + $0x10] sm:$0xff]
      %v307 = vld [vmem:[%s2 + $0x18] sm:$0xff]
      %v308 = vpack.c.bf16 %v305, %v304
      %v309 = vpack.c.bf16 %v307, %v306
      %v310 = vld [vmem:[%s3] sm:$0x1]
      %v312 = vlaneseq
      %v313 = vshrl.u32 %v312, 7
      %v314 = vsub.s32 0, %v313
      %v315 = vrot.slane %v310, %v314
      %vm317 = vcmask 261120
      %v319 = vsel %vm317, %v303, 0
      %321 = vmatprep.subr.bf16.mxu0 0
      %322 = vmatpush1.bf16.msra.mxu0 0
      %323 = vmatprep.subr.bf16.mxu0 0
      %324 = vmatpush1.bf16.msra.mxu0 0
      %325 = vmatprep.subr.bf16.mxu0 0
      %326 = vmatpush1.bf16.msra.mxu0 0
      %327 = vmatprep.subr.bf16.mxu0 0
      %328 = vmatpush1.bf16.msra.mxu0 0
      %329 = vmatprep.subr.bf16.mxu0 0
      %330 = vmatpush1.bf16.msra.mxu0 0
      %331 = vmatprep.subr.bf16.mxu0 0
      %332 = vmatpush1.bf16.msra.mxu0 0
      %333 = vmatprep.subr.bf16.mxu0 0
      %334 = vmatpush1.bf16.msra.mxu0 %v309
      %335 = vmatprep.subr.bf16.mxu0 0
      %336 = vmatpush1.bf16.msra.mxu0 %v308
      %337 = vmatprep.subr.bf16.mxu0 0
      %338 = vmatpush2.bf16.msra.mxu0 0
      %339 = vmatprep.subr.bf16.mxu0 0
      %340 = vmatpush2.bf16.msra.mxu0 0
      %341 = vmatprep.subr.bf16.mxu0 0
      %342 = vmatpush2.bf16.msra.mxu0 0
      %343 = vmatprep.subr.bf16.mxu0 0
      %344 = vmatpush2.bf16.msra.mxu0 0
      %345 = vmatprep.subr.bf16.mxu0 0
      %346 = vmatpush2.bf16.msra.mxu0 0
      %347 = vmatprep.subr.bf16.mxu0 0
      %348 = vmatpush2.bf16.msra.mxu0 0
      %349 = vmatprep.subr.bf16.mxu0 0
      %350 = vmatpush2.bf16.msra.mxu0 0
      %351 = vmatprep.subr.bf16.mxu0 0
      %352 = vmatpush2.bf16.msra.mxu0 0
      %353 = vmatprep.mubr.bf16.mxu0 0
      %354 = vmatmul.mubr.bf16.gmra.mxu0 %v319
      %v355 = vpop.f32.mrf.mxu0
      %v356 = vadd.f32 %v315, %v355
      %v357 = vpop.f32.mrf.mxu0
      %v358 = vpop.f32.mrf.mxu0
      %v359 = vpop.f32.mrf.mxu0
      %360 = vdwg.mxu0
      %v361 = vld [vmem:[%s1] sm:$0xff]
      %v362 = vpack.c.bf16 %v356, %v356
      %364 = vrot.lane.b32.xlu0 %v362, 96
      %v365 = vpop.permute.xlu0 %364
      %vm366 = vcmask 64512
      %v368 = vsel %vm366, %v362, 0
      %v371 = vsel %vm366, %v365, 0
      %373 = vmatprep.subr.bf16.mxu0 0
      %374 = vmatpush1.bf16.xpose.msra.mxu0 0
      %375 = vmatprep.subr.bf16.mxu0 0
      %376 = vmatpush1.bf16.xpose.msra.mxu0 0
      %377 = vmatprep.subr.bf16.mxu0 0
      %378 = vmatpush1.bf16.xpose.msra.mxu0 0
      %379 = vmatprep.subr.bf16.mxu0 0
      %380 = vmatpush1.bf16.xpose.msra.mxu0 0
      %381 = vmatprep.subr.bf16.mxu0 0
      %382 = vmatpush1.bf16.xpose.msra.mxu0 0
      %383 = vmatprep.subr.bf16.mxu0 0
      %384 = vmatpush1.bf16.xpose.msra.mxu0 0
      %385 = vmatprep.subr.bf16.mxu0 0
      %386 = vmatpush1.bf16.xpose.msra.mxu0 0
      %387 = vmatprep.subr.bf16.mxu0 0
      %388 = vmatpush1.bf16.xpose.msra.mxu0 %v371
      %389 = vmatprep.subr.bf16.mxu0 0
      %390 = vmatpush2.bf16.xpose.msra.mxu0 0
      %391 = vmatprep.subr.bf16.mxu0 0
      %392 = vmatpush2.bf16.xpose.msra.mxu0 0
      %393 = vmatprep.subr.bf16.mxu0 0
      %394 = vmatpush2.bf16.xpose.msra.mxu0 0
      %395 = vmatprep.subr.bf16.mxu0 0
      %396 = vmatpush2.bf16.xpose.msra.mxu0 0
      %397 = vmatprep.subr.bf16.mxu0 0
      %398 = vmatpush2.bf16.xpose.msra.mxu0 0
      %399 = vmatprep.subr.bf16.mxu0 0
      %400 = vmatpush2.bf16.xpose.msra.mxu0 0
      %401 = vmatprep.subr.bf16.mxu0 0
      %402 = vmatpush2.bf16.xpose.msra.mxu0 0
      %403 = vmatprep.subr.bf16.mxu0 0
      %404 = vmatpush2.bf16.xpose.msra.mxu0 0
      %405 = vmatprep.mubr.bf16.mxu0 0
      %406 = vmatmul.mubr.bf16.gmra.mxu0 %v368
      %v407 = vpop.f32.mrf.mxu0
      %v408 = vadd.f32 0.0, %v407
      %v409 = vpop.f32.mrf.mxu0
      %v410 = vpop.f32.mrf.mxu0
      %v411 = vpop.f32.mrf.mxu0
      %412 = vdwg.mxu0
      %v413 = vmul.f32 %v408, 0.35355338
      %vm414 = vcmp.gt.f32.partialorder %v361, 0.0
      %v415 = vsel %vm414, %v413, -1e+30
      %v416 = vsel %vm366, %v415, -inf
      %417 = vmax.xlane.f32.xlu0 %v416
      %v418 = vpop.xlane.xlu0 %417
      %v419 = vsub.f32 %v415, %v418
      %v420 = vmul.f32 %v419, 1.442695
      %v421 = vpow.pop %v420
      %v422 = vsel %vm366, %v421, 0.0
      %423 = vadd.xlane.f32.xlu0 %v422
      %v424 = vpop.xlane.xlu0 %423
      %v425 = vrcp.pop %v424
      %v426 = vmul.f32 %v421, %v425
      %v427 = vpack.c.bf16 %v426, %v426
      %428 = vrot.lane.b32.xlu0 %v362, 64
      %v429 = vpop.permute.xlu0 %428
      %v431 = vsel %vm366, %v427, 0
      %vm433 = vcmask 1043456
      %v435 = vsel %vm433, %v429, 0
      %437 = vmatprep.subr.bf16.mxu0 0
      %438 = vmatpush1.bf16.msra.mxu0 0
      %439 = vmatprep.subr.bf16.mxu0 0
      %440 = vmatpush1.bf16.msra.mxu0 0
      %441 = vmatprep.subr.bf16.mxu0 0
      %442 = vmatpush1.bf16.msra.mxu0 0
      %443 = vmatprep.subr.bf16.mxu0 0
      %444 = vmatpush1.bf16.msra.mxu0 0
      %445 = vmatprep.subr.bf16.mxu0 0
      %446 = vmatpush1.bf16.msra.mxu0 0
      %447 = vmatprep.subr.bf16.mxu0 0
      %448 = vmatpush1.bf16.msra.mxu0 0
      %449 = vmatprep.subr.bf16.mxu0 0
      %450 = vmatpush1.bf16.msra.mxu0 0
      %451 = vmatprep.subr.bf16.mxu0 0
      %452 = vmatpush1.bf16.msra.mxu0 %v435
      %453 = vmatprep.subr.bf16.mxu0 0
      %454 = vmatpush2.bf16.msra.mxu0 0
      %455 = vmatprep.subr.bf16.mxu0 0
      %456 = vmatpush2.bf16.msra.mxu0 0
      %457 = vmatprep.subr.bf16.mxu0 0
      %458 = vmatpush2.bf16.msra.mxu0 0
      %459 = vmatprep.subr.bf16.mxu0 0
      %460 = vmatpush2.bf16.msra.mxu0 0
      %461 = vmatprep.subr.bf16.mxu0 0
      %462 = vmatpush2.bf16.msra.mxu0 0
      %463 = vmatprep.subr.bf16.mxu0 0
      %464 = vmatpush2.bf16.msra.mxu0 0
      %465 = vmatprep.subr.bf16.mxu0 0
      %466 = vmatpush2.bf16.msra.mxu0 0
      %467 = vmatprep.subr.bf16.mxu0 0
      %468 = vmatpush2.bf16.msra.mxu0 0
      %469 = vmatprep.mubr.bf16.mxu0 0
      %470 = vmatmul.mubr.bf16.gmra.mxu0 %v431
      %v471 = vpop.f32.mrf.mxu0
      %v472 = vadd.f32 0.0, %v471
      %v473 = vpop.f32.mrf.mxu0
      %v474 = vpop.f32.mrf.mxu0
      %v475 = vpop.f32.mrf.mxu0
      %476 = vdwg.mxu0
      %477 = vrot.lane.b32.xlu0 %v362, 120
      %v478 = vpop.permute.xlu0 %477
      %479 = vrot.lane.b32.xlu0 %v362, 88
      %v480 = vpop.permute.xlu0 %479
      %v482 = vsel %vm366, %v478, 0
      %v485 = vsel %vm366, %v480, 0
      %487 = vmatprep.subr.bf16.mxu0 0
      %488 = vmatpush1.bf16.xpose.msra.mxu0 0
      %489 = vmatprep.subr.bf16.mxu0 0
      %490 = vmatpush1.bf16.xpose.msra.mxu0 0
      %491 = vmatprep.subr.bf16.mxu0 0
      %492 = vmatpush1.bf16.xpose.msra.mxu0 0
      %493 = vmatprep.subr.bf16.mxu0 0
      %494 = vmatpush1.bf16.xpose.msra.mxu0 0
      %495 = vmatprep.subr.bf16.mxu0 0
      %496 = vmatpush1.bf16.xpose.msra.mxu0 0
      %497 = vmatprep.subr.bf16.mxu0 0
      %498 = vmatpush1.bf16.xpose.msra.mxu0 0
      %499 = vmatprep.subr.bf16.mxu0 0
      %500 = vmatpush1.bf16.xpose.msra.mxu0 0
      %501 = vmatprep.subr.bf16.mxu0 0
      %502 = vmatpush1.bf16.xpose.msra.mxu0 %v485
      %503 = vmatprep.subr.bf16.mxu0 0
      %504 = vmatpush2.bf16.xpose.msra.mxu0 0
      %505 = vmatprep.subr.bf16.mxu0 0
      %506 = vmatpush2.bf16.xpose.msra.mxu0 0
      %507 = vmatprep.subr.bf16.mxu0 0
      %508 = vmatpush2.bf16.xpose.msra.mxu0 0
      %509 = vmatprep.subr.bf16.mxu0 0
      %510 = vmatpush2.bf16.xpose.msra.mxu0 0
      %511 = vmatprep.subr.bf16.mxu0 0
      %512 = vmatpush2.bf16.xpose.msra.mxu0 0
      %513 = vmatprep.subr.bf16.mxu0 0
      %514 = vmatpush2.bf16.xpose.msra.mxu0 0
      %515 = vmatprep.subr.bf16.mxu0 0
      %516 = vmatpush2.bf16.xpose.msra.mxu0 0
      %517 = vmatprep.subr.bf16.mxu0 0
      %518 = vmatpush2.bf16.xpose.msra.mxu0 0
      %519 = vmatprep.mubr.bf16.mxu0 0
      %520 = vmatmul.mubr.bf16.gmra.mxu0 %v482
      %v521 = vpop.f32.mrf.mxu0
      %v522 = vadd.f32 0.0, %v521
      %v523 = vpop.f32.mrf.mxu0
      %v524 = vpop.f32.mrf.mxu0
      %v525 = vpop.f32.mrf.mxu0
      %526 = vdwg.mxu0
      %v527 = vmul.f32 %v522, 0.35355338
      %v528 = vsel %vm414, %v527, -1e+30
      %v529 = vsel %vm366, %v528, -inf
      %530 = vmax.xlane.f32.xlu0 %v529
      %v531 = vpop.xlane.xlu0 %530
      %v532 = vsub.f32 %v528, %v531
      %v533 = vmul.f32 %v532, 1.442695
      %v534 = vpow.pop %v533
      %v535 = vsel %vm366, %v534, 0.0
      %536 = vadd.xlane.f32.xlu0 %v535
      %v537 = vpop.xlane.xlu0 %536
      %v538 = vrcp.pop %v537
      %v539 = vmul.f32 %v534, %v538
      %v540 = vpack.c.bf16 %v539, %v539
      %541 = vrot.lane.b32.xlu0 %v362, 56
      %v542 = vpop.permute.xlu0 %541
      %v544 = vsel %vm366, %v540, 0
      %v547 = vsel %vm433, %v542, 0
      %549 = vmatprep.subr.bf16.mxu0 0
      %550 = vmatpush1.bf16.msra.mxu0 0
      %551 = vmatprep.subr.bf16.mxu0 0
      %552 = vmatpush1.bf16.msra.mxu0 0
      %553 = vmatprep.subr.bf16.mxu0 0
      %554 = vmatpush1.bf16.msra.mxu0 0
      %555 = vmatprep.subr.bf16.mxu0 0
      %556 = vmatpush1.bf16.msra.mxu0 0
      %557 = vmatprep.subr.bf16.mxu0 0
      %558 = vmatpush1.bf16.msra.mxu0 0
      %559 = vmatprep.subr.bf16.mxu0 0
      %560 = vmatpush1.bf16.msra.mxu0 0
      %561 = vmatprep.subr.bf16.mxu0 0
      %562 = vmatpush1.bf16.msra.mxu0 0
      %563 = vmatprep.subr.bf16.mxu0 0
      %564 = vmatpush1.bf16.msra.mxu0 %v547
      %565 = vmatprep.subr.bf16.mxu0 0
      %566 = vmatpush2.bf16.msra.mxu0 0
      %567 = vmatprep.subr.bf16.mxu0 0
      %568 = vmatpush2.bf16.msra.mxu0 0
      %569 = vmatprep.subr.bf16.mxu0 0
      %570 = vmatpush2.bf16.msra.mxu0 0
      %571 = vmatprep.subr.bf16.mxu0 0
      %572 = vmatpush2.bf16.msra.mxu0 0
      %573 = vmatprep.subr.bf16.mxu0 0
      %574 = vmatpush2.bf16.msra.mxu0 0
      %575 = vmatprep.subr.bf16.mxu0 0
      %576 = vmatpush2.bf16.msra.mxu0 0
      %577 = vmatprep.subr.bf16.mxu0 0
      %578 = vmatpush2.bf16.msra.mxu0 0
      %579 = vmatprep.subr.bf16.mxu0 0
      %580 = vmatpush2.bf16.msra.mxu0 0
      %581 = vmatprep.mubr.bf16.mxu0 0
      %582 = vmatmul.mubr.bf16.gmra.mxu0 %v544
      %v583 = vpop.f32.mrf.mxu0
      %v584 = vadd.f32 0.0, %v583
      %v585 = vpop.f32.mrf.mxu0
      %v586 = vpop.f32.mrf.mxu0
      %v587 = vpop.f32.mrf.mxu0
      %588 = vdwg.mxu0
      %589 = vrot.lane.b32.xlu0 %v362, 112
      %v590 = vpop.permute.xlu0 %589
      %591 = vrot.lane.b32.xlu0 %v362, 80
      %v592 = vpop.permute.xlu0 %591
      %v594 = vsel %vm366, %v590, 0
      %v597 = vsel %vm366, %v592, 0
      %599 = vmatprep.subr.bf16.mxu0 0
      %600 = vmatpush1.bf16.xpose.msra.mxu0 0
      %601 = vmatprep.subr.bf16.mxu0 0
      %602 = vmatpush1.bf16.xpose.msra.mxu0 0
      %603 = vmatprep.subr.bf16.mxu0 0
      %604 = vmatpush1.bf16.xpose.msra.mxu0 0
      %605 = vmatprep.subr.bf16.mxu0 0
      %606 = vmatpush1.bf16.xpose.msra.mxu0 0
      %607 = vmatprep.subr.bf16.mxu0 0
      %608 = vmatpush1.bf16.xpose.msra.mxu0 0
      %609 = vmatprep.subr.bf16.mxu0 0
      %610 = vmatpush1.bf16.xpose.msra.mxu0 0
      %611 = vmatprep.subr.bf16.mxu0 0
      %612 = vmatpush1.bf16.xpose.msra.mxu0 0
      %613 = vmatprep.subr.bf16.mxu0 0
      %614 = vmatpush1.bf16.xpose.msra.mxu0 %v597
      %615 = vmatprep.subr.bf16.mxu0 0
      %616 = vmatpush2.bf16.xpose.msra.mxu0 0
      %617 = vmatprep.subr.bf16.mxu0 0
      %618 = vmatpush2.bf16.xpose.msra.mxu0 0
      %619 = vmatprep.subr.bf16.mxu0 0
      %620 = vmatpush2.bf16.xpose.msra.mxu0 0
      %621 = vmatprep.subr.bf16.mxu0 0
      %622 = vmatpush2.bf16.xpose.msra.mxu0 0
      %623 = vmatprep.subr.bf16.mxu0 0
      %624 = vmatpush2.bf16.xpose.msra.mxu0 0
      %625 = vmatprep.subr.bf16.mxu0 0
      %626 = vmatpush2.bf16.xpose.msra.mxu0 0
      %627 = vmatprep.subr.bf16.mxu0 0
      %628 = vmatpush2.bf16.xpose.msra.mxu0 0
      %629 = vmatprep.subr.bf16.mxu0 0
      %630 = vmatpush2.bf16.xpose.msra.mxu0 0
      %631 = vmatprep.mubr.bf16.mxu0 0
      %632 = vmatmul.mubr.bf16.gmra.mxu0 %v594
      %v633 = vpop.f32.mrf.mxu0
      %v634 = vadd.f32 0.0, %v633
      %v635 = vpop.f32.mrf.mxu0
      %v636 = vpop.f32.mrf.mxu0
      %v637 = vpop.f32.mrf.mxu0
      %638 = vdwg.mxu0
      %v639 = vmul.f32 %v634, 0.35355338
      %v640 = vsel %vm414, %v639, -1e+30
      %v641 = vsel %vm366, %v640, -inf
      %642 = vmax.xlane.f32.xlu0 %v641
      %v643 = vpop.xlane.xlu0 %642
      %v644 = vsub.f32 %v640, %v643
      %v645 = vmul.f32 %v644, 1.442695
      %v646 = vpow.pop %v645
      %v647 = vsel %vm366, %v646, 0.0
      %648 = vadd.xlane.f32.xlu0 %v647
      %v649 = vpop.xlane.xlu0 %648
      %v650 = vrcp.pop %v649
      %v651 = vmul.f32 %v646, %v650
      %v652 = vpack.c.bf16 %v651, %v651
      %653 = vrot.lane.b32.xlu0 %v362, 48
      %v654 = vpop.permute.xlu0 %653
      %v656 = vsel %vm366, %v652, 0
      %v659 = vsel %vm433, %v654, 0
      %661 = vmatprep.subr.bf16.mxu0 0
      %662 = vmatpush1.bf16.msra.mxu0 0
      %663 = vmatprep.subr.bf16.mxu0 0
      %664 = vmatpush1.bf16.msra.mxu0 0
      %665 = vmatprep.subr.bf16.mxu0 0
      %666 = vmatpush1.bf16.msra.mxu0 0
      %667 = vmatprep.subr.bf16.mxu0 0
      %668 = vmatpush1.bf16.msra.mxu0 0
      %669 = vmatprep.subr.bf16.mxu0 0
      %670 = vmatpush1.bf16.msra.mxu0 0
      %671 = vmatprep.subr.bf16.mxu0 0
      %672 = vmatpush1.bf16.msra.mxu0 0
      %673 = vmatprep.subr.bf16.mxu0 0
      %674 = vmatpush1.bf16.msra.mxu0 0
      %675 = vmatprep.subr.bf16.mxu0 0
      %676 = vmatpush1.bf16.msra.mxu0 %v659
      %677 = vmatprep.subr.bf16.mxu0 0
      %678 = vmatpush2.bf16.msra.mxu0 0
      %679 = vmatprep.subr.bf16.mxu0 0
      %680 = vmatpush2.bf16.msra.mxu0 0
      %681 = vmatprep.subr.bf16.mxu0 0
      %682 = vmatpush2.bf16.msra.mxu0 0
      %683 = vmatprep.subr.bf16.mxu0 0
      %684 = vmatpush2.bf16.msra.mxu0 0
      %685 = vmatprep.subr.bf16.mxu0 0
      %686 = vmatpush2.bf16.msra.mxu0 0
      %687 = vmatprep.subr.bf16.mxu0 0
      %688 = vmatpush2.bf16.msra.mxu0 0
      %689 = vmatprep.subr.bf16.mxu0 0
      %690 = vmatpush2.bf16.msra.mxu0 0
      %691 = vmatprep.subr.bf16.mxu0 0
      %692 = vmatpush2.bf16.msra.mxu0 0
      %693 = vmatprep.mubr.bf16.mxu0 0
      %694 = vmatmul.mubr.bf16.gmra.mxu0 %v656
      %v695 = vpop.f32.mrf.mxu0
      %v696 = vadd.f32 0.0, %v695
      %v697 = vpop.f32.mrf.mxu0
      %v698 = vpop.f32.mrf.mxu0
      %v699 = vpop.f32.mrf.mxu0
      %700 = vdwg.mxu0
      %701 = vrot.lane.b32.xlu0 %v362, 104
      %v702 = vpop.permute.xlu0 %701
      %703 = vrot.lane.b32.xlu0 %v362, 72
      %v704 = vpop.permute.xlu0 %703
      %v706 = vsel %vm366, %v702, 0
      %v709 = vsel %vm366, %v704, 0
      %711 = vmatprep.subr.bf16.mxu0 0
      %712 = vmatpush1.bf16.xpose.msra.mxu0 0
      %713 = vmatprep.subr.bf16.mxu0 0
      %714 = vmatpush1.bf16.xpose.msra.mxu0 0
      %715 = vmatprep.subr.bf16.mxu0 0
      %716 = vmatpush1.bf16.xpose.msra.mxu0 0
      %717 = vmatprep.subr.bf16.mxu0 0
      %718 = vmatpush1.bf16.xpose.msra.mxu0 0
      %719 = vmatprep.subr.bf16.mxu0 0
      %720 = vmatpush1.bf16.xpose.msra.mxu0 0
      %721 = vmatprep.subr.bf16.mxu0 0
      %722 = vmatpush1.bf16.xpose.msra.mxu0 0
      %723 = vmatprep.subr.bf16.mxu0 0
      %724 = vmatpush1.bf16.xpose.msra.mxu0 0
      %725 = vmatprep.subr.bf16.mxu0 0
      %726 = vmatpush1.bf16.xpose.msra.mxu0 %v709
      %727 = vmatprep.subr.bf16.mxu0 0
      %728 = vmatpush2.bf16.xpose.msra.mxu0 0
      %729 = vmatprep.subr.bf16.mxu0 0
      %730 = vmatpush2.bf16.xpose.msra.mxu0 0
      %731 = vmatprep.subr.bf16.mxu0 0
      %732 = vmatpush2.bf16.xpose.msra.mxu0 0
      %733 = vmatprep.subr.bf16.mxu0 0
      %734 = vmatpush2.bf16.xpose.msra.mxu0 0
      %735 = vmatprep.subr.bf16.mxu0 0
      %736 = vmatpush2.bf16.xpose.msra.mxu0 0
      %737 = vmatprep.subr.bf16.mxu0 0
      %738 = vmatpush2.bf16.xpose.msra.mxu0 0
      %739 = vmatprep.subr.bf16.mxu0 0
      %740 = vmatpush2.bf16.xpose.msra.mxu0 0
      %741 = vmatprep.subr.bf16.mxu0 0
      %742 = vmatpush2.bf16.xpose.msra.mxu0 0
      %743 = vmatprep.mubr.bf16.mxu0 0
      %744 = vmatmul.mubr.bf16.gmra.mxu0 %v706
      %v745 = vpop.f32.mrf.mxu0
      %v746 = vadd.f32 0.0, %v745
      %v747 = vpop.f32.mrf.mxu0
      %v748 = vpop.f32.mrf.mxu0
      %v749 = vpop.f32.mrf.mxu0
      %750 = vdwg.mxu0
      %v751 = vmul.f32 %v746, 0.35355338
      %v752 = vsel %vm414, %v751, -1e+30
      %v753 = vsel %vm366, %v752, -inf
      %754 = vmax.xlane.f32.xlu0 %v753
      %v755 = vpop.xlane.xlu0 %754
      %v756 = vsub.f32 %v752, %v755
      %v757 = vmul.f32 %v756, 1.442695
      %v758 = vpow.pop %v757
      %v759 = vsel %vm366, %v758, 0.0
      %760 = vadd.xlane.f32.xlu0 %v759
      %v761 = vpop.xlane.xlu0 %760
      %v762 = vrcp.pop %v761
      %v763 = vmul.f32 %v758, %v762
      %v764 = vpack.c.bf16 %v763, %v763
      %765 = vrot.lane.b32.xlu0 %v362, 40
      %v766 = vpop.permute.xlu0 %765
      %v768 = vsel %vm366, %v764, 0
      %v771 = vsel %vm433, %v766, 0
      %773 = vmatprep.subr.bf16.mxu0 0
      %774 = vmatpush1.bf16.msra.mxu0 0
      %775 = vmatprep.subr.bf16.mxu0 0
      %776 = vmatpush1.bf16.msra.mxu0 0
      %777 = vmatprep.subr.bf16.mxu0 0
      %778 = vmatpush1.bf16.msra.mxu0 0
      %779 = vmatprep.subr.bf16.mxu0 0
      %780 = vmatpush1.bf16.msra.mxu0 0
      %781 = vmatprep.subr.bf16.mxu0 0
      %782 = vmatpush1.bf16.msra.mxu0 0
      %783 = vmatprep.subr.bf16.mxu0 0
      %784 = vmatpush1.bf16.msra.mxu0 0
      %785 = vmatprep.subr.bf16.mxu0 0
      %786 = vmatpush1.bf16.msra.mxu0 0
      %787 = vmatprep.subr.bf16.mxu0 0
      %788 = vmatpush1.bf16.msra.mxu0 %v771
      %789 = vmatprep.subr.bf16.mxu0 0
      %790 = vmatpush2.bf16.msra.mxu0 0
      %791 = vmatprep.subr.bf16.mxu0 0
      %792 = vmatpush2.bf16.msra.mxu0 0
      %793 = vmatprep.subr.bf16.mxu0 0
      %794 = vmatpush2.bf16.msra.mxu0 0
      %795 = vmatprep.subr.bf16.mxu0 0
      %796 = vmatpush2.bf16.msra.mxu0 0
      %797 = vmatprep.subr.bf16.mxu0 0
      %798 = vmatpush2.bf16.msra.mxu0 0
      %799 = vmatprep.subr.bf16.mxu0 0
      %800 = vmatpush2.bf16.msra.mxu0 0
      %801 = vmatprep.subr.bf16.mxu0 0
      %802 = vmatpush2.bf16.msra.mxu0 0
      %803 = vmatprep.subr.bf16.mxu0 0
      %804 = vmatpush2.bf16.msra.mxu0 0
      %805 = vmatprep.mubr.bf16.mxu0 0
      %806 = vmatmul.mubr.bf16.gmra.mxu0 %v768
      %v807 = vpop.f32.mrf.mxu0
      %v808 = vadd.f32 0.0, %v807
      %v809 = vpop.f32.mrf.mxu0
      %v810 = vpop.f32.mrf.mxu0
      %v811 = vpop.f32.mrf.mxu0
      %812 = vdwg.mxu0
      %814 = vrot.lane.b32.xlu0 %v584, 8
      %v815 = vpop.permute.xlu0 %814
      %818 = vrot.lane.b32.xlu0 %v696, 16
      %v819 = vpop.permute.xlu0 %818
      %822 = vrot.lane.b32.xlu0 %v808, 24
      %v823 = vpop.permute.xlu0 %822
      %v825 = vsel %vm366, %v472, %v815
      %vm826 = vcmask 130048
      %v827 = vsel %vm826, %v825, %v819
      %vm828 = vcmask 195584
      %v829 = vsel %vm828, %v827, %v823
      %v830 = vpack.c.bf16 %v829, %v829
      %v831 = vld [vmem:[%s4] sm:$0xff]
      %v832 = vld [vmem:[%s4 + $0x8] sm:$0xff]
      %v833 = vld [vmem:[%s4 + $0x10] sm:$0xff]
      %v834 = vld [vmem:[%s4 + $0x18] sm:$0xff]
      %v835 = vpack.c.bf16 %v832, %v831
      %v836 = vpack.c.bf16 %v834, %v833
      %v837 = vld [vmem:[%s5] sm:$0x1]
      %v839 = vlaneseq
      %v840 = vshrl.u32 %v839, 7
      %v841 = vsub.s32 0, %v840
      %v842 = vrot.slane %v837, %v841
      %v845 = vsel %vm317, %v830, 0
      %847 = vmatprep.subr.bf16.mxu0 0
      %848 = vmatpush1.bf16.msra.mxu0 0
      %849 = vmatprep.subr.bf16.mxu0 0
      %850 = vmatpush1.bf16.msra.mxu0 0
      %851 = vmatprep.subr.bf16.mxu0 0
      %852 = vmatpush1.bf16.msra.mxu0 0
      %853 = vmatprep.subr.bf16.mxu0 0
      %854 = vmatpush1.bf16.msra.mxu0 0
      %855 = vmatprep.subr.bf16.mxu0 0
      %856 = vmatpush1.bf16.msra.mxu0 0
      %857 = vmatprep.subr.bf16.mxu0 0
      %858 = vmatpush1.bf16.msra.mxu0 0
      %859 = vmatprep.subr.bf16.mxu0 0
      %860 = vmatpush1.bf16.msra.mxu0 %v836
      %861 = vmatprep.subr.bf16.mxu0 0
      %862 = vmatpush1.bf16.msra.mxu0 %v835
      %863 = vmatprep.subr.bf16.mxu0 0
      %864 = vmatpush2.bf16.msra.mxu0 0
      %865 = vmatprep.subr.bf16.mxu0 0
      %866 = vmatpush2.bf16.msra.mxu0 0
      %867 = vmatprep.subr.bf16.mxu0 0
      %868 = vmatpush2.bf16.msra.mxu0 0
      %869 = vmatprep.subr.bf16.mxu0 0
      %870 = vmatpush2.bf16.msra.mxu0 0
      %871 = vmatprep.subr.bf16.mxu0 0
      %872 = vmatpush2.bf16.msra.mxu0 0
      %873 = vmatprep.subr.bf16.mxu0 0
      %874 = vmatpush2.bf16.msra.mxu0 0
      %875 = vmatprep.subr.bf16.mxu0 0
      %876 = vmatpush2.bf16.msra.mxu0 0
      %877 = vmatprep.subr.bf16.mxu0 0
      %878 = vmatpush2.bf16.msra.mxu0 0
      %879 = vmatprep.mubr.bf16.mxu0 0
      %880 = vmatmul.mubr.bf16.gmra.mxu0 %v845
      %v881 = vpop.f32.mrf.mxu0
      %v882 = vadd.f32 %v842, %v881
      %v883 = vpop.f32.mrf.mxu0
      %v884 = vpop.f32.mrf.mxu0
      %v885 = vpop.f32.mrf.mxu0
      %886 = vdwg.mxu0
      %v887 = vadd.f32 %v302, %v882
      %v888 = vld [vmem:[%s6] sm:$0x1]
      %v889 = vld [vmem:[%s7] sm:$0x1]
      %v890 = vsel %vm317, %v887, 0.0
      %891 = vadd.xlane.f32.xlu0 %v890
      %v892 = vpop.xlane.xlu0 %891
      %v893 = vrcp.pop 32.0
      %v894 = vmul.f32 %v892, %v893
      %v895 = vsub.f32 %v887, %v894
      %v896 = vmul.f32 %v895, %v895
      %v897 = vsel %vm317, %v896, 0.0
      %898 = vadd.xlane.f32.xlu0 %v897
      %v899 = vpop.xlane.xlu0 %898
      %v900 = vmul.f32 %v899, %v893
      %v901 = vadd.f32 %v900, 1e-05
      %v902 = vrsqrt.pop %v901
      %v903 = vmul.f32 %v895, %v902
      %v905 = vlaneseq
      %v906 = vshrl.u32 %v905, 7
      %v907 = vsub.s32 0, %v906
      %v908 = vrot.slane %v888, %v907
      %v910 = vmul.f32 %v903, %v908
      %v912 = vlaneseq
      %v913 = vshrl.u32 %v912, 7
      %v914 = vsub.s32 0, %v913
      %v915 = vrot.slane %v889, %v914
      %v917 = vadd.f32 %v910, %v915
      %918 = vst.msk [vmem:[%s300] sm:$0xff] %vm317, %v917
      %p919 = scmp.lt.s32.totalorder %s19, 1
      %s920 = scalar_select %p919, %s19, 1
      %s921 = smul.addr %s920, 8
      %s922 = scalar_lea.vmem %s8, %s921
      // Predicated region
      $region53: #{decoder_forward.7} parent=51 // pred_check
        %p923 = pneg %p210
      $region54: #{decoder_forward.7} parent=51 // pred_check_branch
        %925 = sbr.rel (%p923) target = $region56
      $region55: #{decoder_forward.7} parent=51 // pred_region
        _
      $region56: #{decoder_forward.7} parent=51 // pred_fallthru
        _
    $region52: #{decoder_forward.7} parent=5 // pred_fallthru
      _
    %p926 = scmp.le.s32.totalorder 2, %s14
    // Predicated region
    $region57: #{decoder_forward.7} parent=5 // pred_check
      %p927 = pneg %p926
    $region58: #{decoder_forward.7} parent=5 // pred_check_branch
      %929 = sbr.rel (%p927) target = $region60
    $region59: #{decoder_forward.7} parent=5 // pred_region
      %s930 = ssub.s32 %s14, 2
      // Predicated region
      $region61: #{decoder_forward.7} parent=59 // pred_check
        %p931 = pneg %p216
      $region62: #{decoder_forward.7} parent=59 // pred_check_branch
        %933 = sbr.rel (%p931) target = $region64
      $region63: #{decoder_forward.7} parent=59 // pred_region
        %p934 = scmp.lt.s32.totalorder %s20, 1
        %s935 = scalar_select %p934, %s20, 1
        %s936 = smul.addr %s935, 8
        %s937 = scalar_lea.vmem %s8, %s936
      $region64: #{decoder_forward.7} parent=59 // pred_fallthru
        _
    $region60: #{decoder_forward.7} parent=5 // pred_fallthru
      _
  $region6: #{decoder_forward.7} parent=0 // loop_footer
    %s18 = sadd.s32 1, %s14
  $region7: #{decoder_forward.7} parent=0 // loop_footer_branch
    %13 = sbr.rel target = $region3
  $region8: #{decoder_forward.7} parent=0 // loop_exit
    _

// kernel: decoder_forward.5
$region0: #{decoder_forward.5}
  #allocation0 [shape = 'u32[]', space=smem, size = 0x4, offset = 0x4, fixed_abs, tag = 'smem constant byte address 0x4 - core index']
  #allocation1 [shape = 'u32[144,128]{1,0:T(1,128)}', space=vmem, size = 0x12000, scoped, tag = 'internal scratch']
  %s0 = inlined_call_operand.vmem [shape: f32[2,8,32], index: 0, kind: input, shape index: {}]
  %s1 = inlined_call_operand.vmem [shape: f32[8,8], index: 1, kind: input, shape index: {}]
  %s2 = inlined_call_operand.vmem [shape: f32[32,96], index: 2, kind: input, shape index: {}]
  %s3 = inlined_call_operand.hbm [shape: f32[1,96], index: 3, kind: input, shape index: {}]
  %s4 = inlined_call_operand.hbm [shape: f32[32,32], index: 4, kind: input, shape index: {}]
  %s5 = inlined_call_operand.hbm [shape: f32[1,32], index: 5, kind: input, shape index: {}]
  %s6 = inlined_call_operand.hbm [shape: f32[1,32], index: 6, kind: input, shape index: {}]
  %s7 = inlined_call_operand.hbm [shape: f32[1,32], index: 7, kind: input, shape index: {}]
  %s8 = inlined_call_operand.vmem [shape: f32[2,8,32], index: 8, kind: output, shape index: {}]
  %s9 = sld [smem:[#allocation0]]
  $region85: #{decoder_forward.5} parent=0
    _
  %s11 = ssub.s32 1, %s9
  %s12 = scalar_select 0, %s11, %s9
  $region1: #{decoder_forward.5} parent=0
    #allocation2 [shape = 'u8[512]{0}', space=vmem, size = 0x400, scoped, tag = 'input window, operand 3, single buffered']
    #allocation3 [shape = 's32[2]{0}', space=sflag, size = 0x8, scoped, tag = 'scoped memory for decoder_forward.5']
    #allocation4 [shape = 'u8[16384]{0}', space=vmem, size = 0x4000, scoped, tag = 'input window, operand 4, single buffered']
    #allocation5 [shape = 's32[1]{0}', space=sflag, size = 0x4, scoped, tag = 'scoped memory for decoder_forward.5']
    #allocation6 [shape = 'u8[512]{0}', space=vmem, size = 0x400, scoped, tag = 'input window, operand 5, single buffered']
    #allocation7 [shape = 'u8[512]{0}', space=vmem, size = 0x400, scoped, tag = 'input window, operand 6, single buffered']
    #allocation8 [shape = 's32[1]{0}', space=sflag, size = 0x4, scoped, tag = 'scoped memory for decoder_forward.5']
    #allocation9 [shape = 'u8[512]{0}', space=vmem, size = 0x400, scoped, tag = 'input window, operand 7, single buffered']
    %13 = vsyncpa [#allocation3], 0
    %14 = vsyncpa [#allocation5], 0
    %15 = vsyncpa [#allocation8], 0
    loop: start=0, step=1, limit=4
    $region2: #{decoder_forward.5} parent=1 // loop_pre_header
      _
    $region3: #{decoder_forward.5} parent=1 // loop_header
      %s17 = sphi 0, %s21
      %p18 = scmp.ge.s32.totalorder %s17, 4
      %s27 = sphi 0, %s29
      %s30 = sphi 0, %s27
      %s31 = sphi 0, %s30
      %s47 = sphi 0, %s31
      %s51 = sphi 0, %s51
      %s53 = sphi 0, %s51
      %s54 = sphi 0, %s53
      %s68 = sphi 0, %s54
      %s72 = sphi 0, %s72
      %s74 = sphi 0, %s72
      %s75 = sphi 0, %s74
      %s89 = sphi 0, %s75
      %s93 = sphi 0, %s93
      %s95 = sphi 0, %s93
      %s96 = sphi 0, %s95
      %s110 = sphi 0, %s96
      %s114 = sphi 0, %s114
      %s116 = sphi 0, %s114
      %s117 = sphi 0, %s116
      %s131 = sphi 0, %s117
      %s135 = sphi 0, %s135
      %s137 = sphi 0, %s135
      %s138 = sphi 0, %s137
      %s152 = sphi 0, %s138
      %s156 = sphi 0, %s156
      %s158 = sphi 0, %s156
      %s159 = sphi 0, %s158
      %s173 = sphi 0, %s159
      %s177 = sphi 0, %s177
      %s179 = sphi 0, %s177
      %s180 = sphi 0, %s179
      %s194 = sphi 0, %s180
      %s200 = sphi 0, %s202
      %s203 = sphi 0, %s200
      %s204 = sphi 0, %s203
      %s220 = sphi 0, %s204
    $region4: #{decoder_forward.5} parent=1 // loop_header_branch
      %20 = sbr.rel (%p18) target = $region8
    $region5: #{decoder_forward.5} parent=1 // loop_body
      %s22 = ssub.s32 %s17, 1
      %s23 = ssub.s32 %s17, 2
      %s24 = sadd.s32 %s17, 1
      %s25 = ssub.s32 %s17, %s24
      %p26 = scmp.eq.s32.totalorder %s25, 0
      %s28 = sadd.s32 %s27, 1
      %s29 = scalar_select %p26, %s27, %s28
      %p32 = pneg %p26
      %p33 = scmp.eq.s32.totalorder %s17, 1
      %p34 = por %p32, %p33
      %p35 = scmp.ne.s32.totalorder %s27, %s30
      %p36 = scmp.eq.s32.totalorder %s17, 0
      %p37 = por %p35, %p36
      %p38 = scmp.ne.s32.totalorder %s27, %s30
      %p39 = scmp.eq.s32.totalorder %s22, 1
      %p40 = por %p38, %p39
      %p41 = scmp.ne.s32.totalorder %s30, %s31
      %p42 = scmp.eq.s32.totalorder %s22, 0
      %p43 = por %p41, %p42
      %p44 = scmp.ne.s32.totalorder %s30, %s31
      %p45 = scmp.eq.s32.totalorder %s23, 1
      %p46 = por %p44, %p45
      %p48 = scmp.ne.s32.totalorder %s31, %s47
      %p49 = scmp.eq.s32.totalorder %s23, 0
      %p50 = por %p48, %p49
      %s52 = sadd.s32 %s51, 1
      %p55 = scmp.eq.s32.totalorder %s17, 1
      %p56 = scmp.ne.s32.totalorder %s51, %s53
      %p57 = scmp.eq.s32.totalorder %s17, 0
      %p58 = por %p56, %p57
      %p59 = scmp.ne.s32.totalorder %s51, %s53
      %p60 = scmp.eq.s32.totalorder %s22, 1
      %p61 = por %p59, %p60
      %p62 = scmp.ne.s32.totalorder %s53, %s54
      %p63 = scmp.eq.s32.totalorder %s22, 0
      %p64 = por %p62, %p63
      %p65 = scmp.ne.s32.totalorder %s53, %s54
      %p66 = scmp.eq.s32.totalorder %s23, 1
      %p67 = por %p65, %p66
      %p69 = scmp.ne.s32.totalorder %s54, %s68
      %p70 = scmp.eq.s32.totalorder %s23, 0
      %p71 = por %p69, %p70
      %s73 = sadd.s32 %s72, 1
      %p76 = scmp.eq.s32.totalorder %s17, 1
      %p77 = scmp.ne.s32.totalorder %s72, %s74
      %p78 = scmp.eq.s32.totalorder %s17, 0
      %p79 = por %p77, %p78
      %p80 = scmp.ne.s32.totalorder %s72, %s74
      %p81 = scmp.eq.s32.totalorder %s22, 1
      %p82 = por %p80, %p81
      %p83 = scmp.ne.s32.totalorder %s74, %s75
      %p84 = scmp.eq.s32.totalorder %s22, 0
      %p85 = por %p83, %p84
      %p86 = scmp.ne.s32.totalorder %s74, %s75
      %p87 = scmp.eq.s32.totalorder %s23, 1
      %p88 = por %p86, %p87
      %p90 = scmp.ne.s32.totalorder %s75, %s89
      %p91 = scmp.eq.s32.totalorder %s23, 0
      %p92 = por %p90, %p91
      %s94 = sadd.s32 %s93, 1
      %p97 = scmp.eq.s32.totalorder %s17, 1
      %p98 = scmp.ne.s32.totalorder %s93, %s95
      %p99 = scmp.eq.s32.totalorder %s17, 0
      %p100 = por %p98, %p99
      %p101 = scmp.ne.s32.totalorder %s93, %s95
      %p102 = scmp.eq.s32.totalorder %s22, 1
      %p103 = por %p101, %p102
      %p104 = scmp.ne.s32.totalorder %s95, %s96
      %p105 = scmp.eq.s32.totalorder %s22, 0
      %p106 = por %p104, %p105
      %p107 = scmp.ne.s32.totalorder %s95, %s96
      %p108 = scmp.eq.s32.totalorder %s23, 1
      %p109 = por %p107, %p108
      %p111 = scmp.ne.s32.totalorder %s96, %s110
      %p112 = scmp.eq.s32.totalorder %s23, 0
      %p113 = por %p111, %p112
      %s115 = sadd.s32 %s114, 1
      %p118 = scmp.eq.s32.totalorder %s17, 1
      %p119 = scmp.ne.s32.totalorder %s114, %s116
      %p120 = scmp.eq.s32.totalorder %s17, 0
      %p121 = por %p119, %p120
      %p122 = scmp.ne.s32.totalorder %s114, %s116
      %p123 = scmp.eq.s32.totalorder %s22, 1
      %p124 = por %p122, %p123
      %p125 = scmp.ne.s32.totalorder %s116, %s117
      %p126 = scmp.eq.s32.totalorder %s22, 0
      %p127 = por %p125, %p126
      %p128 = scmp.ne.s32.totalorder %s116, %s117
      %p129 = scmp.eq.s32.totalorder %s23, 1
      %p130 = por %p128, %p129
      %p132 = scmp.ne.s32.totalorder %s117, %s131
      %p133 = scmp.eq.s32.totalorder %s23, 0
      %p134 = por %p132, %p133
      %s136 = sadd.s32 %s135, 1
      %p139 = scmp.eq.s32.totalorder %s17, 1
      %p140 = scmp.ne.s32.totalorder %s135, %s137
      %p141 = scmp.eq.s32.totalorder %s17, 0
      %p142 = por %p140, %p141
      %p143 = scmp.ne.s32.totalorder %s135, %s137
      %p144 = scmp.eq.s32.totalorder %s22, 1
      %p145 = por %p143, %p144
      %p146 = scmp.ne.s32.totalorder %s137, %s138
      %p147 = scmp.eq.s32.totalorder %s22, 0
      %p148 = por %p146, %p147
      %p149 = scmp.ne.s32.totalorder %s137, %s138
      %p150 = scmp.eq.s32.totalorder %s23, 1
      %p151 = por %p149, %p150
      %p153 = scmp.ne.s32.totalorder %s138, %s152
      %p154 = scmp.eq.s32.totalorder %s23, 0
      %p155 = por %p153, %p154
      %s157 = sadd.s32 %s156, 1
      %p160 = scmp.eq.s32.totalorder %s17, 1
      %p161 = scmp.ne.s32.totalorder %s156, %s158
      %p162 = scmp.eq.s32.totalorder %s17, 0
      %p163 = por %p161, %p162
      %p164 = scmp.ne.s32.totalorder %s156, %s158
      %p165 = scmp.eq.s32.totalorder %s22, 1
      %p166 = por %p164, %p165
      %p167 = scmp.ne.s32.totalorder %s158, %s159
      %p168 = scmp.eq.s32.totalorder %s22, 0
      %p169 = por %p167, %p168
      %p170 = scmp.ne.s32.totalorder %s158, %s159
      %p171 = scmp.eq.s32.totalorder %s23, 1
      %p172 = por %p170, %p171
      %p174 = scmp.ne.s32.totalorder %s159, %s173
      %p175 = scmp.eq.s32.totalorder %s23, 0
      %p176 = por %p174, %p175
      %s178 = sadd.s32 %s177, 1
      %p181 = scmp.eq.s32.totalorder %s17, 1
      %p182 = scmp.ne.s32.totalorder %s177, %s179
      %p183 = scmp.eq.s32.totalorder %s17, 0
      %p184 = por %p182, %p183
      %p185 = scmp.ne.s32.totalorder %s177, %s179
      %p186 = scmp.eq.s32.totalorder %s22, 1
      %p187 = por %p185, %p186
      %p188 = scmp.ne.s32.totalorder %s179, %s180
      %p189 = scmp.eq.s32.totalorder %s22, 0
      %p190 = por %p188, %p189
      %p191 = scmp.ne.s32.totalorder %s179, %s180
      %p192 = scmp.eq.s32.totalorder %s23, 1
      %p193 = por %p191, %p192
      %p195 = scmp.ne.s32.totalorder %s180, %s194
      %p196 = scmp.eq.s32.totalorder %s23, 0
      %p197 = por %p195, %p196
      %s198 = ssub.s32 %s17, %s24
      %p199 = scmp.eq.s32.totalorder %s198, 0
      %s201 = sadd.s32 %s200, 1
      %s202 = scalar_select %p199, %s200, %s201
      %p205 = pneg %p199
      %p206 = scmp.eq.s32.totalorder %s17, 1
      %p207 = por %p205, %p206
      %p208 = scmp.ne.s32.totalorder %s200, %s203
      %p209 = scmp.eq.s32.totalorder %s17, 0
      %p210 = por %p208, %p209
      %p211 = scmp.ne.s32.totalorder %s200, %s203
      %p212 = scmp.eq.s32.totalorder %s22, 1
      %p213 = por %p211, %p212
      %p214 = scmp.ne.s32.totalorder %s203, %s204
      %p215 = scmp.eq.s32.totalorder %s22, 0
      %p216 = por %p214, %p215
      %p217 = scmp.ne.s32.totalorder %s203, %s204
      %p218 = scmp.eq.s32.totalorder %s23, 1
      %p219 = por %p217, %p218
      %p221 = scmp.ne.s32.totalorder %s204, %s220
      %p222 = scmp.eq.s32.totalorder %s23, 0
      %p223 = por %p221, %p222
      %p224 = scmp.le.s32.totalorder 1, %s17
      %p225 = scmp.lt.s32.totalorder %s17, 3
      %p226 = pnand %p224, %p225
      %p227 = pneg %p226
      // Predicated region
      $region9: #{decoder_forward.5} parent=5 // pred_check
        _
      $region10: #{decoder_forward.5} parent=5 // pred_check_branch
        %229 = sbr.rel (%p226) target = $region12
      $region11: #{decoder_forward.5} parent=5 // pred_region
        %s230 = ssub.s32 %s17, 1
        // Predicated region
        $region13: #{decoder_forward.5} parent=11 // pred_check
          %p231 = pneg %p64
        $region14: #{decoder_forward.5} parent=11 // pred_check_branch
          %233 = sbr.rel (%p231) target = $region16
        $region15: #{decoder_forward.5} parent=11 // pred_region
          _
        $region16: #{decoder_forward.5} parent=11 // pred_fallthru
          _
        // Predicated region
        $region17: #{decoder_forward.5} parent=11 // pred_check
          %p234 = pneg %p85
        $region18: #{decoder_forward.5} parent=11 // pred_check_branch
          %236 = sbr.rel (%p234) target = $region20
        $region19: #{decoder_forward.5} parent=11 // pred_region
          _
        $region20: #{decoder_forward.5} parent=11 // pred_fallthru
          _
        // Predicated region
        $region21: #{decoder_forward.5} parent=11 // pred_check
          %p237 = pneg %p106
        $region22: #{decoder_forward.5} parent=11 // pred_check_branch
          %239 = sbr.rel (%p237) target = $region24
        $region23: #{decoder_forward.5} parent=11 // pred_region
          %s241 = ssub.s32 16, 16
          %242 = vsyncadd [#allocation3], %s241
          %s244 = sshll.u32 [#allocation2], 4
          %s245 = int_to_ptr.vmem [resolvable:$true] %s244
          %247 = dma.hbm_to_vmem [thread:$0]  %s3, 16, %s245, [#allocation3]
        $region24: #{decoder_forward.5} parent=11 // pred_fallthru
          _
        // Predicated region
        $region25: #{decoder_forward.5} parent=11 // pred_check
          %p248 = pneg %p127
        $region26: #{decoder_forward.5} parent=11 // pred_check_branch
          %250 = sbr.rel (%p248) target = $region28
        $region27: #{decoder_forward.5} parent=11 // pred_region
          %s252 = ssub.s32 512, 512
          %253 = vsyncadd [#allocation5], %s252
          %s254 = sshll.u32 [#allocation4], 4
          %s255 = int_to_ptr.vmem [resolvable:$true] %s254
          %260 = dma.hbm_to_vmem [thread:$0]  %s4, 512, %s255, [#allocation5], 128, 128, 8
        $region28: #{decoder_forward.5} parent=11 // pred_fallthru
          _
        // Predicated region
        $region29: #{decoder_forward.5} parent=11 // pred_check
          %p261 = pneg %p148
        $region30: #{decoder_forward.5} parent=11 // pred_check_branch
          %263 = sbr.rel (%p261) target = $region32
        $region31: #{decoder_forward.5} parent=11 // pred_region
          %s265 = ssub.s32 16, 16
          %266 = vsyncadd [#allocation5], %s265
          %s268 = sshll.u32 [#allocation6], 4
          %s269 = int_to_ptr.vmem [resolvable:$true] %s268
          %271 = dma.hbm_to_vmem [thread:$0]  %s5, 16, %s269, [#allocation5]
        $region32: #{decoder_forward.5} parent=11 // pred_fallthru
          _
        // Predicated region
        $region33: #{decoder_forward.5} parent=11 // pred_check
          %p272 = pneg %p169
        $region34: #{decoder_forward.5} parent=11 // pred_check_branch
          %274 = sbr.rel (%p272) target = $region36
        $region35: #{decoder_forward.5} parent=11 // pred_region
          %s276 = ssub.s32 16, 16
          %277 = vsyncadd [#allocation8], %s276
          %s279 = sshll.u32 [#allocation7], 4
          %s280 = int_to_ptr.vmem [resolvable:$true] %s279
          %282 = dma.hbm_to_vmem [thread:$0]  %s6, 16, %s280, [#allocation8]
        $region36: #{decoder_forward.5} parent=11 // pred_fallthru
          _
        // Predicated region
        $region37: #{decoder_forward.5} parent=11 // pred_check
          %p283 = pneg %p190
        $region38: #{decoder_forward.5} parent=11 // pred_check_branch
          %285 = sbr.rel (%p283) target = $region40
        $region39: #{decoder_forward.5} parent=11 // pred_region
          %s287 = ssub.s32 16, 16
          %288 = vsyncadd [#allocation8], %s287
          %s290 = sshll.u32 [#allocation9], 4
          %s291 = int_to_ptr.vmem [resolvable:$true] %s290
          %293 = dma.hbm_to_vmem [thread:$0]  %s7, 16, %s291, [#allocation8]
        $region40: #{decoder_forward.5} parent=11 // pred_fallthru
          _
      $region12: #{decoder_forward.5} parent=5 // pred_fallthru
        _
      %p294 = scmp.lt.s32.totalorder %s17, 2
      // Predicated region
      $region41: #{decoder_forward.5} parent=5 // pred_check
        %p295 = pneg %p294
      $region42: #{decoder_forward.5} parent=5 // pred_check_branch
        %297 = sbr.rel (%p295) target = $region44
      $region43: #{decoder_forward.5} parent=5 // pred_region
        // Predicated region
        $region45: #{decoder_forward.5} parent=43 // pred_check
          %p298 = pneg %p37
        $region46: #{decoder_forward.5} parent=43 // pred_check_branch
          %300 = sbr.rel (%p298) target = $region48
        $region47: #{decoder_forward.5} parent=43 // pred_region
          %p301 = scmp.lt.s32.totalorder %s17, 1
          %s302 = scalar_select %p301, %s17, 1
          %s303 = smul.addr %s302, 8
          %s304 = scalar_lea.vmem %s0, %s303
        $region48: #{decoder_forward.5} parent=43 // pred_fallthru
          _
      $region44: #{decoder_forward.5} parent=5 // pred_fallthru
        _
      %p305 = scmp.le.s32.totalorder 1, %s17
      %p306 = scmp.lt.s32.totalorder %s17, 3
      %p307 = pnand %p305, %p306
      %p308 = pneg %p307
      // Predicated region
      $region49: #{decoder_forward.5} parent=5 // pred_check
        _
      $region50: #{decoder_forward.5} parent=5 // pred_check_branch
        %310 = sbr.rel (%p307) target = $region52
      $region51: #{decoder_forward.5} parent=5 // pred_region
        %s311 = ssub.s32 %s17, 1
        // Predicated region
        $region53: #{decoder_forward.5} parent=51 // pred_check
          %p312 = pneg %p106
        $region54: #{decoder_forward.5} parent=51 // pred_check_branch
          %314 = sbr.rel (%p312) target = $region56
        $region55: #{decoder_forward.5} parent=51 // pred_region
          %315 = dma.done [#allocation3], 16
        $region56: #{decoder_forward.5} parent=51 // pred_fallthru
          _
        // Predicated region
        $region57: #{decoder_forward.5} parent=51 // pred_check
          %p316 = pneg %p127
        $region58: #{decoder_forward.5} parent=51 // pred_check_branch
          %318 = sbr.rel (%p316) target = $region60
        $region59: #{decoder_forward.5} parent=51 // pred_region
          %319 = dma.done [#allocation5], 512
        $region60: #{decoder_forward.5} parent=51 // pred_fallthru
          _
        // Predicated region
        $region61: #{decoder_forward.5} parent=51 // pred_check
          %p320 = pneg %p148
        $region62: #{decoder_forward.5} parent=51 // pred_check_branch
          %322 = sbr.rel (%p320) target = $region64
        $region63: #{decoder_forward.5} parent=51 // pred_region
          %323 = dma.done [#allocation5], 16
        $region64: #{decoder_forward.5} parent=51 // pred_fallthru
          _
        // Predicated region
        $region65: #{decoder_forward.5} parent=51 // pred_check
          %p324 = pneg %p169
        $region66: #{decoder_forward.5} parent=51 // pred_check_branch
          %326 = sbr.rel (%p324) target = $region68
        $region67: #{decoder_forward.5} parent=51 // pred_region
          %327 = dma.done [#allocation8], 16
        $region68: #{decoder_forward.5} parent=51 // pred_fallthru
          _
        // Predicated region
        $region69: #{decoder_forward.5} parent=51 // pred_check
          %p328 = pneg %p190
        $region70: #{decoder_forward.5} parent=51 // pred_check_branch
          %330 = sbr.rel (%p328) target = $region72
        $region71: #{decoder_forward.5} parent=51 // pred_region
          %331 = dma.done [#allocation8], 16
        $region72: #{decoder_forward.5} parent=51 // pred_fallthru
          _
        %p332 = scmp.lt.s32.totalorder %s22, 1
        %s333 = scalar_select %p332, %s22, 1
        %s334 = smul.addr %s333, 8
        %s335 = scalar_lea.vmem %s0, %s334
        %p336 = pneg %p43
        %p337 = pneg %p40
        %p338 = pneg %p64
        %p339 = pneg %p61
        %p340 = pneg %p85
        %p341 = pneg %p82
        %p342 = pneg %p106
        %p343 = pneg %p103
        %p344 = pneg %p127
        %p345 = pneg %p124
        %p346 = pneg %p148
        %p347 = pneg %p145
        %p348 = pneg %p169
        %p349 = pneg %p166
        %p350 = pneg %p190
        %p351 = pneg %p187
        %p352 = pneg %p216
        %p353 = pneg %p213
        %p354 = scmp.lt.s32.totalorder %s22, 1
        %s355 = scalar_select %p354, %s22, 1
        %s356 = smul.addr %s355, 8
        %s357 = scalar_lea.vmem %s8, %s356
        %p358 = scmp.lt.s32.totalorder %s22, 1
        %s359 = scalar_select %p358, %s22, 1
        %s360 = smul.addr %s359, 8
        %s361 = scalar_lea.vmem %s0, %s360
        %p362 = scmp.lt.s32.totalorder %s22, 1
        %s363 = scalar_select %p362, %s22, 1
        %s364 = smul.addr %s363, 8
        %s365 = scalar_lea.vmem %s8, %s364
        %v367 = vld [vmem:[%s361] sm:$0xff]
        %v368 = vpack.c.bf16 %v367, %v367
        %v369 = vld [vmem:[%s2] sm:$0xff]
        %v370 = vld [vmem:[%s2 + $0x8] sm:$0xff]
        %v371 = vld [vmem:[%s2 + $0x10] sm:$0xff]
        %v372 = vld [vmem:[%s2 + $0x18] sm:$0xff]
        %v373 = vpack.c.bf16 %v370, %v369
        %v374 = vpack.c.bf16 %v372, %v371
        %v375 = vld [vmem:[#allocation2] sm:$0x1]
        %v377 = vlaneseq
        %v378 = vshrl.u32 %v377, 7
        %v379 = vsub.s32 0, %v378
        %v380 = vrot.slane %v375, %v379
        %vm382 = vcmask 261120
        %v384 = vsel %vm382, %v368, 0
        %386 = vmatprep.subr.bf16.mxu0 0
        %387 = vmatpush1.bf16.msra.mxu0 0
        %388 = vmatprep.subr.bf16.mxu0 0
        %389 = vmatpush1.bf16.msra.mxu0 0
        %390 = vmatprep.subr.bf16.mxu0 0
        %391 = vmatpush1.bf16.msra.mxu0 0
        %392 = vmatprep.subr.bf16.mxu0 0
        %393 = vmatpush1.bf16.msra.mxu0 0
        %394 = vmatprep.subr.bf16.mxu0 0
        %395 = vmatpush1.bf16.msra.mxu0 0
        %396 = vmatprep.subr.bf16.mxu0 0
        %397 = vmatpush1.bf16.msra.mxu0 0
        %398 = vmatprep.subr.bf16.mxu0 0
        %399 = vmatpush1.bf16.msra.mxu0 %v374
        %400 = vmatprep.subr.bf16.mxu0 0
        %401 = vmatpush1.bf16.msra.mxu0 %v373
        %402 = vmatprep.subr.bf16.mxu0 0
        %403 = vmatpush2.bf16.msra.mxu0 0
        %404 = vmatprep.subr.bf16.mxu0 0
        %405 = vmatpush2.bf16.msra.mxu0 0
        %406 = vmatprep.subr.bf16.mxu0 0
        %407 = vmatpush2.bf16.msra.mxu0 0
        %408 = vmatprep.subr.bf16.mxu0 0
        %409 = vmatpush2.bf16.msra.mxu0 0
        %410 = vmatprep.subr.bf16.mxu0 0
        %411 = vmatpush2.bf16.msra.mxu0 0
        %412 = vmatprep.subr.bf16.mxu0 0
        %413 = vmatpush2.bf16.msra.mxu0 0
        %414 = vmatprep.subr.bf16.mxu0 0
        %415 = vmatpush2.bf16.msra.mxu0 0
        %416 = vmatprep.subr.bf16.mxu0 0
        %417 = vmatpush2.bf16.msra.mxu0 0
        %418 = vmatprep.mubr.bf16.mxu0 0
        %419 = vmatmul.mubr.bf16.gmra.mxu0 %v384
        %v420 = vpop.f32.mrf.mxu0
        %v421 = vadd.f32 %v380, %v420
        %v422 = vpop.f32.mrf.mxu0
        %v423 = vpop.f32.mrf.mxu0
        %v424 = vpop.f32.mrf.mxu0
        %425 = vdwg.mxu0
        %v426 = vld [vmem:[%s1] sm:$0xff]
        %v427 = vpack.c.bf16 %v421, %v421
        %429 = vrot.lane.b32.xlu0 %v427, 96
        %v430 = vpop.permute.xlu0 %429
        %vm431 = vcmask 64512
        %v433 = vsel %vm431, %v427, 0
        %v436 = vsel %vm431, %v430, 0
        %438 = vmatprep.subr.bf16.mxu0 0
        %439 = vmatpush1.bf16.xpose.msra.mxu0 0
        %440 = vmatprep.subr.bf16.mxu0 0
        %441 = vmatpush1.bf16.xpose.msra.mxu0 0
        %442 = vmatprep.subr.bf16.mxu0 0
        %443 = vmatpush1.bf16.xpose.msra.mxu0 0
        %444 = vmatprep.subr.bf16.mxu0 0
        %445 = vmatpush1.bf16.xpose.msra.mxu0 0
        %446 = vmatprep.subr.bf16.mxu0 0
        %447 = vmatpush1.bf16.xpose.msra.mxu0 0
        %448 = vmatprep.subr.bf16.mxu0 0
        %449 = vmatpush1.bf16.xpose.msra.mxu0 0
        %450 = vmatprep.subr.bf16.mxu0 0
        %451 = vmatpush1.bf16.xpose.msra.mxu0 0
        %452 = vmatprep.subr.bf16.mxu0 0
        %453 = vmatpush1.bf16.xpose.msra.mxu0 %v436
        %454 = vmatprep.subr.bf16.mxu0 0
        %455 = vmatpush2.bf16.xpose.msra.mxu0 0
        %456 = vmatprep.subr.bf16.mxu0 0
        %457 = vmatpush2.bf16.xpose.msra.mxu0 0
        %458 = vmatprep.subr.bf16.mxu0 0
        %459 = vmatpush2.bf16.xpose.msra.mxu0 0
        %460 = vmatprep.subr.bf16.mxu0 0
        %461 = vmatpush2.bf16.xpose.msra.mxu0 0
        %462 = vmatprep.subr.bf16.mxu0 0
        %463 = vmatpush2.bf16.xpose.msra.mxu0 0
        %464 = vmatprep.subr.bf16.mxu0 0
        %465 = vmatpush2.bf16.xpose.msra.mxu0 0
        %466 = vmatprep.subr.bf16.mxu0 0
        %467 = vmatpush2.bf16.xpose.msra.mxu0 0
        %468 = vmatprep.subr.bf16.mxu0 0
        %469 = vmatpush2.bf16.xpose.msra.mxu0 0
        %470 = vmatprep.mubr.bf16.mxu0 0
        %471 = vmatmul.mubr.bf16.gmra.mxu0 %v433
        %v472 = vpop.f32.mrf.mxu0
        %v473 = vadd.f32 0.0, %v472
        %v474 = vpop.f32.mrf.mxu0
        %v475 = vpop.f32.mrf.mxu0
        %v476 = vpop.f32.mrf.mxu0
        %477 = vdwg.mxu0
        %v478 = vmul.f32 %v473, 0.35355338
        %vm479 = vcmp.gt.f32.partialorder %v426, 0.0
        %v480 = vsel %vm479, %v478, -1e+30
        %v481 = vsel %vm431, %v480, -inf
        %482 = vmax.xlane.f32.xlu0 %v481
        %v483 = vpop.xlane.xlu0 %482
        %v484 = vsub.f32 %v480, %v483
        %v485 = vmul.f32 %v484, 1.442695
        %v486 = vpow.pop %v485
        %v487 = vsel %vm431, %v486, 0.0
        %488 = vadd.xlane.f32.xlu0 %v487
        %v489 = vpop.xlane.xlu0 %488
        %v490 = vrcp.pop %v489
        %v491 = vmul.f32 %v486, %v490
        %v492 = vpack.c.bf16 %v491, %v491
        %493 = vrot.lane.b32.xlu0 %v427, 64
        %v494 = vpop.permute.xlu0 %493
        %v496 = vsel %vm431, %v492, 0
        %vm498 = vcmask 1043456
        %v500 = vsel %vm498, %v494, 0
        %502 = vmatprep.subr.bf16.mxu0 0
        %503 = vmatpush1.bf16.msra.mxu0 0
        %504 = vmatprep.subr.bf16.mxu0 0
        %505 = vmatpush1.bf16.msra.mxu0 0
        %506 = vmatprep.subr.bf16.mxu0 0
        %507 = vmatpush1.bf16.msra.mxu0 0
        %508 = vmatprep.subr.bf16.mxu0 0
        %509 = vmatpush1.bf16.msra.mxu0 0
        %510 = vmatprep.subr.bf16.mxu0 0
        %511 = vmatpush1.bf16.msra.mxu0 0
        %512 = vmatprep.subr.bf16.mxu0 0
        %513 = vmatpush1.bf16.msra.mxu0 0
        %514 = vmatprep.subr.bf16.mxu0 0
        %515 = vmatpush1.bf16.msra.mxu0 0
        %516 = vmatprep.subr.bf16.mxu0 0
        %517 = vmatpush1.bf16.msra.mxu0 %v500
        %518 = vmatprep.subr.bf16.mxu0 0
        %519 = vmatpush2.bf16.msra.mxu0 0
        %520 = vmatprep.subr.bf16.mxu0 0
        %521 = vmatpush2.bf16.msra.mxu0 0
        %522 = vmatprep.subr.bf16.mxu0 0
        %523 = vmatpush2.bf16.msra.mxu0 0
        %524 = vmatprep.subr.bf16.mxu0 0
        %525 = vmatpush2.bf16.msra.mxu0 0
        %526 = vmatprep.subr.bf16.mxu0 0
        %527 = vmatpush2.bf16.msra.mxu0 0
        %528 = vmatprep.subr.bf16.mxu0 0
        %529 = vmatpush2.bf16.msra.mxu0 0
        %530 = vmatprep.subr.bf16.mxu0 0
        %531 = vmatpush2.bf16.msra.mxu0 0
        %532 = vmatprep.subr.bf16.mxu0 0
        %533 = vmatpush2.bf16.msra.mxu0 0
        %534 = vmatprep.mubr.bf16.mxu0 0
        %535 = vmatmul.mubr.bf16.gmra.mxu0 %v496
        %v536 = vpop.f32.mrf.mxu0
        %v537 = vadd.f32 0.0, %v536
        %v538 = vpop.f32.mrf.mxu0
        %v539 = vpop.f32.mrf.mxu0
        %v540 = vpop.f32.mrf.mxu0
        %541 = vdwg.mxu0
        %542 = vrot.lane.b32.xlu0 %v427, 120
        %v543 = vpop.permute.xlu0 %542
        %544 = vrot.lane.b32.xlu0 %v427, 88
        %v545 = vpop.permute.xlu0 %544
        %v547 = vsel %vm431, %v543, 0
        %v550 = vsel %vm431, %v545, 0
        %552 = vmatprep.subr.bf16.mxu0 0
        %553 = vmatpush1.bf16.xpose.msra.mxu0 0
        %554 = vmatprep.subr.bf16.mxu0 0
        %555 = vmatpush1.bf16.xpose.msra.mxu0 0
        %556 = vmatprep.subr.bf16.mxu0 0
        %557 = vmatpush1.bf16.xpose.msra.mxu0 0
        %558 = vmatprep.subr.bf16.mxu0 0
        %559 = vmatpush1.bf16.xpose.msra.mxu0 0
        %560 = vmatprep.subr.bf16.mxu0 0
        %561 = vmatpush1.bf16.xpose.msra.mxu0 0
        %562 = vmatprep.subr.bf16.mxu0 0
        %563 = vmatpush1.bf16.xpose.msra.mxu0 0
        %564 = vmatprep.subr.bf16.mxu0 0
        %565 = vmatpush1.bf16.xpose.msra.mxu0 0
        %566 = vmatprep.subr.bf16.mxu0 0
        %567 = vmatpush1.bf16.xpose.msra.mxu0 %v550
        %568 = vmatprep.subr.bf16.mxu0 0
        %569 = vmatpush2.bf16.xpose.msra.mxu0 0
        %570 = vmatprep.subr.bf16.mxu0 0
        %571 = vmatpush2.bf16.xpose.msra.mxu0 0
        %572 = vmatprep.subr.bf16.mxu0 0
        %573 = vmatpush2.bf16.xpose.msra.mxu0 0
        %574 = vmatprep.subr.bf16.mxu0 0
        %575 = vmatpush2.bf16.xpose.msra.mxu0 0
        %576 = vmatprep.subr.bf16.mxu0 0
        %577 = vmatpush2.bf16.xpose.msra.mxu0 0
        %578 = vmatprep.subr.bf16.mxu0 0
        %579 = vmatpush2.bf16.xpose.msra.mxu0 0
        %580 = vmatprep.subr.bf16.mxu0 0
        %581 = vmatpush2.bf16.xpose.msra.mxu0 0
        %582 = vmatprep.subr.bf16.mxu0 0
        %583 = vmatpush2.bf16.xpose.msra.mxu0 0
        %584 = vmatprep.mubr.bf16.mxu0 0
        %585 = vmatmul.mubr.bf16.gmra.mxu0 %v547
        %v586 = vpop.f32.mrf.mxu0
        %v587 = vadd.f32 0.0, %v586
        %v588 = vpop.f32.mrf.mxu0
        %v589 = vpop.f32.mrf.mxu0
        %v590 = vpop.f32.mrf.mxu0
        %591 = vdwg.mxu0
        %v592 = vmul.f32 %v587, 0.35355338
        %v593 = vsel %vm479, %v592, -1e+30
        %v594 = vsel %vm431, %v593, -inf
        %595 = vmax.xlane.f32.xlu0 %v594
        %v596 = vpop.xlane.xlu0 %595
        %v597 = vsub.f32 %v593, %v596
        %v598 = vmul.f32 %v597, 1.442695
        %v599 = vpow.pop %v598
        %v600 = vsel %vm431, %v599, 0.0
        %601 = vadd.xlane.f32.xlu0 %v600
        %v602 = vpop.xlane.xlu0 %601
        %v603 = vrcp.pop %v602
        %v604 = vmul.f32 %v599, %v603
        %v605 = vpack.c.bf16 %v604, %v604
        %606 = vrot.lane.b32.xlu0 %v427, 56
        %v607 = vpop.permute.xlu0 %606
        %v609 = vsel %vm431, %v605, 0
        %v612 = vsel %vm498, %v607, 0
        %614 = vmatprep.subr.bf16.mxu0 0
        %615 = vmatpush1.bf16.msra.mxu0 0
        %616 = vmatprep.subr.bf16.mxu0 0
        %617 = vmatpush1.bf16.msra.mxu0 0
        %618 = vmatprep.subr.bf16.mxu0 0
        %619 = vmatpush1.bf16.msra.mxu0 0
        %620 = vmatprep.subr.bf16.mxu0 0
        %621 = vmatpush1.bf16.msra.mxu0 0
        %622 = vmatprep.subr.bf16.mxu0 0
        %623 = vmatpush1.bf16.msra.mxu0 0
        %624 = vmatprep.subr.bf16.mxu0 0
        %625 = vmatpush1.bf16.msra.mxu0 0
        %626 = vmatprep.subr.bf16.mxu0 0
        %627 = vmatpush1.bf16.msra.mxu0 0
        %628 = vmatprep.subr.bf16.mxu0 0
        %629 = vmatpush1.bf16.msra.mxu0 %v612
        %630 = vmatprep.subr.bf16.mxu0 0
        %631 = vmatpush2.bf16.msra.mxu0 0
        %632 = vmatprep.subr.bf16.mxu0 0
        %633 = vmatpush2.bf16.msra.mxu0 0
        %634 = vmatprep.subr.bf16.mxu0 0
        %635 = vmatpush2.bf16.msra.mxu0 0
        %636 = vmatprep.subr.bf16.mxu0 0
        %637 = vmatpush2.bf16.msra.mxu0 0
        %638 = vmatprep.subr.bf16.mxu0 0
        %639 = vmatpush2.bf16.msra.mxu0 0
        %640 = vmatprep.subr.bf16.mxu0 0
        %641 = vmatpush2.bf16.msra.mxu0 0
        %642 = vmatprep.subr.bf16.mxu0 0
        %643 = vmatpush2.bf16.msra.mxu0 0
        %644 = vmatprep.subr.bf16.mxu0 0
        %645 = vmatpush2.bf16.msra.mxu0 0
        %646 = vmatprep.mubr.bf16.mxu0 0
        %647 = vmatmul.mubr.bf16.gmra.mxu0 %v609
        %v648 = vpop.f32.mrf.mxu0
        %v649 = vadd.f32 0.0, %v648
        %v650 = vpop.f32.mrf.mxu0
        %v651 = vpop.f32.mrf.mxu0
        %v652 = vpop.f32.mrf.mxu0
        %653 = vdwg.mxu0
        %654 = vrot.lane.b32.xlu0 %v427, 112
        %v655 = vpop.permute.xlu0 %654
        %656 = vrot.lane.b32.xlu0 %v427, 80
        %v657 = vpop.permute.xlu0 %656
        %v659 = vsel %vm431, %v655, 0
        %v662 = vsel %vm431, %v657, 0
        %664 = vmatprep.subr.bf16.mxu0 0
        %665 = vmatpush1.bf16.xpose.msra.mxu0 0
        %666 = vmatprep.subr.bf16.mxu0 0
        %667 = vmatpush1.bf16.xpose.msra.mxu0 0
        %668 = vmatprep.subr.bf16.mxu0 0
        %669 = vmatpush1.bf16.xpose.msra.mxu0 0
        %670 = vmatprep.subr.bf16.mxu0 0
        %671 = vmatpush1.bf16.xpose.msra.mxu0 0
        %672 = vmatprep.subr.bf16.mxu0 0
        %673 = vmatpush1.bf16.xpose.msra.mxu0 0
        %674 = vmatprep.subr.bf16.mxu0 0
        %675 = vmatpush1.bf16.xpose.msra.mxu0 0
        %676 = vmatprep.subr.bf16.mxu0 0
        %677 = vmatpush1.bf16.xpose.msra.mxu0 0
        %678 = vmatprep.subr.bf16.mxu0 0
        %679 = vmatpush1.bf16.xpose.msra.mxu0 %v662
        %680 = vmatprep.subr.bf16.mxu0 0
        %681 = vmatpush2.bf16.xpose.msra.mxu0 0
        %682 = vmatprep.subr.bf16.mxu0 0
        %683 = vmatpush2.bf16.xpose.msra.mxu0 0
        %684 = vmatprep.subr.bf16.mxu0 0
        %685 = vmatpush2.bf16.xpose.msra.mxu0 0
        %686 = vmatprep.subr.bf16.mxu0 0
        %687 = vmatpush2.bf16.xpose.msra.mxu0 0
        %688 = vmatprep.subr.bf16.mxu0 0
        %689 = vmatpush2.bf16.xpose.msra.mxu0 0
        %690 = vmatprep.subr.bf16.mxu0 0
        %691 = vmatpush2.bf16.xpose.msra.mxu0 0
        %692 = vmatprep.subr.bf16.mxu0 0
        %693 = vmatpush2.bf16.xpose.msra.mxu0 0
        %694 = vmatprep.subr.bf16.mxu0 0
        %695 = vmatpush2.bf16.xpose.msra.mxu0 0
        %696 = vmatprep.mubr.bf16.mxu0 0
        %697 = vmatmul.mubr.bf16.gmra.mxu0 %v659
        %v698 = vpop.f32.mrf.mxu0
        %v699 = vadd.f32 0.0, %v698
        %v700 = vpop.f32.mrf.mxu0
        %v701 = vpop.f32.mrf.mxu0
        %v702 = vpop.f32.mrf.mxu0
        %703 = vdwg.mxu0
        %v704 = vmul.f32 %v699, 0.35355338
        %v705 = vsel %vm479, %v704, -1e+30
        %v706 = vsel %vm431, %v705, -inf
        %707 = vmax.xlane.f32.xlu0 %v706
        %v708 = vpop.xlane.xlu0 %707
        %v709 = vsub.f32 %v705, %v708
        %v710 = vmul.f32 %v709, 1.442695
        %v711 = vpow.pop %v710
        %v712 = vsel %vm431, %v711, 0.0
        %713 = vadd.xlane.f32.xlu0 %v712
        %v714 = vpop.xlane.xlu0 %713
        %v715 = vrcp.pop %v714
        %v716 = vmul.f32 %v711, %v715
        %v717 = vpack.c.bf16 %v716, %v716
        %718 = vrot.lane.b32.xlu0 %v427, 48
        %v719 = vpop.permute.xlu0 %718
        %v721 = vsel %vm431, %v717, 0
        %v724 = vsel %vm498, %v719, 0
        %726 = vmatprep.subr.bf16.mxu0 0
        %727 = vmatpush1.bf16.msra.mxu0 0
        %728 = vmatprep.subr.bf16.mxu0 0
        %729 = vmatpush1.bf16.msra.mxu0 0
        %730 = vmatprep.subr.bf16.mxu0 0
        %731 = vmatpush1.bf16.msra.mxu0 0
        %732 = vmatprep.subr.bf16.mxu0 0
        %733 = vmatpush1.bf16.msra.mxu0 0
        %734 = vmatprep.subr.bf16.mxu0 0
        %735 = vmatpush1.bf16.msra.mxu0 0
        %736 = vmatprep.subr.bf16.mxu0 0
        %737 = vmatpush1.bf16.msra.mxu0 0
        %738 = vmatprep.subr.bf16.mxu0 0
        %739 = vmatpush1.bf16.msra.mxu0 0
        %740 = vmatprep.subr.bf16.mxu0 0
        %741 = vmatpush1.bf16.msra.mxu0 %v724
        %742 = vmatprep.subr.bf16.mxu0 0
        %743 = vmatpush2.bf16.msra.mxu0 0
        %744 = vmatprep.subr.bf16.mxu0 0
        %745 = vmatpush2.bf16.msra.mxu0 0
        %746 = vmatprep.subr.bf16.mxu0 0
        %747 = vmatpush2.bf16.msra.mxu0 0
        %748 = vmatprep.subr.bf16.mxu0 0
        %749 = vmatpush2.bf16.msra.mxu0 0
        %750 = vmatprep.subr.bf16.mxu0 0
        %751 = vmatpush2.bf16.msra.mxu0 0
        %752 = vmatprep.subr.bf16.mxu0 0
        %753 = vmatpush2.bf16.msra.mxu0 0
        %754 = vmatprep.subr.bf16.mxu0 0
        %755 = vmatpush2.bf16.msra.mxu0 0
        %756 = vmatprep.subr.bf16.mxu0 0
        %757 = vmatpush2.bf16.msra.mxu0 0
        %758 = vmatprep.mubr.bf16.mxu0 0
        %759 = vmatmul.mubr.bf16.gmra.mxu0 %v721
        %v760 = vpop.f32.mrf.mxu0
        %v761 = vadd.f32 0.0, %v760
        %v762 = vpop.f32.mrf.mxu0
        %v763 = vpop.f32.mrf.mxu0
        %v764 = vpop.f32.mrf.mxu0
        %765 = vdwg.mxu0
        %766 = vrot.lane.b32.xlu0 %v427, 104
        %v767 = vpop.permute.xlu0 %766
        %768 = vrot.lane.b32.xlu0 %v427, 72
        %v769 = vpop.permute.xlu0 %768
        %v771 = vsel %vm431, %v767, 0
        %v774 = vsel %vm431, %v769, 0
        %776 = vmatprep.subr.bf16.mxu0 0
        %777 = vmatpush1.bf16.xpose.msra.mxu0 0
        %778 = vmatprep.subr.bf16.mxu0 0
        %779 = vmatpush1.bf16.xpose.msra.mxu0 0
        %780 = vmatprep.subr.bf16.mxu0 0
        %781 = vmatpush1.bf16.xpose.msra.mxu0 0
        %782 = vmatprep.subr.bf16.mxu0 0
        %783 = vmatpush1.bf16.xpose.msra.mxu0 0
        %784 = vmatprep.subr.bf16.mxu0 0
        %785 = vmatpush1.bf16.xpose.msra.mxu0 0
        %786 = vmatprep.subr.bf16.mxu0 0
        %787 = vmatpush1.bf16.xpose.msra.mxu0 0
        %788 = vmatprep.subr.bf16.mxu0 0
        %789 = vmatpush1.bf16.xpose.msra.mxu0 0
        %790 = vmatprep.subr.bf16.mxu0 0
        %791 = vmatpush1.bf16.xpose.msra.mxu0 %v774
        %792 = vmatprep.subr.bf16.mxu0 0
        %793 = vmatpush2.bf16.xpose.msra.mxu0 0
        %794 = vmatprep.subr.bf16.mxu0 0
        %795 = vmatpush2.bf16.xpose.msra.mxu0 0
        %796 = vmatprep.subr.bf16.mxu0 0
        %797 = vmatpush2.bf16.xpose.msra.mxu0 0
        %798 = vmatprep.subr.bf16.mxu0 0
        %799 = vmatpush2.bf16.xpose.msra.mxu0 0
        %800 = vmatprep.subr.bf16.mxu0 0
        %801 = vmatpush2.bf16.xpose.msra.mxu0 0
        %802 = vmatprep.subr.bf16.mxu0 0
        %803 = vmatpush2.bf16.xpose.msra.mxu0 0
        %804 = vmatprep.subr.bf16.mxu0 0
        %805 = vmatpush2.bf16.xpose.msra.mxu0 0
        %806 = vmatprep.subr.bf16.mxu0 0
        %807 = vmatpush2.bf16.xpose.msra.mxu0 0
        %808 = vmatprep.mubr.bf16.mxu0 0
        %809 = vmatmul.mubr.bf16.gmra.mxu0 %v771
        %v810 = vpop.f32.mrf.mxu0
        %v811 = vadd.f32 0.0, %v810
        %v812 = vpop.f32.mrf.mxu0
        %v813 = vpop.f32.mrf.mxu0
        %v814 = vpop.f32.mrf.mxu0
        %815 = vdwg.mxu0
        %v816 = vmul.f32 %v811, 0.35355338
        %v817 = vsel %vm479, %v816, -1e+30
        %v818 = vsel %vm431, %v817, -inf
        %819 = vmax.xlane.f32.xlu0 %v818
        %v820 = vpop.xlane.xlu0 %819
        %v821 = vsub.f32 %v817, %v820
        %v822 = vmul.f32 %v821, 1.442695
        %v823 = vpow.pop %v822
        %v824 = vsel %vm431, %v823, 0.0
        %825 = vadd.xlane.f32.xlu0 %v824
        %v826 = vpop.xlane.xlu0 %825
        %v827 = vrcp.pop %v826
        %v828 = vmul.f32 %v823, %v827
        %v829 = vpack.c.bf16 %v828, %v828
        %830 = vrot.lane.b32.xlu0 %v427, 40
        %v831 = vpop.permute.xlu0 %830
        %v833 = vsel %vm431, %v829, 0
        %v836 = vsel %vm498, %v831, 0
        %838 = vmatprep.subr.bf16.mxu0 0
        %839 = vmatpush1.bf16.msra.mxu0 0
        %840 = vmatprep.subr.bf16.mxu0 0
        %841 = vmatpush1.bf16.msra.mxu0 0
        %842 = vmatprep.subr.bf16.mxu0 0
        %843 = vmatpush1.bf16.msra.mxu0 0
        %844 = vmatprep.subr.bf16.mxu0 0
        %845 = vmatpush1.bf16.msra.mxu0 0
        %846 = vmatprep.subr.bf16.mxu0 0
        %847 = vmatpush1.bf16.msra.mxu0 0
        %848 = vmatprep.subr.bf16.mxu0 0
        %849 = vmatpush1.bf16.msra.mxu0 0
        %850 = vmatprep.subr.bf16.mxu0 0
        %851 = vmatpush1.bf16.msra.mxu0 0
        %852 = vmatprep.subr.bf16.mxu0 0
        %853 = vmatpush1.bf16.msra.mxu0 %v836
        %854 = vmatprep.subr.bf16.mxu0 0
        %855 = vmatpush2.bf16.msra.mxu0 0
        %856 = vmatprep.subr.bf16.mxu0 0
        %857 = vmatpush2.bf16.msra.mxu0 0
        %858 = vmatprep.subr.bf16.mxu0 0
        %859 = vmatpush2.bf16.msra.mxu0 0
        %860 = vmatprep.subr.bf16.mxu0 0
        %861 = vmatpush2.bf16.msra.mxu0 0
        %862 = vmatprep.subr.bf16.mxu0 0
        %863 = vmatpush2.bf16.msra.mxu0 0
        %864 = vmatprep.subr.bf16.mxu0 0
        %865 = vmatpush2.bf16.msra.mxu0 0
        %866 = vmatprep.subr.bf16.mxu0 0
        %867 = vmatpush2.bf16.msra.mxu0 0
        %868 = vmatprep.subr.bf16.mxu0 0
        %869 = vmatpush2.bf16.msra.mxu0 0
        %870 = vmatprep.mubr.bf16.mxu0 0
        %871 = vmatmul.mubr.bf16.gmra.mxu0 %v833
        %v872 = vpop.f32.mrf.mxu0
        %v873 = vadd.f32 0.0, %v872
        %v874 = vpop.f32.mrf.mxu0
        %v875 = vpop.f32.mrf.mxu0
        %v876 = vpop.f32.mrf.mxu0
        %877 = vdwg.mxu0
        %879 = vrot.lane.b32.xlu0 %v649, 8
        %v880 = vpop.permute.xlu0 %879
        %883 = vrot.lane.b32.xlu0 %v761, 16
        %v884 = vpop.permute.xlu0 %883
        %887 = vrot.lane.b32.xlu0 %v873, 24
        %v888 = vpop.permute.xlu0 %887
        %v890 = vsel %vm431, %v537, %v880
        %vm891 = vcmask 130048
        %v892 = vsel %vm891, %v890, %v884
        %vm893 = vcmask 195584
        %v894 = vsel %vm893, %v892, %v888
        %v895 = vpack.c.bf16 %v894, %v894
        %v896 = vld [vmem:[#allocation4] sm:$0xff]
        %v897 = vld [vmem:[#allocation4 + $0x8] sm:$0xff]
        %v898 = vld [vmem:[#allocation4 + $0x10] sm:$0xff]
        %v899 = vld [vmem:[#allocation4 + $0x18] sm:$0xff]
        %v900 = vpack.c.bf16 %v897, %v896
        %v901 = vpack.c.bf16 %v899, %v898
        %v902 = vld [vmem:[#allocation6] sm:$0x1]
        %v904 = vlaneseq
        %v905 = vshrl.u32 %v904, 7
        %v906 = vsub.s32 0, %v905
        %v907 = vrot.slane %v902, %v906
        %v910 = vsel %vm382, %v895, 0
        %912 = vmatprep.subr.bf16.mxu0 0
        %913 = vmatpush1.bf16.msra.mxu0 0
        %914 = vmatprep.subr.bf16.mxu0 0
        %915 = vmatpush1.bf16.msra.mxu0 0
        %916 = vmatprep.subr.bf16.mxu0 0
        %917 = vmatpush1.bf16.msra.mxu0 0
        %918 = vmatprep.subr.bf16.mxu0 0
        %919 = vmatpush1.bf16.msra.mxu0 0
        %920 = vmatprep.subr.bf16.mxu0 0
        %921 = vmatpush1.bf16.msra.mxu0 0
        %922 = vmatprep.subr.bf16.mxu0 0
        %923 = vmatpush1.bf16.msra.mxu0 0
        %924 = vmatprep.subr.bf16.mxu0 0
        %925 = vmatpush1.bf16.msra.mxu0 %v901
        %926 = vmatprep.subr.bf16.mxu0 0
        %927 = vmatpush1.bf16.msra.mxu0 %v900
        %928 = vmatprep.subr.bf16.mxu0 0
        %929 = vmatpush2.bf16.msra.mxu0 0
        %930 = vmatprep.subr.bf16.mxu0 0
        %931 = vmatpush2.bf16.msra.mxu0 0
        %932 = vmatprep.subr.bf16.mxu0 0
        %933 = vmatpush2.bf16.msra.mxu0 0
        %934 = vmatprep.subr.bf16.mxu0 0
        %935 = vmatpush2.bf16.msra.mxu0 0
        %936 = vmatprep.subr.bf16.mxu0 0
        %937 = vmatpush2.bf16.msra.mxu0 0
        %938 = vmatprep.subr.bf16.mxu0 0
        %939 = vmatpush2.bf16.msra.mxu0 0
        %940 = vmatprep.subr.bf16.mxu0 0
        %941 = vmatpush2.bf16.msra.mxu0 0
        %942 = vmatprep.subr.bf16.mxu0 0
        %943 = vmatpush2.bf16.msra.mxu0 0
        %944 = vmatprep.mubr.bf16.mxu0 0
        %945 = vmatmul.mubr.bf16.gmra.mxu0 %v910
        %v946 = vpop.f32.mrf.mxu0
        %v947 = vadd.f32 %v907, %v946
        %v948 = vpop.f32.mrf.mxu0
        %v949 = vpop.f32.mrf.mxu0
        %v950 = vpop.f32.mrf.mxu0
        %951 = vdwg.mxu0
        %v952 = vadd.f32 %v367, %v947
        %v953 = vld [vmem:[#allocation7] sm:$0x1]
        %v954 = vld [vmem:[#allocation9] sm:$0x1]
        %v955 = vsel %vm382, %v952, 0.0
        %956 = vadd.xlane.f32.xlu0 %v955
        %v957 = vpop.xlane.xlu0 %956
        %v958 = vrcp.pop 32.0
        %v959 = vmul.f32 %v957, %v958
        %v960 = vsub.f32 %v952, %v959
        %v961 = vmul.f32 %v960, %v960
        %v962 = vsel %vm382, %v961, 0.0
        %963 = vadd.xlane.f32.xlu0 %v962
        %v964 = vpop.xlane.xlu0 %963
        %v965 = vmul.f32 %v964, %v958
        %v966 = vadd.f32 %v965, 1e-05
        %v967 = vrsqrt.pop %v966
        %v968 = vmul.f32 %v960, %v967
        %v970 = vlaneseq
        %v971 = vshrl.u32 %v970, 7
        %v972 = vsub.s32 0, %v971
        %v973 = vrot.slane %v953, %v972
        %v975 = vmul.f32 %v968, %v973
        %v977 = vlaneseq
        %v978 = vshrl.u32 %v977, 7
        %v979 = vsub.s32 0, %v978
        %v980 = vrot.slane %v954, %v979
        %v982 = vadd.f32 %v975, %v980
        %983 = vst.msk [vmem:[%s365] sm:$0xff] %vm382, %v982
        %p984 = scmp.lt.s32.totalorder %s22, 1
        %s985 = scalar_select %p984, %s22, 1
        %s986 = smul.addr %s985, 8
        %s987 = scalar_lea.vmem %s8, %s986
        // Predicated region
        $region73: #{decoder_forward.5} parent=51 // pred_check
          %p988 = pneg %p213
        $region74: #{decoder_forward.5} parent=51 // pred_check_branch
          %990 = sbr.rel (%p988) target = $region76
        $region75: #{decoder_forward.5} parent=51 // pred_region
          _
        $region76: #{decoder_forward.5} parent=51 // pred_fallthru
          _
      $region52: #{decoder_forward.5} parent=5 // pred_fallthru
        _
      %p991 = scmp.le.s32.totalorder 2, %s17
      // Predicated region
      $region77: #{decoder_forward.5} parent=5 // pred_check
        %p992 = pneg %p991
      $region78: #{decoder_forward.5} parent=5 // pred_check_branch
        %994 = sbr.rel (%p992) target = $region80
      $region79: #{decoder_forward.5} parent=5 // pred_region
        %s995 = ssub.s32 %s17, 2
        // Predicated region
        $region81: #{decoder_forward.5} parent=79 // pred_check
          %p996 = pneg %p219
        $region82: #{decoder_forward.5} parent=79 // pred_check_branch
          %998 = sbr.rel (%p996) target = $region84
        $region83: #{decoder_forward.5} parent=79 // pred_region
          %p999 = scmp.lt.s32.totalorder %s23, 1
          %s1000 = scalar_select %p999, %s23, 1
          %s1001 = smul.addr %s1000, 8
          %s1002 = scalar_lea.vmem %s8, %s1001
        $region84: #{decoder_forward.5} parent=79 // pred_fallthru
          _
      $region80: #{decoder_forward.5} parent=5 // pred_fallthru
        _
    $region6: #{decoder_forward.5} parent=1 // loop_footer
      %s21 = sadd.s32 1, %s17
    $region7: #{decoder_forward.5} parent=1 // loop_footer_branch
      %16 = sbr.rel target = $region3
    $region8: #{decoder_forward.5} parent=1 // loop_exit
      _
    %1003 = vsyncpa [#allocation3], 1
    %s1004 = scalar_lea.sflag [#allocation3], 1
    %1005 = vsyncpa %s1004, 1
    %1006 = vsyncpa [#allocation5], 1
    %1007 = vsyncpa [#allocation8], 1

// kernel: decoder_forward.9
$region0: #{decoder_forward.9}
  #allocation0 [shape = 'u32[]', space=smem, size = 0x4, offset = 0x4, fixed_abs, tag = 'smem constant byte address 0x4 - core index']
  #allocation1 [shape = 'u32[144,128]{1,0:T(1,128)}', space=vmem, size = 0x12000, scoped, tag = 'internal scratch']
  %s0 = inlined_call_operand.vmem [shape: f32[16,32], index: 0, kind: input, shape index: {}]
  %s1 = inlined_call_operand.vmem [shape: f32[1,32], index: 1, kind: input, shape index: {}]
  %s2 = inlined_call_operand.vmem [shape: f32[1,32], index: 2, kind: input, shape index: {}]
  %s3 = inlined_call_operand.hbm [shape: f32[16,32], index: 3, kind: output, shape index: {}]
  %s4 = sld [smem:[#allocation0]]
  $region22: #{decoder_forward.9} parent=0
    _
  %s6 = ssub.s32 1, %s4
  %s7 = scalar_select 0, %s6, %s4
  $region1: #{decoder_forward.9} parent=0
    #allocation2 [shape = 'u8[8192]{0}', space=vmem, size = 0x2000, scoped, tag = 'output window, operand 0, single buffered']
    #allocation3 [shape = 's32[1]{0}', space=sflag, size = 0x4, scoped, tag = 'scoped memory for decoder_forward.9']
    %8 = vsyncpa [#allocation3], 0
    // Predicated region
    $region2: #{decoder_forward.9} parent=1 // pred_check
      _
    $region3: #{decoder_forward.9} parent=1 // pred_check_branch
      %10 = sbr.rel (0) target = $region5
    $region4: #{decoder_forward.9} parent=1 // pred_region
      _
    $region5: #{decoder_forward.9} parent=1 // pred_fallthru
      _
    // Predicated region
    $region6: #{decoder_forward.9} parent=1 // pred_check
      _
    $region7: #{decoder_forward.9} parent=1 // pred_check_branch
      %12 = sbr.rel (0) target = $region9
    $region8: #{decoder_forward.9} parent=1 // pred_region
      _
    $region9: #{decoder_forward.9} parent=1 // pred_fallthru
      _
    // Predicated region
    $region10: #{decoder_forward.9} parent=1 // pred_check
      _
    $region11: #{decoder_forward.9} parent=1 // pred_check_branch
      %14 = sbr.rel (0) target = $region13
    $region12: #{decoder_forward.9} parent=1 // pred_region
      _
    $region13: #{decoder_forward.9} parent=1 // pred_fallthru
      _
    %v15 = vld [vmem:[%s0] sm:$0xff]
    %v16 = vld [vmem:[%s0 + $0x8] sm:$0xff]
    %v17 = vld [vmem:[%s1] sm:$0x1]
    %v18 = vld [vmem:[%s2] sm:$0x1]
    %vm19 = vcmask 261120
    %v20 = vsel %vm19, %v15, 0.0
    %21 = vadd.xlane.f32.xlu0 %v20
    %v22 = vpop.xlane.xlu0 %21
    %v23 = vsel %vm19, %v16, 0.0
    %24 = vadd.xlane.f32.xlu0 %v23
    %v25 = vpop.xlane.xlu0 %24
    %v26 = vrcp.pop 32.0
    %v27 = vmul.f32 %v22, %v26
    %v28 = vmul.f32 %v25, %v26
    %v29 = vsub.f32 %v15, %v27
    %v30 = vsub.f32 %v16, %v28
    %v31 = vmul.f32 %v29, %v29
    %v32 = vmul.f32 %v30, %v30
    %v33 = vsel %vm19, %v31, 0.0
    %34 = vadd.xlane.f32.xlu0 %v33
    %v35 = vpop.xlane.xlu0 %34
    %v36 = vsel %vm19, %v32, 0.0
    %37 = vadd.xlane.f32.xlu0 %v36
    %v38 = vpop.xlane.xlu0 %37
    %v39 = vmul.f32 %v35, %v26
    %v40 = vmul.f32 %v38, %v26
    %v41 = vadd.f32 %v39, 1e-05
    %v42 = vadd.f32 %v40, 1e-05
    %v43 = vrsqrt.pop %v41
    %v44 = vrsqrt.pop %v42
    %v45 = vmul.f32 %v29, %v43
    %v46 = vmul.f32 %v30, %v44
    %v48 = vlaneseq
    %v49 = vshrl.u32 %v48, 7
    %v50 = vsub.s32 0, %v49
    %v51 = vrot.slane %v17, %v50
    %v53 = vmul.f32 %v45, %v51
    %v54 = vmul.f32 %v46, %v51
    %v56 = vlaneseq
    %v57 = vshrl.u32 %v56, 7
    %v58 = vsub.s32 0, %v57
    %v59 = vrot.slane %v18, %v58
    %v61 = vadd.f32 %v53, %v59
    %v62 = vadd.f32 %v54, %v59
    %63 = vst.msk [vmem:[#allocation2] sm:$0xff] %vm19, %v61
    %64 = vst.msk [vmem:[#allocation2 + $0x8] sm:$0xff] %vm19, %v62
    // Predicated region
    $region14: #{decoder_forward.9} parent=1 // pred_check
      _
    $region15: #{decoder_forward.9} parent=1 // pred_check_branch
      %66 = sbr.rel (0) target = $region17
    $region16: #{decoder_forward.9} parent=1 // pred_region
      %s68 = ssub.s32 256, 256
      %69 = vsyncadd [#allocation3], %s68
      %s70 = sshll.u32 [#allocation2], 4
      %s71 = int_to_ptr.vmem [resolvable:$true] %s70
      %76 = dma.vmem_to_hbm [thread:$0]  %s71, 256, %s3, [#allocation3], 128, 128, 8
    $region17: #{decoder_forward.9} parent=1 // pred_fallthru
      _
    // Predicated region
    $region18: #{decoder_forward.9} parent=1 // pred_check
      _
    $region19: #{decoder_forward.9} parent=1 // pred_check_branch
      %78 = sbr.rel (0) target = $region21
    $region20: #{decoder_forward.9} parent=1 // pred_region
      %79 = dma.done [#allocation3], 256
    $region21: #{decoder_forward.9} parent=1 // pred_fallthru
      _
    %80 = vsyncpa [#allocation3], 1

</llo_original>
